<compile_context>
chip_gen: v6e
topology: v6e:2x2x1
jax: 0.10.0
libtpu: 0.0.40
codegen_flags: <defaults>
</compile_context>

<pallas_src>
import functools

import jax
import jax.numpy as jnp
from jax import lax
from jax.experimental import pallas as pl
from jax.experimental.pallas import tpu as pltpu


# --------------------------------------------------------------------------
# Fused kernel: qkv projection + 3 attention branches + output projection
# --------------------------------------------------------------------------
def _fused_attention_kernel(x_ref, wqkv_ref, bqkv_ref, wproj_ref, bproj_ref,
                            o_ref, qkv_ref, xcat_ref, *, num_heads, head_dim):
    H, D = num_heads, head_dim
    Dh = D // 3
    C = H * D
    C3 = C // 3
    scale = D ** (-0.5)          # torch uses head_dim**-0.5 even though contraction is Dh

    # ---- 1) fused qkv projection, kept resident in VMEM scratch ------------
    # TODO(synk): the q3 columns (first Dh of every head's q) are produced but
    # never used (~1/9 of this matmul); pruning them needs an offline re-packed
    # weight, so the single lane-dense (C x 3C) matmul is kept for fidelity.
    qkv_ref[...] = (
        jnp.dot(x_ref[...], wqkv_ref[...], preferred_element_type=jnp.float32)
        + bqkv_ref[...]
    )

    def chunk(kind, h, s):
        # kind: 0=q, 1=k, 2=v ; s: which third of the head dim.  Static VMEM view.
        col = kind * C + h * D + s * Dh
        return qkv_ref[:, col:col + Dh]                      # (N, Dh)

    def dot_nt(a, b):                                        # a (M,Dh) . b (K,Dh)^T
        return lax.dot_general(a, b, (((1,), (1,)), ((), ())),
                               preferred_element_type=jnp.float32)

    def recip(d):                                            # EUP slot + 1 Newton step
        inv = pl.reciprocal(d, approx=True)
        return inv * (2.0 - d * inv)

    for h in range(H):
        # fold the softmax scale into q: (N,Dh) muls instead of (N,N) ones.
        q4 = chunk(0, h, 1) * scale
        q5 = chunk(0, h, 2) * scale
        k3 = chunk(1, h, 0); k4 = chunk(1, h, 1); k5 = chunk(1, h, 2)
        v3 = chunk(2, h, 0); v4 = chunk(2, h, 1); v5 = chunk(2, h, 2)

        # ---- branch x3: softmax(q4 . [k3|k4]^T) . [v3|v4] -------------------
        s43 = dot_nt(q4, k3)                                  # (N, N)
        s44 = dot_nt(q4, k4)
        m1 = jnp.maximum(jnp.max(s43, axis=-1, keepdims=True),
                         jnp.max(s44, axis=-1, keepdims=True))
        p43 = jnp.exp(s43 - m1)
        p44 = jnp.exp(s44 - m1)
        inv1 = recip(jnp.sum(p43, axis=-1, keepdims=True)
                     + jnp.sum(p44, axis=-1, keepdims=True))
        o1 = (jnp.dot(p43, v3, preferred_element_type=jnp.float32)
              + jnp.dot(p44, v4, preferred_element_type=jnp.float32)) * inv1
        col1 = 0 * C3 + h * Dh
        xcat_ref[:, col1:col1 + Dh] = o1

        # ---- branches x4 & x5 share q5 and all k5/v5 work -------------------
        s53 = dot_nt(q5, k3)
        s54 = dot_nt(q5, k4)
        s55 = dot_nt(q5, k5)                                  # shared score block
        # softmax is shift-invariant: one row-max covering both branches lets us
        # compute exp(s55 - m) and p55 @ v5 once and reuse them exactly.
        m2 = jnp.maximum(jnp.maximum(jnp.max(s53, axis=-1, keepdims=True),
                                     jnp.max(s54, axis=-1, keepdims=True)),
                         jnp.max(s55, axis=-1, keepdims=True))
        p53 = jnp.exp(s53 - m2)
        p54 = jnp.exp(s54 - m2)
        p55 = jnp.exp(s55 - m2)
        sum55 = jnp.sum(p55, axis=-1, keepdims=True)
        pv55 = jnp.dot(p55, v5, preferred_element_type=jnp.float32)
        inv4 = recip(jnp.sum(p53, axis=-1, keepdims=True) + sum55)
        inv5 = recip(jnp.sum(p54, axis=-1, keepdims=True) + sum55)
        o4 = (jnp.dot(p53, v3, preferred_element_type=jnp.float32) + pv55) * inv4
        o5 = (jnp.dot(p54, v4, preferred_element_type=jnp.float32) + pv55) * inv5
        col4 = 1 * C3 + h * Dh
        col5 = 2 * C3 + h * Dh
        xcat_ref[:, col4:col4 + Dh] = o4
        xcat_ref[:, col5:col5 + Dh] = o5

    # ---- 2) output projection, single lane-dense HBM store -----------------
    o_ref[...] = (
        jnp.dot(xcat_ref[...], wproj_ref[...], preferred_element_type=jnp.float32)
        + bproj_ref[...]
    )


# --------------------------------------------------------------------------
# Wrapper: one pallas_call for the whole forward
# --------------------------------------------------------------------------
def attention_forward(x, params, num_heads):
    B, N, C = x.shape
    H = num_heads
    assert C % H == 0, "dim must be divisible by num_heads"
    D = C // H
    assert D % 3 == 0, "head_dim must be divisible by 3 (torch.split into thirds)"
    assert N % 8 == 0, "token tile must be sublane aligned"
    w_qkv, b_qkv, w_proj, b_proj = params

    x2d = x.reshape(B * N, C)                                # free reshape, no relayout

    kern = functools.partial(_fused_attention_kernel, num_heads=H, head_dim=D)

    # Advisory cost estimate for XLA's scheduler (counts the de-duplicated work).
    flops = B * (2 * N * C * 3 * C            # qkv projection
                 + 2 * 10 * H * N * N * (D // 3)   # 5 score + 5 PV matmuls / head
                 + 2 * N * C * C)             # output projection
    transcendentals = B * (5 * H * N * N + 3 * H * N)        # exp + reciprocal
    bytes_accessed = 4 * (x2d.size + w_qkv.size + b_qkv.size
                          + w_proj.size + b_proj.size + B * N * C)

    out2d = pl.pallas_call(
        kern,
        out_shape=jax.ShapeDtypeStruct((B * N, C), jnp.float32),
        grid_spec=pltpu.PrefetchScalarGridSpec(
            num_scalar_prefetch=0,
            grid=(B,),
            in_specs=[
                pl.BlockSpec((N, C), lambda b: (b, 0)),        # x: per-batch tile
                pl.BlockSpec((C, 3 * C), lambda b: (0, 0)),    # resident weights
                pl.BlockSpec((1, 3 * C), lambda b: (0, 0)),
                pl.BlockSpec((C, C), lambda b: (0, 0)),
                pl.BlockSpec((1, C), lambda b: (0, 0)),
            ],
            out_specs=pl.BlockSpec((N, C), lambda b: (b, 0)),
            scratch_shapes=[
                pltpu.VMEM((N, 3 * C), jnp.float32),           # qkv activations
                pltpu.VMEM((N, C), jnp.float32),               # concat of x3|x4|x5
            ],
        ),
        compiler_params=pltpu.CompilerParams(
            dimension_semantics=("parallel",),                 # v7x: 2 TCs split batches
        ),
        cost_estimate=pl.CostEstimate(
            flops=flops, transcendentals=transcendentals,
            bytes_accessed=bytes_accessed),
    )(x2d, w_qkv, b_qkv.reshape(1, 3 * C), w_proj, b_proj.reshape(1, C))

    return out2d.reshape(B, N, C)


# --------------------------------------------------------------------------
# Pure-JAX reference (mirrors the PyTorch forward) for correctness check
# --------------------------------------------------------------------------
def reference_forward(x, params, num_heads):
    w_qkv, b_qkv, w_proj, b_proj = params
    B, N, C = x.shape
    H = num_heads
    D = C // H
    Dh = D // 3
    scale = D ** (-0.5)

    qkv = x @ w_qkv + b_qkv
    qkv = qkv.reshape(B, N, 3, H, D).transpose(2, 0, 3, 1, 4)   # (3,B,H,N,D)
    q, k, v = qkv[0], qkv[1], qkv[2]

    def split3(t):   # torch.split(..., dim=3): thirds of the head dim
        return t[..., :Dh], t[..., Dh:2 * Dh], t[..., 2 * Dh:]

    q3, q4, q5 = split3(q)
    k3, k4, k5 = split3(k)
    v3, v4, v5 = split3(v)

    def blk(qc, ka, kb, va, vb):
        kk = jnp.concatenate([ka, kb], axis=2)                  # cat along tokens
        vv = jnp.concatenate([va, vb], axis=2)
        a = jnp.einsum("bhqd,bhkd->bhqk", qc, kk) * scale
        a = jax.nn.softmax(a, axis=-1)
        o = jnp.einsum("bhqk,bhkd->bhqd", a, vv)                # (B,H,N,Dh)
        return o.transpose(0, 2, 1, 3).reshape(B, N, C // 3)

    x3 = blk(q4, k3, k4, v3, v4)
    x4 = blk(q5, k3, k5, v3, v5)
    x5 = blk(q5, k4, k5, v4, v5)
    xc = jnp.concatenate([x3, x4, x5], axis=2)
    return xc @ w_proj + b_proj


# --------------------------------------------------------------------------
if __name__ == "__main__":
    # dim % num_heads == 0 and head_dim % 3 == 0 (torch.split into thirds of D)
    B, N, C, H = 2, 16, 48, 4          # head_dim D = 12, D // 3 = 4

    key = jax.random.PRNGKey(0)
    kx, k1, k2, k3 = jax.random.split(key, 4)
    x = jax.random.normal(kx, (B, N, C), jnp.float32)

    # deterministic synthetic parameters (qkv_bias=False -> zero qkv bias)
    w_qkv = 0.05 * jax.random.normal(k1, (C, 3 * C), jnp.float32)
    b_qkv = jnp.zeros((3 * C,), jnp.float32)
    w_proj = 0.05 * jax.random.normal(k2, (C, C), jnp.float32)
    b_proj = 0.05 * jax.random.normal(k3, (C,), jnp.float32)
    params = (w_qkv, b_qkv, w_proj, b_proj)

    out = attention_forward(x, params, H)
    jax.block_until_ready(out)

    ref = reference_forward(x, params, H)
    assert out.shape == (B, N, C), out.shape
    err = float(jnp.max(jnp.abs(out - ref)))
    assert jnp.allclose(out, ref, atol=2e-4, rtol=2e-4), f"mismatch vs reference: {err}"

    print("KERNEL_OK")
</pallas_src>

<mosaic_0001>
module attributes {stable_mosaic.version = 11 : i64} {
  func.func @_fused_attention_kernel(%arg0: i32, %arg1: memref<16x48xf32, #tpu.memory_space<vmem>>, %arg2: memref<48x144xf32, #tpu.memory_space<vmem>>, %arg3: memref<1x144xf32, #tpu.memory_space<vmem>>, %arg4: memref<48x48xf32, #tpu.memory_space<vmem>>, %arg5: memref<1x48xf32, #tpu.memory_space<vmem>>, %arg6: memref<16x48xf32, #tpu.memory_space<vmem>>, %arg7: memref<16x144xf32, #tpu.memory_space<vmem>>, %arg8: memref<16x48xf32, #tpu.memory_space<vmem>>) attributes {dimension_semantics = [#tpu.dimension_semantics<parallel>], iteration_bounds = array<i64: 2>, scalar_prefetch = 0 : i64, scratch_operands = 2 : i64, tpu.core_type = #tpu.core_type<tc>, window_params = [{transform_indices = @transform_0, window_bounds = array<i64: 16, 48>}, {pipeline_mode = #tpu.pipeline_mode<synchronous>, transform_indices = @transform_1, window_bounds = array<i64: 48, 144>}, {pipeline_mode = #tpu.pipeline_mode<synchronous>, transform_indices = @transform_2, window_bounds = array<i64: 1, 144>}, {pipeline_mode = #tpu.pipeline_mode<synchronous>, transform_indices = @transform_3, window_bounds = array<i64: 48, 48>}, {pipeline_mode = #tpu.pipeline_mode<synchronous>, transform_indices = @transform_4, window_bounds = array<i64: 1, 48>}, {transform_indices = @transform_5, window_bounds = array<i64: 16, 48>}]} {
    %c0 = arith.constant 0 : index
    %c0_0 = arith.constant 0 : index
    %0 = vector.load %arg1[%c0, %c0_0] : memref<16x48xf32, #tpu.memory_space<vmem>>, vector<16x48xf32>
    %c0_1 = arith.constant 0 : index
    %c0_2 = arith.constant 0 : index
    %1 = vector.load %arg2[%c0_1, %c0_2] : memref<48x144xf32, #tpu.memory_space<vmem>>, vector<48x144xf32>
    %cst = arith.constant dense<0.000000e+00> : vector<16x144xf32>
    %2 = tpu.matmul %0, %1, %cst {dimension_numbers = #tpu.dot_dimension_numbers<[1], [0], [0], [1], [0, 0, 1, 1], [], []>} : vector<16x48xf32>, vector<48x144xf32>, vector<16x144xf32> -> vector<16x144xf32>
    %c0_3 = arith.constant 0 : index
    %c0_4 = arith.constant 0 : index
    %3 = vector.load %arg3[%c0_3, %c0_4] : memref<1x144xf32, #tpu.memory_space<vmem>>, vector<1x144xf32>
    %4 = vector.broadcast %3 : vector<1x144xf32> to vector<16x144xf32>
    %5 = arith.addf %2, %4 : vector<16x144xf32>
    %c0_5 = arith.constant 0 : index
    %c0_6 = arith.constant 0 : index
    %6 = vector.load %arg7[%c0_5, %c0_6] : memref<16x144xf32, #tpu.memory_space<vmem>>, vector<16x144xf32>
    tpu.vector_store %arg7[%c0_5, %c0_6], %5 {strides = array<i32>} : memref<16x144xf32, #tpu.memory_space<vmem>>, vector<16x144xf32>,
    %c0_7 = arith.constant 0 : index
    %c4 = arith.constant 4 : index
    %7 = vector.load %arg7[%c0_7, %c4] : memref<16x144xf32, #tpu.memory_space<vmem>>, vector<16x4xf32>
    %cst_8 = arith.constant 0.288675129 : f32
    %8 = vector.broadcast %cst_8 : f32 to vector<16x4xf32>
    %9 = arith.mulf %7, %8 : vector<16x4xf32>
    %c0_9 = arith.constant 0 : index
    %c8 = arith.constant 8 : index
    %10 = vector.load %arg7[%c0_9, %c8] : memref<16x144xf32, #tpu.memory_space<vmem>>, vector<16x4xf32>
    %cst_10 = arith.constant 0.288675129 : f32
    %11 = vector.broadcast %cst_10 : f32 to vector<16x4xf32>
    %12 = arith.mulf %10, %11 : vector<16x4xf32>
    %c0_11 = arith.constant 0 : index
    %c48 = arith.constant 48 : index
    %13 = vector.load %arg7[%c0_11, %c48] : memref<16x144xf32, #tpu.memory_space<vmem>>, vector<16x4xf32>
    %c0_12 = arith.constant 0 : index
    %c52 = arith.constant 52 : index
    %14 = vector.load %arg7[%c0_12, %c52] : memref<16x144xf32, #tpu.memory_space<vmem>>, vector<16x4xf32>
    %c0_13 = arith.constant 0 : index
    %c56 = arith.constant 56 : index
    %15 = vector.load %arg7[%c0_13, %c56] : memref<16x144xf32, #tpu.memory_space<vmem>>, vector<16x4xf32>
    %c0_14 = arith.constant 0 : index
    %c96 = arith.constant 96 : index
    %16 = vector.load %arg7[%c0_14, %c96] : memref<16x144xf32, #tpu.memory_space<vmem>>, vector<16x4xf32>
    %c0_15 = arith.constant 0 : index
    %c100 = arith.constant 100 : index
    %17 = vector.load %arg7[%c0_15, %c100] : memref<16x144xf32, #tpu.memory_space<vmem>>, vector<16x4xf32>
    %c0_16 = arith.constant 0 : index
    %c104 = arith.constant 104 : index
    %18 = vector.load %arg7[%c0_16, %c104] : memref<16x144xf32, #tpu.memory_space<vmem>>, vector<16x4xf32>
    %cst_17 = arith.constant dense<0.000000e+00> : vector<16x16xf32>
    %19 = tpu.matmul %9, %13, %cst_17 {dimension_numbers = #tpu.dot_dimension_numbers<[1], [1], [0], [0], [0, 0, 1, 0], [], []>} : vector<16x4xf32>, vector<16x4xf32>, vector<16x16xf32> -> vector<16x16xf32>
    %cst_18 = arith.constant dense<0.000000e+00> : vector<16x16xf32>
    %20 = tpu.matmul %9, %14, %cst_18 {dimension_numbers = #tpu.dot_dimension_numbers<[1], [1], [0], [0], [0, 0, 1, 0], [], []>} : vector<16x4xf32>, vector<16x4xf32>, vector<16x16xf32> -> vector<16x16xf32>
    %cst_19 = arith.constant dense<0xFF800000> : vector<16xf32>
    %21 = vector.multi_reduction <maximumf>, %19, %cst_19 [1] : vector<16x16xf32> to vector<16xf32>
    %22 = vector.shape_cast %21 : vector<16xf32> to vector<16x1xf32>
    %cst_20 = arith.constant dense<0xFF800000> : vector<16xf32>
    %23 = vector.multi_reduction <maximumf>, %20, %cst_20 [1] : vector<16x16xf32> to vector<16xf32>
    %24 = vector.shape_cast %23 : vector<16xf32> to vector<16x1xf32>
    %25 = arith.maximumf %22, %24 : vector<16x1xf32>
    %26 = vector.broadcast %25 : vector<16x1xf32> to vector<16x16xf32>
    %27 = arith.subf %19, %26 : vector<16x16xf32>
    %28 = math.exp %27 : vector<16x16xf32>
    %29 = vector.broadcast %25 : vector<16x1xf32> to vector<16x16xf32>
    %30 = arith.subf %20, %29 : vector<16x16xf32>
    %31 = math.exp %30 : vector<16x16xf32>
    %cst_21 = arith.constant dense<0.000000e+00> : vector<16xf32>
    %32 = vector.multi_reduction <add>, %28, %cst_21 [1] : vector<16x16xf32> to vector<16xf32>
    %33 = vector.shape_cast %32 : vector<16xf32> to vector<16x1xf32>
    %cst_22 = arith.constant dense<0.000000e+00> : vector<16xf32>
    %34 = vector.multi_reduction <add>, %31, %cst_22 [1] : vector<16x16xf32> to vector<16xf32>
    %35 = vector.shape_cast %34 : vector<16xf32> to vector<16x1xf32>
    %36 = arith.addf %33, %35 : vector<16x1xf32>
    %37 = tpu.reciprocal %36 {approx = true} : vector<16x1xf32> -> vector<16x1xf32>
    %38 = arith.mulf %36, %37 : vector<16x1xf32>
    %cst_23 = arith.constant 2.000000e+00 : f32
    %39 = vector.broadcast %cst_23 : f32 to vector<16x1xf32>
    %40 = arith.subf %39, %38 : vector<16x1xf32>
    %41 = arith.mulf %37, %40 : vector<16x1xf32>
    %cst_24 = arith.constant dense<0.000000e+00> : vector<16x4xf32>
    %42 = tpu.matmul %28, %16, %cst_24 {dimension_numbers = #tpu.dot_dimension_numbers<[1], [0], [0], [1], [0, 0, 1, 1], [], []>} : vector<16x16xf32>, vector<16x4xf32>, vector<16x4xf32> -> vector<16x4xf32>
    %cst_25 = arith.constant dense<0.000000e+00> : vector<16x4xf32>
    %43 = tpu.matmul %31, %17, %cst_25 {dimension_numbers = #tpu.dot_dimension_numbers<[1], [0], [0], [1], [0, 0, 1, 1], [], []>} : vector<16x16xf32>, vector<16x4xf32>, vector<16x4xf32> -> vector<16x4xf32>
    %44 = arith.addf %42, %43 : vector<16x4xf32>
    %45 = vector.broadcast %41 : vector<16x1xf32> to vector<16x4xf32>
    %46 = arith.mulf %44, %45 : vector<16x4xf32>
    %c0_26 = arith.constant 0 : index
    %c0_27 = arith.constant 0 : index
    %47 = vector.load %arg8[%c0_26, %c0_27] : memref<16x48xf32, #tpu.memory_space<vmem>>, vector<16x4xf32>
    tpu.vector_store %arg8[%c0_26, %c0_27], %46 {strides = array<i32>} : memref<16x48xf32, #tpu.memory_space<vmem>>, vector<16x4xf32>,
    %cst_28 = arith.constant dense<0.000000e+00> : vector<16x16xf32>
    %48 = tpu.matmul %12, %13, %cst_28 {dimension_numbers = #tpu.dot_dimension_numbers<[1], [1], [0], [0], [0, 0, 1, 0], [], []>} : vector<16x4xf32>, vector<16x4xf32>, vector<16x16xf32> -> vector<16x16xf32>
    %cst_29 = arith.constant dense<0.000000e+00> : vector<16x16xf32>
    %49 = tpu.matmul %12, %14, %cst_29 {dimension_numbers = #tpu.dot_dimension_numbers<[1], [1], [0], [0], [0, 0, 1, 0], [], []>} : vector<16x4xf32>, vector<16x4xf32>, vector<16x16xf32> -> vector<16x16xf32>
    %cst_30 = arith.constant dense<0.000000e+00> : vector<16x16xf32>
    %50 = tpu.matmul %12, %15, %cst_30 {dimension_numbers = #tpu.dot_dimension_numbers<[1], [1], [0], [0], [0, 0, 1, 0], [], []>} : vector<16x4xf32>, vector<16x4xf32>, vector<16x16xf32> -> vector<16x16xf32>
    %cst_31 = arith.constant dense<0xFF800000> : vector<16xf32>
    %51 = vector.multi_reduction <maximumf>, %48, %cst_31 [1] : vector<16x16xf32> to vector<16xf32>
    %52 = vector.shape_cast %51 : vector<16xf32> to vector<16x1xf32>
    %cst_32 = arith.constant dense<0xFF800000> : vector<16xf32>
    %53 = vector.multi_reduction <maximumf>, %49, %cst_32 [1] : vector<16x16xf32> to vector<16xf32>
    %54 = vector.shape_cast %53 : vector<16xf32> to vector<16x1xf32>
    %55 = arith.maximumf %52, %54 : vector<16x1xf32>
    %cst_33 = arith.constant dense<0xFF800000> : vector<16xf32>
    %56 = vector.multi_reduction <maximumf>, %50, %cst_33 [1] : vector<16x16xf32> to vector<16xf32>
    %57 = vector.shape_cast %56 : vector<16xf32> to vector<16x1xf32>
    %58 = arith.maximumf %55, %57 : vector<16x1xf32>
    %59 = vector.broadcast %58 : vector<16x1xf32> to vector<16x16xf32>
    %60 = arith.subf %48, %59 : vector<16x16xf32>
    %61 = math.exp %60 : vector<16x16xf32>
    %62 = vector.broadcast %58 : vector<16x1xf32> to vector<16x16xf32>
    %63 = arith.subf %49, %62 : vector<16x16xf32>
    %64 = math.exp %63 : vector<16x16xf32>
    %65 = vector.broadcast %58 : vector<16x1xf32> to vector<16x16xf32>
    %66 = arith.subf %50, %65 : vector<16x16xf32>
    %67 = math.exp %66 : vector<16x16xf32>
    %cst_34 = arith.constant dense<0.000000e+00> : vector<16xf32>
    %68 = vector.multi_reduction <add>, %67, %cst_34 [1] : vector<16x16xf32> to vector<16xf32>
    %69 = vector.shape_cast %68 : vector<16xf32> to vector<16x1xf32>
    %cst_35 = arith.constant dense<0.000000e+00> : vector<16x4xf32>
    %70 = tpu.matmul %67, %18, %cst_35 {dimension_numbers = #tpu.dot_dimension_numbers<[1], [0], [0], [1], [0, 0, 1, 1], [], []>} : vector<16x16xf32>, vector<16x4xf32>, vector<16x4xf32> -> vector<16x4xf32>
    %cst_36 = arith.constant dense<0.000000e+00> : vector<16xf32>
    %71 = vector.multi_reduction <add>, %61, %cst_36 [1] : vector<16x16xf32> to vector<16xf32>
    %72 = vector.shape_cast %71 : vector<16xf32> to vector<16x1xf32>
    %73 = arith.addf %72, %69 : vector<16x1xf32>
    %74 = tpu.reciprocal %73 {approx = true} : vector<16x1xf32> -> vector<16x1xf32>
    %75 = arith.mulf %73, %74 : vector<16x1xf32>
    %cst_37 = arith.constant 2.000000e+00 : f32
    %76 = vector.broadcast %cst_37 : f32 to vector<16x1xf32>
    %77 = arith.subf %76, %75 : vector<16x1xf32>
    %78 = arith.mulf %74, %77 : vector<16x1xf32>
    %cst_38 = arith.constant dense<0.000000e+00> : vector<16xf32>
    %79 = vector.multi_reduction <add>, %64, %cst_38 [1] : vector<16x16xf32> to vector<16xf32>
    %80 = vector.shape_cast %79 : vector<16xf32> to vector<16x1xf32>
    %81 = arith.addf %80, %69 : vector<16x1xf32>
    %82 = tpu.reciprocal %81 {approx = true} : vector<16x1xf32> -> vector<16x1xf32>
    %83 = arith.mulf %81, %82 : vector<16x1xf32>
    %cst_39 = arith.constant 2.000000e+00 : f32
    %84 = vector.broadcast %cst_39 : f32 to vector<16x1xf32>
    %85 = arith.subf %84, %83 : vector<16x1xf32>
    %86 = arith.mulf %82, %85 : vector<16x1xf32>
    %cst_40 = arith.constant dense<0.000000e+00> : vector<16x4xf32>
    %87 = tpu.matmul %61, %16, %cst_40 {dimension_numbers = #tpu.dot_dimension_numbers<[1], [0], [0], [1], [0, 0, 1, 1], [], []>} : vector<16x16xf32>, vector<16x4xf32>, vector<16x4xf32> -> vector<16x4xf32>
    %88 = arith.addf %87, %70 : vector<16x4xf32>
    %89 = vector.broadcast %78 : vector<16x1xf32> to vector<16x4xf32>
    %90 = arith.mulf %88, %89 : vector<16x4xf32>
    %cst_41 = arith.constant dense<0.000000e+00> : vector<16x4xf32>
    %91 = tpu.matmul %64, %17, %cst_41 {dimension_numbers = #tpu.dot_dimension_numbers<[1], [0], [0], [1], [0, 0, 1, 1], [], []>} : vector<16x16xf32>, vector<16x4xf32>, vector<16x4xf32> -> vector<16x4xf32>
    %92 = arith.addf %91, %70 : vector<16x4xf32>
    %93 = vector.broadcast %86 : vector<16x1xf32> to vector<16x4xf32>
    %94 = arith.mulf %92, %93 : vector<16x4xf32>
    %c0_42 = arith.constant 0 : index
    %c16 = arith.constant 16 : index
    %95 = vector.load %arg8[%c0_42, %c16] : memref<16x48xf32, #tpu.memory_space<vmem>>, vector<16x4xf32>
    tpu.vector_store %arg8[%c0_42, %c16], %90 {strides = array<i32>} : memref<16x48xf32, #tpu.memory_space<vmem>>, vector<16x4xf32>,
    %c0_43 = arith.constant 0 : index
    %c32 = arith.constant 32 : index
    %96 = vector.load %arg8[%c0_43, %c32] : memref<16x48xf32, #tpu.memory_space<vmem>>, vector<16x4xf32>
    tpu.vector_store %arg8[%c0_43, %c32], %94 {strides = array<i32>} : memref<16x48xf32, #tpu.memory_space<vmem>>, vector<16x4xf32>,
    %c0_44 = arith.constant 0 : index
    %c16_45 = arith.constant 16 : index
    %97 = vector.load %arg7[%c0_44, %c16_45] : memref<16x144xf32, #tpu.memory_space<vmem>>, vector<16x4xf32>
    %cst_46 = arith.constant 0.288675129 : f32
    %98 = vector.broadcast %cst_46 : f32 to vector<16x4xf32>
    %99 = arith.mulf %97, %98 : vector<16x4xf32>
    %c0_47 = arith.constant 0 : index
    %c20 = arith.constant 20 : index
    %100 = vector.load %arg7[%c0_47, %c20] : memref<16x144xf32, #tpu.memory_space<vmem>>, vector<16x4xf32>
    %cst_48 = arith.constant 0.288675129 : f32
    %101 = vector.broadcast %cst_48 : f32 to vector<16x4xf32>
    %102 = arith.mulf %100, %101 : vector<16x4xf32>
    %c0_49 = arith.constant 0 : index
    %c60 = arith.constant 60 : index
    %103 = vector.load %arg7[%c0_49, %c60] : memref<16x144xf32, #tpu.memory_space<vmem>>, vector<16x4xf32>
    %c0_50 = arith.constant 0 : index
    %c64 = arith.constant 64 : index
    %104 = vector.load %arg7[%c0_50, %c64] : memref<16x144xf32, #tpu.memory_space<vmem>>, vector<16x4xf32>
    %c0_51 = arith.constant 0 : index
    %c68 = arith.constant 68 : index
    %105 = vector.load %arg7[%c0_51, %c68] : memref<16x144xf32, #tpu.memory_space<vmem>>, vector<16x4xf32>
    %c0_52 = arith.constant 0 : index
    %c108 = arith.constant 108 : index
    %106 = vector.load %arg7[%c0_52, %c108] : memref<16x144xf32, #tpu.memory_space<vmem>>, vector<16x4xf32>
    %c0_53 = arith.constant 0 : index
    %c112 = arith.constant 112 : index
    %107 = vector.load %arg7[%c0_53, %c112] : memref<16x144xf32, #tpu.memory_space<vmem>>, vector<16x4xf32>
    %c0_54 = arith.constant 0 : index
    %c116 = arith.constant 116 : index
    %108 = vector.load %arg7[%c0_54, %c116] : memref<16x144xf32, #tpu.memory_space<vmem>>, vector<16x4xf32>
    %cst_55 = arith.constant dense<0.000000e+00> : vector<16x16xf32>
    %109 = tpu.matmul %99, %103, %cst_55 {dimension_numbers = #tpu.dot_dimension_numbers<[1], [1], [0], [0], [0, 0, 1, 0], [], []>} : vector<16x4xf32>, vector<16x4xf32>, vector<16x16xf32> -> vector<16x16xf32>
    %cst_56 = arith.constant dense<0.000000e+00> : vector<16x16xf32>
    %110 = tpu.matmul %99, %104, %cst_56 {dimension_numbers = #tpu.dot_dimension_numbers<[1], [1], [0], [0], [0, 0, 1, 0], [], []>} : vector<16x4xf32>, vector<16x4xf32>, vector<16x16xf32> -> vector<16x16xf32>
    %cst_57 = arith.constant dense<0xFF800000> : vector<16xf32>
    %111 = vector.multi_reduction <maximumf>, %109, %cst_57 [1] : vector<16x16xf32> to vector<16xf32>
    %112 = vector.shape_cast %111 : vector<16xf32> to vector<16x1xf32>
    %cst_58 = arith.constant dense<0xFF800000> : vector<16xf32>
    %113 = vector.multi_reduction <maximumf>, %110, %cst_58 [1] : vector<16x16xf32> to vector<16xf32>
    %114 = vector.shape_cast %113 : vector<16xf32> to vector<16x1xf32>
    %115 = arith.maximumf %112, %114 : vector<16x1xf32>
    %116 = vector.broadcast %115 : vector<16x1xf32> to vector<16x16xf32>
    %117 = arith.subf %109, %116 : vector<16x16xf32>
    %118 = math.exp %117 : vector<16x16xf32>
    %119 = vector.broadcast %115 : vector<16x1xf32> to vector<16x16xf32>
    %120 = arith.subf %110, %119 : vector<16x16xf32>
    %121 = math.exp %120 : vector<16x16xf32>
    %cst_59 = arith.constant dense<0.000000e+00> : vector<16xf32>
    %122 = vector.multi_reduction <add>, %118, %cst_59 [1] : vector<16x16xf32> to vector<16xf32>
    %123 = vector.shape_cast %122 : vector<16xf32> to vector<16x1xf32>
    %cst_60 = arith.constant dense<0.000000e+00> : vector<16xf32>
    %124 = vector.multi_reduction <add>, %121, %cst_60 [1] : vector<16x16xf32> to vector<16xf32>
    %125 = vector.shape_cast %124 : vector<16xf32> to vector<16x1xf32>
    %126 = arith.addf %123, %125 : vector<16x1xf32>
    %127 = tpu.reciprocal %126 {approx = true} : vector<16x1xf32> -> vector<16x1xf32>
    %128 = arith.mulf %126, %127 : vector<16x1xf32>
    %cst_61 = arith.constant 2.000000e+00 : f32
    %129 = vector.broadcast %cst_61 : f32 to vector<16x1xf32>
    %130 = arith.subf %129, %128 : vector<16x1xf32>
    %131 = arith.mulf %127, %130 : vector<16x1xf32>
    %cst_62 = arith.constant dense<0.000000e+00> : vector<16x4xf32>
    %132 = tpu.matmul %118, %106, %cst_62 {dimension_numbers = #tpu.dot_dimension_numbers<[1], [0], [0], [1], [0, 0, 1, 1], [], []>} : vector<16x16xf32>, vector<16x4xf32>, vector<16x4xf32> -> vector<16x4xf32>
    %cst_63 = arith.constant dense<0.000000e+00> : vector<16x4xf32>
    %133 = tpu.matmul %121, %107, %cst_63 {dimension_numbers = #tpu.dot_dimension_numbers<[1], [0], [0], [1], [0, 0, 1, 1], [], []>} : vector<16x16xf32>, vector<16x4xf32>, vector<16x4xf32> -> vector<16x4xf32>
    %134 = arith.addf %132, %133 : vector<16x4xf32>
    %135 = vector.broadcast %131 : vector<16x1xf32> to vector<16x4xf32>
    %136 = arith.mulf %134, %135 : vector<16x4xf32>
    %c0_64 = arith.constant 0 : index
    %c4_65 = arith.constant 4 : index
    %137 = vector.load %arg8[%c0_64, %c4_65] : memref<16x48xf32, #tpu.memory_space<vmem>>, vector<16x4xf32>
    tpu.vector_store %arg8[%c0_64, %c4_65], %136 {strides = array<i32>} : memref<16x48xf32, #tpu.memory_space<vmem>>, vector<16x4xf32>,
    %cst_66 = arith.constant dense<0.000000e+00> : vector<16x16xf32>
    %138 = tpu.matmul %102, %103, %cst_66 {dimension_numbers = #tpu.dot_dimension_numbers<[1], [1], [0], [0], [0, 0, 1, 0], [], []>} : vector<16x4xf32>, vector<16x4xf32>, vector<16x16xf32> -> vector<16x16xf32>
    %cst_67 = arith.constant dense<0.000000e+00> : vector<16x16xf32>
    %139 = tpu.matmul %102, %104, %cst_67 {dimension_numbers = #tpu.dot_dimension_numbers<[1], [1], [0], [0], [0, 0, 1, 0], [], []>} : vector<16x4xf32>, vector<16x4xf32>, vector<16x16xf32> -> vector<16x16xf32>
    %cst_68 = arith.constant dense<0.000000e+00> : vector<16x16xf32>
    %140 = tpu.matmul %102, %105, %cst_68 {dimension_numbers = #tpu.dot_dimension_numbers<[1], [1], [0], [0], [0, 0, 1, 0], [], []>} : vector<16x4xf32>, vector<16x4xf32>, vector<16x16xf32> -> vector<16x16xf32>
    %cst_69 = arith.constant dense<0xFF800000> : vector<16xf32>
    %141 = vector.multi_reduction <maximumf>, %138, %cst_69 [1] : vector<16x16xf32> to vector<16xf32>
    %142 = vector.shape_cast %141 : vector<16xf32> to vector<16x1xf32>
    %cst_70 = arith.constant dense<0xFF800000> : vector<16xf32>
    %143 = vector.multi_reduction <maximumf>, %139, %cst_70 [1] : vector<16x16xf32> to vector<16xf32>
    %144 = vector.shape_cast %143 : vector<16xf32> to vector<16x1xf32>
    %145 = arith.maximumf %142, %144 : vector<16x1xf32>
    %cst_71 = arith.constant dense<0xFF800000> : vector<16xf32>
    %146 = vector.multi_reduction <maximumf>, %140, %cst_71 [1] : vector<16x16xf32> to vector<16xf32>
    %147 = vector.shape_cast %146 : vector<16xf32> to vector<16x1xf32>
    %148 = arith.maximumf %145, %147 : vector<16x1xf32>
    %149 = vector.broadcast %148 : vector<16x1xf32> to vector<16x16xf32>
    %150 = arith.subf %138, %149 : vector<16x16xf32>
    %151 = math.exp %150 : vector<16x16xf32>
    %152 = vector.broadcast %148 : vector<16x1xf32> to vector<16x16xf32>
    %153 = arith.subf %139, %152 : vector<16x16xf32>
    %154 = math.exp %153 : vector<16x16xf32>
    %155 = vector.broadcast %148 : vector<16x1xf32> to vector<16x16xf32>
    %156 = arith.subf %140, %155 : vector<16x16xf32>
    %157 = math.exp %156 : vector<16x16xf32>
    %cst_72 = arith.constant dense<0.000000e+00> : vector<16xf32>
    %158 = vector.multi_reduction <add>, %157, %cst_72 [1] : vector<16x16xf32> to vector<16xf32>
    %159 = vector.shape_cast %158 : vector<16xf32> to vector<16x1xf32>
    %cst_73 = arith.constant dense<0.000000e+00> : vector<16x4xf32>
    %160 = tpu.matmul %157, %108, %cst_73 {dimension_numbers = #tpu.dot_dimension_numbers<[1], [0], [0], [1], [0, 0, 1, 1], [], []>} : vector<16x16xf32>, vector<16x4xf32>, vector<16x4xf32> -> vector<16x4xf32>
    %cst_74 = arith.constant dense<0.000000e+00> : vector<16xf32>
    %161 = vector.multi_reduction <add>, %151, %cst_74 [1] : vector<16x16xf32> to vector<16xf32>
    %162 = vector.shape_cast %161 : vector<16xf32> to vector<16x1xf32>
    %163 = arith.addf %162, %159 : vector<16x1xf32>
    %164 = tpu.reciprocal %163 {approx = true} : vector<16x1xf32> -> vector<16x1xf32>
    %165 = arith.mulf %163, %164 : vector<16x1xf32>
    %cst_75 = arith.constant 2.000000e+00 : f32
    %166 = vector.broadcast %cst_75 : f32 to vector<16x1xf32>
    %167 = arith.subf %166, %165 : vector<16x1xf32>
    %168 = arith.mulf %164, %167 : vector<16x1xf32>
    %cst_76 = arith.constant dense<0.000000e+00> : vector<16xf32>
    %169 = vector.multi_reduction <add>, %154, %cst_76 [1] : vector<16x16xf32> to vector<16xf32>
    %170 = vector.shape_cast %169 : vector<16xf32> to vector<16x1xf32>
    %171 = arith.addf %170, %159 : vector<16x1xf32>
    %172 = tpu.reciprocal %171 {approx = true} : vector<16x1xf32> -> vector<16x1xf32>
    %173 = arith.mulf %171, %172 : vector<16x1xf32>
    %cst_77 = arith.constant 2.000000e+00 : f32
    %174 = vector.broadcast %cst_77 : f32 to vector<16x1xf32>
    %175 = arith.subf %174, %173 : vector<16x1xf32>
    %176 = arith.mulf %172, %175 : vector<16x1xf32>
    %cst_78 = arith.constant dense<0.000000e+00> : vector<16x4xf32>
    %177 = tpu.matmul %151, %106, %cst_78 {dimension_numbers = #tpu.dot_dimension_numbers<[1], [0], [0], [1], [0, 0, 1, 1], [], []>} : vector<16x16xf32>, vector<16x4xf32>, vector<16x4xf32> -> vector<16x4xf32>
    %178 = arith.addf %177, %160 : vector<16x4xf32>
    %179 = vector.broadcast %168 : vector<16x1xf32> to vector<16x4xf32>
    %180 = arith.mulf %178, %179 : vector<16x4xf32>
    %cst_79 = arith.constant dense<0.000000e+00> : vector<16x4xf32>
    %181 = tpu.matmul %154, %107, %cst_79 {dimension_numbers = #tpu.dot_dimension_numbers<[1], [0], [0], [1], [0, 0, 1, 1], [], []>} : vector<16x16xf32>, vector<16x4xf32>, vector<16x4xf32> -> vector<16x4xf32>
    %182 = arith.addf %181, %160 : vector<16x4xf32>
    %183 = vector.broadcast %176 : vector<16x1xf32> to vector<16x4xf32>
    %184 = arith.mulf %182, %183 : vector<16x4xf32>
    %c0_80 = arith.constant 0 : index
    %c20_81 = arith.constant 20 : index
    %185 = vector.load %arg8[%c0_80, %c20_81] : memref<16x48xf32, #tpu.memory_space<vmem>>, vector<16x4xf32>
    tpu.vector_store %arg8[%c0_80, %c20_81], %180 {strides = array<i32>} : memref<16x48xf32, #tpu.memory_space<vmem>>, vector<16x4xf32>,
    %c0_82 = arith.constant 0 : index
    %c36 = arith.constant 36 : index
    %186 = vector.load %arg8[%c0_82, %c36] : memref<16x48xf32, #tpu.memory_space<vmem>>, vector<16x4xf32>
    tpu.vector_store %arg8[%c0_82, %c36], %184 {strides = array<i32>} : memref<16x48xf32, #tpu.memory_space<vmem>>, vector<16x4xf32>,
    %c0_83 = arith.constant 0 : index
    %c28 = arith.constant 28 : index
    %187 = vector.load %arg7[%c0_83, %c28] : memref<16x144xf32, #tpu.memory_space<vmem>>, vector<16x4xf32>
    %cst_84 = arith.constant 0.288675129 : f32
    %188 = vector.broadcast %cst_84 : f32 to vector<16x4xf32>
    %189 = arith.mulf %187, %188 : vector<16x4xf32>
    %c0_85 = arith.constant 0 : index
    %c32_86 = arith.constant 32 : index
    %190 = vector.load %arg7[%c0_85, %c32_86] : memref<16x144xf32, #tpu.memory_space<vmem>>, vector<16x4xf32>
    %cst_87 = arith.constant 0.288675129 : f32
    %191 = vector.broadcast %cst_87 : f32 to vector<16x4xf32>
    %192 = arith.mulf %190, %191 : vector<16x4xf32>
    %c0_88 = arith.constant 0 : index
    %c72 = arith.constant 72 : index
    %193 = vector.load %arg7[%c0_88, %c72] : memref<16x144xf32, #tpu.memory_space<vmem>>, vector<16x4xf32>
    %c0_89 = arith.constant 0 : index
    %c76 = arith.constant 76 : index
    %194 = vector.load %arg7[%c0_89, %c76] : memref<16x144xf32, #tpu.memory_space<vmem>>, vector<16x4xf32>
    %c0_90 = arith.constant 0 : index
    %c80 = arith.constant 80 : index
    %195 = vector.load %arg7[%c0_90, %c80] : memref<16x144xf32, #tpu.memory_space<vmem>>, vector<16x4xf32>
    %c0_91 = arith.constant 0 : index
    %c120 = arith.constant 120 : index
    %196 = vector.load %arg7[%c0_91, %c120] : memref<16x144xf32, #tpu.memory_space<vmem>>, vector<16x4xf32>
    %c0_92 = arith.constant 0 : index
    %c124 = arith.constant 124 : index
    %197 = vector.load %arg7[%c0_92, %c124] : memref<16x144xf32, #tpu.memory_space<vmem>>, vector<16x4xf32>
    %c0_93 = arith.constant 0 : index
    %c128 = arith.constant 128 : index
    %198 = vector.load %arg7[%c0_93, %c128] : memref<16x144xf32, #tpu.memory_space<vmem>>, vector<16x4xf32>
    %cst_94 = arith.constant dense<0.000000e+00> : vector<16x16xf32>
    %199 = tpu.matmul %189, %193, %cst_94 {dimension_numbers = #tpu.dot_dimension_numbers<[1], [1], [0], [0], [0, 0, 1, 0], [], []>} : vector<16x4xf32>, vector<16x4xf32>, vector<16x16xf32> -> vector<16x16xf32>
    %cst_95 = arith.constant dense<0.000000e+00> : vector<16x16xf32>
    %200 = tpu.matmul %189, %194, %cst_95 {dimension_numbers = #tpu.dot_dimension_numbers<[1], [1], [0], [0], [0, 0, 1, 0], [], []>} : vector<16x4xf32>, vector<16x4xf32>, vector<16x16xf32> -> vector<16x16xf32>
    %cst_96 = arith.constant dense<0xFF800000> : vector<16xf32>
    %201 = vector.multi_reduction <maximumf>, %199, %cst_96 [1] : vector<16x16xf32> to vector<16xf32>
    %202 = vector.shape_cast %201 : vector<16xf32> to vector<16x1xf32>
    %cst_97 = arith.constant dense<0xFF800000> : vector<16xf32>
    %203 = vector.multi_reduction <maximumf>, %200, %cst_97 [1] : vector<16x16xf32> to vector<16xf32>
    %204 = vector.shape_cast %203 : vector<16xf32> to vector<16x1xf32>
    %205 = arith.maximumf %202, %204 : vector<16x1xf32>
    %206 = vector.broadcast %205 : vector<16x1xf32> to vector<16x16xf32>
    %207 = arith.subf %199, %206 : vector<16x16xf32>
    %208 = math.exp %207 : vector<16x16xf32>
    %209 = vector.broadcast %205 : vector<16x1xf32> to vector<16x16xf32>
    %210 = arith.subf %200, %209 : vector<16x16xf32>
    %211 = math.exp %210 : vector<16x16xf32>
    %cst_98 = arith.constant dense<0.000000e+00> : vector<16xf32>
    %212 = vector.multi_reduction <add>, %208, %cst_98 [1] : vector<16x16xf32> to vector<16xf32>
    %213 = vector.shape_cast %212 : vector<16xf32> to vector<16x1xf32>
    %cst_99 = arith.constant dense<0.000000e+00> : vector<16xf32>
    %214 = vector.multi_reduction <add>, %211, %cst_99 [1] : vector<16x16xf32> to vector<16xf32>
    %215 = vector.shape_cast %214 : vector<16xf32> to vector<16x1xf32>
    %216 = arith.addf %213, %215 : vector<16x1xf32>
    %217 = tpu.reciprocal %216 {approx = true} : vector<16x1xf32> -> vector<16x1xf32>
    %218 = arith.mulf %216, %217 : vector<16x1xf32>
    %cst_100 = arith.constant 2.000000e+00 : f32
    %219 = vector.broadcast %cst_100 : f32 to vector<16x1xf32>
    %220 = arith.subf %219, %218 : vector<16x1xf32>
    %221 = arith.mulf %217, %220 : vector<16x1xf32>
    %cst_101 = arith.constant dense<0.000000e+00> : vector<16x4xf32>
    %222 = tpu.matmul %208, %196, %cst_101 {dimension_numbers = #tpu.dot_dimension_numbers<[1], [0], [0], [1], [0, 0, 1, 1], [], []>} : vector<16x16xf32>, vector<16x4xf32>, vector<16x4xf32> -> vector<16x4xf32>
    %cst_102 = arith.constant dense<0.000000e+00> : vector<16x4xf32>
    %223 = tpu.matmul %211, %197, %cst_102 {dimension_numbers = #tpu.dot_dimension_numbers<[1], [0], [0], [1], [0, 0, 1, 1], [], []>} : vector<16x16xf32>, vector<16x4xf32>, vector<16x4xf32> -> vector<16x4xf32>
    %224 = arith.addf %222, %223 : vector<16x4xf32>
    %225 = vector.broadcast %221 : vector<16x1xf32> to vector<16x4xf32>
    %226 = arith.mulf %224, %225 : vector<16x4xf32>
    %c0_103 = arith.constant 0 : index
    %c8_104 = arith.constant 8 : index
    %227 = vector.load %arg8[%c0_103, %c8_104] : memref<16x48xf32, #tpu.memory_space<vmem>>, vector<16x4xf32>
    tpu.vector_store %arg8[%c0_103, %c8_104], %226 {strides = array<i32>} : memref<16x48xf32, #tpu.memory_space<vmem>>, vector<16x4xf32>,
    %cst_105 = arith.constant dense<0.000000e+00> : vector<16x16xf32>
    %228 = tpu.matmul %192, %193, %cst_105 {dimension_numbers = #tpu.dot_dimension_numbers<[1], [1], [0], [0], [0, 0, 1, 0], [], []>} : vector<16x4xf32>, vector<16x4xf32>, vector<16x16xf32> -> vector<16x16xf32>
    %cst_106 = arith.constant dense<0.000000e+00> : vector<16x16xf32>
    %229 = tpu.matmul %192, %194, %cst_106 {dimension_numbers = #tpu.dot_dimension_numbers<[1], [1], [0], [0], [0, 0, 1, 0], [], []>} : vector<16x4xf32>, vector<16x4xf32>, vector<16x16xf32> -> vector<16x16xf32>
    %cst_107 = arith.constant dense<0.000000e+00> : vector<16x16xf32>
    %230 = tpu.matmul %192, %195, %cst_107 {dimension_numbers = #tpu.dot_dimension_numbers<[1], [1], [0], [0], [0, 0, 1, 0], [], []>} : vector<16x4xf32>, vector<16x4xf32>, vector<16x16xf32> -> vector<16x16xf32>
    %cst_108 = arith.constant dense<0xFF800000> : vector<16xf32>
    %231 = vector.multi_reduction <maximumf>, %228, %cst_108 [1] : vector<16x16xf32> to vector<16xf32>
    %232 = vector.shape_cast %231 : vector<16xf32> to vector<16x1xf32>
    %cst_109 = arith.constant dense<0xFF800000> : vector<16xf32>
    %233 = vector.multi_reduction <maximumf>, %229, %cst_109 [1] : vector<16x16xf32> to vector<16xf32>
    %234 = vector.shape_cast %233 : vector<16xf32> to vector<16x1xf32>
    %235 = arith.maximumf %232, %234 : vector<16x1xf32>
    %cst_110 = arith.constant dense<0xFF800000> : vector<16xf32>
    %236 = vector.multi_reduction <maximumf>, %230, %cst_110 [1] : vector<16x16xf32> to vector<16xf32>
    %237 = vector.shape_cast %236 : vector<16xf32> to vector<16x1xf32>
    %238 = arith.maximumf %235, %237 : vector<16x1xf32>
    %239 = vector.broadcast %238 : vector<16x1xf32> to vector<16x16xf32>
    %240 = arith.subf %228, %239 : vector<16x16xf32>
    %241 = math.exp %240 : vector<16x16xf32>
    %242 = vector.broadcast %238 : vector<16x1xf32> to vector<16x16xf32>
    %243 = arith.subf %229, %242 : vector<16x16xf32>
    %244 = math.exp %243 : vector<16x16xf32>
    %245 = vector.broadcast %238 : vector<16x1xf32> to vector<16x16xf32>
    %246 = arith.subf %230, %245 : vector<16x16xf32>
    %247 = math.exp %246 : vector<16x16xf32>
    %cst_111 = arith.constant dense<0.000000e+00> : vector<16xf32>
    %248 = vector.multi_reduction <add>, %247, %cst_111 [1] : vector<16x16xf32> to vector<16xf32>
    %249 = vector.shape_cast %248 : vector<16xf32> to vector<16x1xf32>
    %cst_112 = arith.constant dense<0.000000e+00> : vector<16x4xf32>
    %250 = tpu.matmul %247, %198, %cst_112 {dimension_numbers = #tpu.dot_dimension_numbers<[1], [0], [0], [1], [0, 0, 1, 1], [], []>} : vector<16x16xf32>, vector<16x4xf32>, vector<16x4xf32> -> vector<16x4xf32>
    %cst_113 = arith.constant dense<0.000000e+00> : vector<16xf32>
    %251 = vector.multi_reduction <add>, %241, %cst_113 [1] : vector<16x16xf32> to vector<16xf32>
    %252 = vector.shape_cast %251 : vector<16xf32> to vector<16x1xf32>
    %253 = arith.addf %252, %249 : vector<16x1xf32>
    %254 = tpu.reciprocal %253 {approx = true} : vector<16x1xf32> -> vector<16x1xf32>
    %255 = arith.mulf %253, %254 : vector<16x1xf32>
    %cst_114 = arith.constant 2.000000e+00 : f32
    %256 = vector.broadcast %cst_114 : f32 to vector<16x1xf32>
    %257 = arith.subf %256, %255 : vector<16x1xf32>
    %258 = arith.mulf %254, %257 : vector<16x1xf32>
    %cst_115 = arith.constant dense<0.000000e+00> : vector<16xf32>
    %259 = vector.multi_reduction <add>, %244, %cst_115 [1] : vector<16x16xf32> to vector<16xf32>
    %260 = vector.shape_cast %259 : vector<16xf32> to vector<16x1xf32>
    %261 = arith.addf %260, %249 : vector<16x1xf32>
    %262 = tpu.reciprocal %261 {approx = true} : vector<16x1xf32> -> vector<16x1xf32>
    %263 = arith.mulf %261, %262 : vector<16x1xf32>
    %cst_116 = arith.constant 2.000000e+00 : f32
    %264 = vector.broadcast %cst_116 : f32 to vector<16x1xf32>
    %265 = arith.subf %264, %263 : vector<16x1xf32>
    %266 = arith.mulf %262, %265 : vector<16x1xf32>
    %cst_117 = arith.constant dense<0.000000e+00> : vector<16x4xf32>
    %267 = tpu.matmul %241, %196, %cst_117 {dimension_numbers = #tpu.dot_dimension_numbers<[1], [0], [0], [1], [0, 0, 1, 1], [], []>} : vector<16x16xf32>, vector<16x4xf32>, vector<16x4xf32> -> vector<16x4xf32>
    %268 = arith.addf %267, %250 : vector<16x4xf32>
    %269 = vector.broadcast %258 : vector<16x1xf32> to vector<16x4xf32>
    %270 = arith.mulf %268, %269 : vector<16x4xf32>
    %cst_118 = arith.constant dense<0.000000e+00> : vector<16x4xf32>
    %271 = tpu.matmul %244, %197, %cst_118 {dimension_numbers = #tpu.dot_dimension_numbers<[1], [0], [0], [1], [0, 0, 1, 1], [], []>} : vector<16x16xf32>, vector<16x4xf32>, vector<16x4xf32> -> vector<16x4xf32>
    %272 = arith.addf %271, %250 : vector<16x4xf32>
    %273 = vector.broadcast %266 : vector<16x1xf32> to vector<16x4xf32>
    %274 = arith.mulf %272, %273 : vector<16x4xf32>
    %c0_119 = arith.constant 0 : index
    %c24 = arith.constant 24 : index
    %275 = vector.load %arg8[%c0_119, %c24] : memref<16x48xf32, #tpu.memory_space<vmem>>, vector<16x4xf32>
    tpu.vector_store %arg8[%c0_119, %c24], %270 {strides = array<i32>} : memref<16x48xf32, #tpu.memory_space<vmem>>, vector<16x4xf32>,
    %c0_120 = arith.constant 0 : index
    %c40 = arith.constant 40 : index
    %276 = vector.load %arg8[%c0_120, %c40] : memref<16x48xf32, #tpu.memory_space<vmem>>, vector<16x4xf32>
    tpu.vector_store %arg8[%c0_120, %c40], %274 {strides = array<i32>} : memref<16x48xf32, #tpu.memory_space<vmem>>, vector<16x4xf32>,
    %c0_121 = arith.constant 0 : index
    %c40_122 = arith.constant 40 : index
    %277 = vector.load %arg7[%c0_121, %c40_122] : memref<16x144xf32, #tpu.memory_space<vmem>>, vector<16x4xf32>
    %cst_123 = arith.constant 0.288675129 : f32
    %278 = vector.broadcast %cst_123 : f32 to vector<16x4xf32>
    %279 = arith.mulf %277, %278 : vector<16x4xf32>
    %c0_124 = arith.constant 0 : index
    %c44 = arith.constant 44 : index
    %280 = vector.load %arg7[%c0_124, %c44] : memref<16x144xf32, #tpu.memory_space<vmem>>, vector<16x4xf32>
    %cst_125 = arith.constant 0.288675129 : f32
    %281 = vector.broadcast %cst_125 : f32 to vector<16x4xf32>
    %282 = arith.mulf %280, %281 : vector<16x4xf32>
    %c0_126 = arith.constant 0 : index
    %c84 = arith.constant 84 : index
    %283 = vector.load %arg7[%c0_126, %c84] : memref<16x144xf32, #tpu.memory_space<vmem>>, vector<16x4xf32>
    %c0_127 = arith.constant 0 : index
    %c88 = arith.constant 88 : index
    %284 = vector.load %arg7[%c0_127, %c88] : memref<16x144xf32, #tpu.memory_space<vmem>>, vector<16x4xf32>
    %c0_128 = arith.constant 0 : index
    %c92 = arith.constant 92 : index
    %285 = vector.load %arg7[%c0_128, %c92] : memref<16x144xf32, #tpu.memory_space<vmem>>, vector<16x4xf32>
    %c0_129 = arith.constant 0 : index
    %c132 = arith.constant 132 : index
    %286 = vector.load %arg7[%c0_129, %c132] : memref<16x144xf32, #tpu.memory_space<vmem>>, vector<16x4xf32>
    %c0_130 = arith.constant 0 : index
    %c136 = arith.constant 136 : index
    %287 = vector.load %arg7[%c0_130, %c136] : memref<16x144xf32, #tpu.memory_space<vmem>>, vector<16x4xf32>
    %c0_131 = arith.constant 0 : index
    %c140 = arith.constant 140 : index
    %288 = vector.load %arg7[%c0_131, %c140] : memref<16x144xf32, #tpu.memory_space<vmem>>, vector<16x4xf32>
    %cst_132 = arith.constant dense<0.000000e+00> : vector<16x16xf32>
    %289 = tpu.matmul %279, %283, %cst_132 {dimension_numbers = #tpu.dot_dimension_numbers<[1], [1], [0], [0], [0, 0, 1, 0], [], []>} : vector<16x4xf32>, vector<16x4xf32>, vector<16x16xf32> -> vector<16x16xf32>
    %cst_133 = arith.constant dense<0.000000e+00> : vector<16x16xf32>
    %290 = tpu.matmul %279, %284, %cst_133 {dimension_numbers = #tpu.dot_dimension_numbers<[1], [1], [0], [0], [0, 0, 1, 0], [], []>} : vector<16x4xf32>, vector<16x4xf32>, vector<16x16xf32> -> vector<16x16xf32>
    %cst_134 = arith.constant dense<0xFF800000> : vector<16xf32>
    %291 = vector.multi_reduction <maximumf>, %289, %cst_134 [1] : vector<16x16xf32> to vector<16xf32>
    %292 = vector.shape_cast %291 : vector<16xf32> to vector<16x1xf32>
    %cst_135 = arith.constant dense<0xFF800000> : vector<16xf32>
    %293 = vector.multi_reduction <maximumf>, %290, %cst_135 [1] : vector<16x16xf32> to vector<16xf32>
    %294 = vector.shape_cast %293 : vector<16xf32> to vector<16x1xf32>
    %295 = arith.maximumf %292, %294 : vector<16x1xf32>
    %296 = vector.broadcast %295 : vector<16x1xf32> to vector<16x16xf32>
    %297 = arith.subf %289, %296 : vector<16x16xf32>
    %298 = math.exp %297 : vector<16x16xf32>
    %299 = vector.broadcast %295 : vector<16x1xf32> to vector<16x16xf32>
    %300 = arith.subf %290, %299 : vector<16x16xf32>
    %301 = math.exp %300 : vector<16x16xf32>
    %cst_136 = arith.constant dense<0.000000e+00> : vector<16xf32>
    %302 = vector.multi_reduction <add>, %298, %cst_136 [1] : vector<16x16xf32> to vector<16xf32>
    %303 = vector.shape_cast %302 : vector<16xf32> to vector<16x1xf32>
    %cst_137 = arith.constant dense<0.000000e+00> : vector<16xf32>
    %304 = vector.multi_reduction <add>, %301, %cst_137 [1] : vector<16x16xf32> to vector<16xf32>
    %305 = vector.shape_cast %304 : vector<16xf32> to vector<16x1xf32>
    %306 = arith.addf %303, %305 : vector<16x1xf32>
    %307 = tpu.reciprocal %306 {approx = true} : vector<16x1xf32> -> vector<16x1xf32>
    %308 = arith.mulf %306, %307 : vector<16x1xf32>
    %cst_138 = arith.constant 2.000000e+00 : f32
    %309 = vector.broadcast %cst_138 : f32 to vector<16x1xf32>
    %310 = arith.subf %309, %308 : vector<16x1xf32>
    %311 = arith.mulf %307, %310 : vector<16x1xf32>
    %cst_139 = arith.constant dense<0.000000e+00> : vector<16x4xf32>
    %312 = tpu.matmul %298, %286, %cst_139 {dimension_numbers = #tpu.dot_dimension_numbers<[1], [0], [0], [1], [0, 0, 1, 1], [], []>} : vector<16x16xf32>, vector<16x4xf32>, vector<16x4xf32> -> vector<16x4xf32>
    %cst_140 = arith.constant dense<0.000000e+00> : vector<16x4xf32>
    %313 = tpu.matmul %301, %287, %cst_140 {dimension_numbers = #tpu.dot_dimension_numbers<[1], [0], [0], [1], [0, 0, 1, 1], [], []>} : vector<16x16xf32>, vector<16x4xf32>, vector<16x4xf32> -> vector<16x4xf32>
    %314 = arith.addf %312, %313 : vector<16x4xf32>
    %315 = vector.broadcast %311 : vector<16x1xf32> to vector<16x4xf32>
    %316 = arith.mulf %314, %315 : vector<16x4xf32>
    %c0_141 = arith.constant 0 : index
    %c12 = arith.constant 12 : index
    %317 = vector.load %arg8[%c0_141, %c12] : memref<16x48xf32, #tpu.memory_space<vmem>>, vector<16x4xf32>
    tpu.vector_store %arg8[%c0_141, %c12], %316 {strides = array<i32>} : memref<16x48xf32, #tpu.memory_space<vmem>>, vector<16x4xf32>,
    %cst_142 = arith.constant dense<0.000000e+00> : vector<16x16xf32>
    %318 = tpu.matmul %282, %283, %cst_142 {dimension_numbers = #tpu.dot_dimension_numbers<[1], [1], [0], [0], [0, 0, 1, 0], [], []>} : vector<16x4xf32>, vector<16x4xf32>, vector<16x16xf32> -> vector<16x16xf32>
    %cst_143 = arith.constant dense<0.000000e+00> : vector<16x16xf32>
    %319 = tpu.matmul %282, %284, %cst_143 {dimension_numbers = #tpu.dot_dimension_numbers<[1], [1], [0], [0], [0, 0, 1, 0], [], []>} : vector<16x4xf32>, vector<16x4xf32>, vector<16x16xf32> -> vector<16x16xf32>
    %cst_144 = arith.constant dense<0.000000e+00> : vector<16x16xf32>
    %320 = tpu.matmul %282, %285, %cst_144 {dimension_numbers = #tpu.dot_dimension_numbers<[1], [1], [0], [0], [0, 0, 1, 0], [], []>} : vector<16x4xf32>, vector<16x4xf32>, vector<16x16xf32> -> vector<16x16xf32>
    %cst_145 = arith.constant dense<0xFF800000> : vector<16xf32>
    %321 = vector.multi_reduction <maximumf>, %318, %cst_145 [1] : vector<16x16xf32> to vector<16xf32>
    %322 = vector.shape_cast %321 : vector<16xf32> to vector<16x1xf32>
    %cst_146 = arith.constant dense<0xFF800000> : vector<16xf32>
    %323 = vector.multi_reduction <maximumf>, %319, %cst_146 [1] : vector<16x16xf32> to vector<16xf32>
    %324 = vector.shape_cast %323 : vector<16xf32> to vector<16x1xf32>
    %325 = arith.maximumf %322, %324 : vector<16x1xf32>
    %cst_147 = arith.constant dense<0xFF800000> : vector<16xf32>
    %326 = vector.multi_reduction <maximumf>, %320, %cst_147 [1] : vector<16x16xf32> to vector<16xf32>
    %327 = vector.shape_cast %326 : vector<16xf32> to vector<16x1xf32>
    %328 = arith.maximumf %325, %327 : vector<16x1xf32>
    %329 = vector.broadcast %328 : vector<16x1xf32> to vector<16x16xf32>
    %330 = arith.subf %318, %329 : vector<16x16xf32>
    %331 = math.exp %330 : vector<16x16xf32>
    %332 = vector.broadcast %328 : vector<16x1xf32> to vector<16x16xf32>
    %333 = arith.subf %319, %332 : vector<16x16xf32>
    %334 = math.exp %333 : vector<16x16xf32>
    %335 = vector.broadcast %328 : vector<16x1xf32> to vector<16x16xf32>
    %336 = arith.subf %320, %335 : vector<16x16xf32>
    %337 = math.exp %336 : vector<16x16xf32>
    %cst_148 = arith.constant dense<0.000000e+00> : vector<16xf32>
    %338 = vector.multi_reduction <add>, %337, %cst_148 [1] : vector<16x16xf32> to vector<16xf32>
    %339 = vector.shape_cast %338 : vector<16xf32> to vector<16x1xf32>
    %cst_149 = arith.constant dense<0.000000e+00> : vector<16x4xf32>
    %340 = tpu.matmul %337, %288, %cst_149 {dimension_numbers = #tpu.dot_dimension_numbers<[1], [0], [0], [1], [0, 0, 1, 1], [], []>} : vector<16x16xf32>, vector<16x4xf32>, vector<16x4xf32> -> vector<16x4xf32>
    %cst_150 = arith.constant dense<0.000000e+00> : vector<16xf32>
    %341 = vector.multi_reduction <add>, %331, %cst_150 [1] : vector<16x16xf32> to vector<16xf32>
    %342 = vector.shape_cast %341 : vector<16xf32> to vector<16x1xf32>
    %343 = arith.addf %342, %339 : vector<16x1xf32>
    %344 = tpu.reciprocal %343 {approx = true} : vector<16x1xf32> -> vector<16x1xf32>
    %345 = arith.mulf %343, %344 : vector<16x1xf32>
    %cst_151 = arith.constant 2.000000e+00 : f32
    %346 = vector.broadcast %cst_151 : f32 to vector<16x1xf32>
    %347 = arith.subf %346, %345 : vector<16x1xf32>
    %348 = arith.mulf %344, %347 : vector<16x1xf32>
    %cst_152 = arith.constant dense<0.000000e+00> : vector<16xf32>
    %349 = vector.multi_reduction <add>, %334, %cst_152 [1] : vector<16x16xf32> to vector<16xf32>
    %350 = vector.shape_cast %349 : vector<16xf32> to vector<16x1xf32>
    %351 = arith.addf %350, %339 : vector<16x1xf32>
    %352 = tpu.reciprocal %351 {approx = true} : vector<16x1xf32> -> vector<16x1xf32>
    %353 = arith.mulf %351, %352 : vector<16x1xf32>
    %cst_153 = arith.constant 2.000000e+00 : f32
    %354 = vector.broadcast %cst_153 : f32 to vector<16x1xf32>
    %355 = arith.subf %354, %353 : vector<16x1xf32>
    %356 = arith.mulf %352, %355 : vector<16x1xf32>
    %cst_154 = arith.constant dense<0.000000e+00> : vector<16x4xf32>
    %357 = tpu.matmul %331, %286, %cst_154 {dimension_numbers = #tpu.dot_dimension_numbers<[1], [0], [0], [1], [0, 0, 1, 1], [], []>} : vector<16x16xf32>, vector<16x4xf32>, vector<16x4xf32> -> vector<16x4xf32>
    %358 = arith.addf %357, %340 : vector<16x4xf32>
    %359 = vector.broadcast %348 : vector<16x1xf32> to vector<16x4xf32>
    %360 = arith.mulf %358, %359 : vector<16x4xf32>
    %cst_155 = arith.constant dense<0.000000e+00> : vector<16x4xf32>
    %361 = tpu.matmul %334, %287, %cst_155 {dimension_numbers = #tpu.dot_dimension_numbers<[1], [0], [0], [1], [0, 0, 1, 1], [], []>} : vector<16x16xf32>, vector<16x4xf32>, vector<16x4xf32> -> vector<16x4xf32>
    %362 = arith.addf %361, %340 : vector<16x4xf32>
    %363 = vector.broadcast %356 : vector<16x1xf32> to vector<16x4xf32>
    %364 = arith.mulf %362, %363 : vector<16x4xf32>
    %c0_156 = arith.constant 0 : index
    %c28_157 = arith.constant 28 : index
    %365 = vector.load %arg8[%c0_156, %c28_157] : memref<16x48xf32, #tpu.memory_space<vmem>>, vector<16x4xf32>
    tpu.vector_store %arg8[%c0_156, %c28_157], %360 {strides = array<i32>} : memref<16x48xf32, #tpu.memory_space<vmem>>, vector<16x4xf32>,
    %c0_158 = arith.constant 0 : index
    %c44_159 = arith.constant 44 : index
    %366 = vector.load %arg8[%c0_158, %c44_159] : memref<16x48xf32, #tpu.memory_space<vmem>>, vector<16x4xf32>
    tpu.vector_store %arg8[%c0_158, %c44_159], %364 {strides = array<i32>} : memref<16x48xf32, #tpu.memory_space<vmem>>, vector<16x4xf32>,
    %c0_160 = arith.constant 0 : index
    %c0_161 = arith.constant 0 : index
    %367 = vector.load %arg8[%c0_160, %c0_161] : memref<16x48xf32, #tpu.memory_space<vmem>>, vector<16x48xf32>
    %c0_162 = arith.constant 0 : index
    %c0_163 = arith.constant 0 : index
    %368 = vector.load %arg4[%c0_162, %c0_163] : memref<48x48xf32, #tpu.memory_space<vmem>>, vector<48x48xf32>
    %cst_164 = arith.constant dense<0.000000e+00> : vector<16x48xf32>
    %369 = tpu.matmul %367, %368, %cst_164 {dimension_numbers = #tpu.dot_dimension_numbers<[1], [0], [0], [1], [0, 0, 1, 1], [], []>} : vector<16x48xf32>, vector<48x48xf32>, vector<16x48xf32> -> vector<16x48xf32>
    %c0_165 = arith.constant 0 : index
    %c0_166 = arith.constant 0 : index
    %370 = vector.load %arg5[%c0_165, %c0_166] : memref<1x48xf32, #tpu.memory_space<vmem>>, vector<1x48xf32>
    %371 = vector.broadcast %370 : vector<1x48xf32> to vector<16x48xf32>
    %372 = arith.addf %369, %371 : vector<16x48xf32>
    %c0_167 = arith.constant 0 : index
    %c0_168 = arith.constant 0 : index
    %373 = vector.load %arg6[%c0_167, %c0_168] : memref<16x48xf32, #tpu.memory_space<vmem>>, vector<16x48xf32>
    tpu.vector_store %arg6[%c0_167, %c0_168], %372 {strides = array<i32>} : memref<16x48xf32, #tpu.memory_space<vmem>>, vector<16x48xf32>,
    return
  }
  func.func @transform_0(%arg0: i32) -> (i32, i32) {
    %c0_i32 = arith.constant 0 : i32
    %c0_i32_0 = arith.constant 0 : i32
    return %arg0, %c0_i32 : i32, i32
  }
  func.func @transform_1(%arg0: i32) -> (i32, i32) {
    %c0_i32 = arith.constant 0 : i32
    %c0_i32_0 = arith.constant 0 : i32
    %c0_i32_1 = arith.constant 0 : i32
    return %c0_i32, %c0_i32_0 : i32, i32
  }
  func.func @transform_2(%arg0: i32) -> (i32, i32) {
    %c0_i32 = arith.constant 0 : i32
    %c0_i32_0 = arith.constant 0 : i32
    %c0_i32_1 = arith.constant 0 : i32
    return %c0_i32, %c0_i32_0 : i32, i32
  }
  func.func @transform_3(%arg0: i32) -> (i32, i32) {
    %c0_i32 = arith.constant 0 : i32
    %c0_i32_0 = arith.constant 0 : i32
    %c0_i32_1 = arith.constant 0 : i32
    return %c0_i32, %c0_i32_0 : i32, i32
  }
  func.func @transform_4(%arg0: i32) -> (i32, i32) {
    %c0_i32 = arith.constant 0 : i32
    %c0_i32_0 = arith.constant 0 : i32
    %c0_i32_1 = arith.constant 0 : i32
    return %c0_i32, %c0_i32_0 : i32, i32
  }
  func.func @transform_5(%arg0: i32) -> (i32, i32) {
    %c0_i32 = arith.constant 0 : i32
    %c0_i32_0 = arith.constant 0 : i32
    return %arg0, %c0_i32 : i32, i32
  }
}

</mosaic_0001>

<llo_original>
// kernel: tpu_custom_call.1
$region0: #{tpu_custom_call.1}
  #allocation0 [shape = 'u32[]', space=smem, size = 0x4, offset = 0x4, fixed_abs, tag = 'smem constant byte address 0x4 - core index']
  #allocation1 [shape = 'u32[144,128]{1,0:T(1,128)}', space=vmem, size = 0x12000, scoped, tag = 'internal scratch']
  #allocation2 [shape = 'f32[16,144]{1,0:T(8,128)}', space=vmem, size = 0x4000, scoped, tag = 'scratch operand']
  #allocation3 [shape = 'f32[16,48]{1,0:T(8,128)}', space=vmem, size = 0x2000, scoped, tag = 'scratch operand']
  %s0 = inlined_call_operand.hbm [shape: f32[32,48], index: 0, kind: input, shape index: {}]
  %s1 = inlined_call_operand.hbm [shape: f32[48,144], index: 1, kind: input, shape index: {}]
  %s2 = inlined_call_operand.vmem [shape: f32[1,144], index: 2, kind: input, shape index: {}]
  %s3 = inlined_call_operand.hbm [shape: f32[48,48], index: 3, kind: input, shape index: {}]
  %s4 = inlined_call_operand.vmem [shape: f32[1,48], index: 4, kind: input, shape index: {}]
  %s5 = inlined_call_operand.hbm [shape: f32[32,48], index: 5, kind: output, shape index: {}]
  %s6 = sld [smem:[#allocation0]]
  $region65: #{tpu_custom_call.1} parent=0
    _
  %s8 = ssub.s32 1, %s6
  %s9 = scalar_select 0, %s8, %s6
  $region1: #{tpu_custom_call.1} parent=0
    #allocation4 [shape = 'u8[16384]{0}', space=vmem, size = 0x4000, scoped, tag = 'input window, operand 0']
    #allocation5 [shape = 's32[2]{0}', space=sflag, size = 0x8, scoped, tag = 'scoped memory for tpu_custom_call.1']
    #allocation6 [shape = 's32[2]{0}', space=sflag, size = 0x8, scoped, tag = 'scoped memory for tpu_custom_call.1']
    #allocation7 [shape = 'u8[49152]{0}', space=vmem, size = 0xc000, scoped, tag = 'input window, operand 1, single buffered']
    #allocation8 [shape = 's32[1]{0}', space=sflag, size = 0x4, scoped, tag = 'scoped memory for tpu_custom_call.1']
    #allocation9 [shape = 'u8[24576]{0}', space=vmem, size = 0x6000, scoped, tag = 'input window, operand 3, single buffered']
    #allocation10 [shape = 'u8[16384]{0}', space=vmem, size = 0x4000, scoped, tag = 'output window, operand 0']
    %10 = vsyncpa [#allocation5], 0
    %s11 = scalar_lea.sflag [#allocation5], 1
    %12 = vsyncpa %s11, 0
    %13 = vsyncpa [#allocation8], 0
    %14 = vsyncpa [#allocation6], 0
    %s15 = scalar_lea.sflag [#allocation6], 1
    %16 = vsyncpa %s15, 0
    loop: start=0, step=1, limit=4
    $region2: #{tpu_custom_call.1} parent=1 // loop_pre_header
      _
    $region3: #{tpu_custom_call.1} parent=1 // loop_header
      %s18 = sphi 0, %s22
      %p19 = scmp.ge.s32.totalorder %s18, 4
      %s28 = sphi 0, %s30
      %s31 = sphi 0, %s28
      %s32 = sphi 0, %s31
      %s48 = sphi 0, %s32
      %s52 = sphi 0, %s52
      %s54 = sphi 0, %s52
      %s55 = sphi 0, %s54
      %s69 = sphi 0, %s55
      %s73 = sphi 0, %s73
      %s75 = sphi 0, %s73
      %s76 = sphi 0, %s75
      %s90 = sphi 0, %s76
      %s94 = sphi 0, %s94
      %s96 = sphi 0, %s94
      %s97 = sphi 0, %s96
      %s111 = sphi 0, %s97
      %s115 = sphi 0, %s115
      %s117 = sphi 0, %s115
      %s118 = sphi 0, %s117
      %s132 = sphi 0, %s118
      %s138 = sphi 0, %s140
      %s141 = sphi 0, %s138
      %s142 = sphi 0, %s141
      %s158 = sphi 0, %s142
    $region4: #{tpu_custom_call.1} parent=1 // loop_header_branch
      %21 = sbr.rel (%p19) target = $region8
    $region5: #{tpu_custom_call.1} parent=1 // loop_body
      %s23 = ssub.s32 %s18, 1
      %s24 = ssub.s32 %s18, 2
      %s25 = sadd.s32 %s18, 1
      %s26 = ssub.s32 %s18, %s25
      %p27 = scmp.eq.s32.totalorder %s26, 0
      %s29 = sadd.s32 %s28, 1
      %s30 = scalar_select %p27, %s28, %s29
      %p33 = pneg %p27
      %p34 = scmp.eq.s32.totalorder %s18, 1
      %p35 = por %p33, %p34
      %p36 = scmp.ne.s32.totalorder %s28, %s31
      %p37 = scmp.eq.s32.totalorder %s18, 0
      %p38 = por %p36, %p37
      %p39 = scmp.ne.s32.totalorder %s28, %s31
      %p40 = scmp.eq.s32.totalorder %s23, 1
      %p41 = por %p39, %p40
      %p42 = scmp.ne.s32.totalorder %s31, %s32
      %p43 = scmp.eq.s32.totalorder %s23, 0
      %p44 = por %p42, %p43
      %p45 = scmp.ne.s32.totalorder %s31, %s32
      %p46 = scmp.eq.s32.totalorder %s24, 1
      %p47 = por %p45, %p46
      %p49 = scmp.ne.s32.totalorder %s32, %s48
      %p50 = scmp.eq.s32.totalorder %s24, 0
      %p51 = por %p49, %p50
      %s53 = sadd.s32 %s52, 1
      %p56 = scmp.eq.s32.totalorder %s18, 1
      %p57 = scmp.ne.s32.totalorder %s52, %s54
      %p58 = scmp.eq.s32.totalorder %s18, 0
      %p59 = por %p57, %p58
      %p60 = scmp.ne.s32.totalorder %s52, %s54
      %p61 = scmp.eq.s32.totalorder %s23, 1
      %p62 = por %p60, %p61
      %p63 = scmp.ne.s32.totalorder %s54, %s55
      %p64 = scmp.eq.s32.totalorder %s23, 0
      %p65 = por %p63, %p64
      %p66 = scmp.ne.s32.totalorder %s54, %s55
      %p67 = scmp.eq.s32.totalorder %s24, 1
      %p68 = por %p66, %p67
      %p70 = scmp.ne.s32.totalorder %s55, %s69
      %p71 = scmp.eq.s32.totalorder %s24, 0
      %p72 = por %p70, %p71
      %s74 = sadd.s32 %s73, 1
      %p77 = scmp.eq.s32.totalorder %s18, 1
      %p78 = scmp.ne.s32.totalorder %s73, %s75
      %p79 = scmp.eq.s32.totalorder %s18, 0
      %p80 = por %p78, %p79
      %p81 = scmp.ne.s32.totalorder %s73, %s75
      %p82 = scmp.eq.s32.totalorder %s23, 1
      %p83 = por %p81, %p82
      %p84 = scmp.ne.s32.totalorder %s75, %s76
      %p85 = scmp.eq.s32.totalorder %s23, 0
      %p86 = por %p84, %p85
      %p87 = scmp.ne.s32.totalorder %s75, %s76
      %p88 = scmp.eq.s32.totalorder %s24, 1
      %p89 = por %p87, %p88
      %p91 = scmp.ne.s32.totalorder %s76, %s90
      %p92 = scmp.eq.s32.totalorder %s24, 0
      %p93 = por %p91, %p92
      %s95 = sadd.s32 %s94, 1
      %p98 = scmp.eq.s32.totalorder %s18, 1
      %p99 = scmp.ne.s32.totalorder %s94, %s96
      %p100 = scmp.eq.s32.totalorder %s18, 0
      %p101 = por %p99, %p100
      %p102 = scmp.ne.s32.totalorder %s94, %s96
      %p103 = scmp.eq.s32.totalorder %s23, 1
      %p104 = por %p102, %p103
      %p105 = scmp.ne.s32.totalorder %s96, %s97
      %p106 = scmp.eq.s32.totalorder %s23, 0
      %p107 = por %p105, %p106
      %p108 = scmp.ne.s32.totalorder %s96, %s97
      %p109 = scmp.eq.s32.totalorder %s24, 1
      %p110 = por %p108, %p109
      %p112 = scmp.ne.s32.totalorder %s97, %s111
      %p113 = scmp.eq.s32.totalorder %s24, 0
      %p114 = por %p112, %p113
      %s116 = sadd.s32 %s115, 1
      %p119 = scmp.eq.s32.totalorder %s18, 1
      %p120 = scmp.ne.s32.totalorder %s115, %s117
      %p121 = scmp.eq.s32.totalorder %s18, 0
      %p122 = por %p120, %p121
      %p123 = scmp.ne.s32.totalorder %s115, %s117
      %p124 = scmp.eq.s32.totalorder %s23, 1
      %p125 = por %p123, %p124
      %p126 = scmp.ne.s32.totalorder %s117, %s118
      %p127 = scmp.eq.s32.totalorder %s23, 0
      %p128 = por %p126, %p127
      %p129 = scmp.ne.s32.totalorder %s117, %s118
      %p130 = scmp.eq.s32.totalorder %s24, 1
      %p131 = por %p129, %p130
      %p133 = scmp.ne.s32.totalorder %s118, %s132
      %p134 = scmp.eq.s32.totalorder %s24, 0
      %p135 = por %p133, %p134
      %s136 = ssub.s32 %s18, %s25
      %p137 = scmp.eq.s32.totalorder %s136, 0
      %s139 = sadd.s32 %s138, 1
      %s140 = scalar_select %p137, %s138, %s139
      %p143 = pneg %p137
      %p144 = scmp.eq.s32.totalorder %s18, 1
      %p145 = por %p143, %p144
      %p146 = scmp.ne.s32.totalorder %s138, %s141
      %p147 = scmp.eq.s32.totalorder %s18, 0
      %p148 = por %p146, %p147
      %p149 = scmp.ne.s32.totalorder %s138, %s141
      %p150 = scmp.eq.s32.totalorder %s23, 1
      %p151 = por %p149, %p150
      %p152 = scmp.ne.s32.totalorder %s141, %s142
      %p153 = scmp.eq.s32.totalorder %s23, 0
      %p154 = por %p152, %p153
      %p155 = scmp.ne.s32.totalorder %s141, %s142
      %p156 = scmp.eq.s32.totalorder %s24, 1
      %p157 = por %p155, %p156
      %p159 = scmp.ne.s32.totalorder %s142, %s158
      %p160 = scmp.eq.s32.totalorder %s24, 0
      %p161 = por %p159, %p160
      %p162 = scmp.le.s32.totalorder 1, %s18
      %p163 = scmp.lt.s32.totalorder %s18, 3
      %p164 = pnand %p162, %p163
      %p165 = pneg %p164
      // Predicated region
      $region9: #{tpu_custom_call.1} parent=5 // pred_check
        _
      $region10: #{tpu_custom_call.1} parent=5 // pred_check_branch
        %167 = sbr.rel (%p164) target = $region12
      $region11: #{tpu_custom_call.1} parent=5 // pred_region
        %s168 = ssub.s32 %s18, 1
        // Predicated region
        $region13: #{tpu_custom_call.1} parent=11 // pred_check
          %p169 = pneg %p65
        $region14: #{tpu_custom_call.1} parent=11 // pred_check_branch
          %171 = sbr.rel (%p169) target = $region16
        $region15: #{tpu_custom_call.1} parent=11 // pred_region
          %s173 = ssub.s32 1536, 1536
          %174 = vsyncadd [#allocation8], %s173
          %s175 = sshll.u32 [#allocation7], 4
          %s176 = int_to_ptr.vmem [resolvable:$true] %s175
          %181 = dma.hbm_to_vmem [thread:$0]  %s1, 1536, %s176, [#allocation8], 256, 256, 16
        $region16: #{tpu_custom_call.1} parent=11 // pred_fallthru
          _
        // Predicated region
        $region17: #{tpu_custom_call.1} parent=11 // pred_check
          %p182 = pneg %p86
        $region18: #{tpu_custom_call.1} parent=11 // pred_check_branch
          %184 = sbr.rel (%p182) target = $region20
        $region19: #{tpu_custom_call.1} parent=11 // pred_region
          _
        $region20: #{tpu_custom_call.1} parent=11 // pred_fallthru
          _
        // Predicated region
        $region21: #{tpu_custom_call.1} parent=11 // pred_check
          %p185 = pneg %p107
        $region22: #{tpu_custom_call.1} parent=11 // pred_check_branch
          %187 = sbr.rel (%p185) target = $region24
        $region23: #{tpu_custom_call.1} parent=11 // pred_region
          %s189 = ssub.s32 768, 768
          %190 = vsyncadd [#allocation8], %s189
          %s191 = sshll.u32 [#allocation9], 4
          %s192 = int_to_ptr.vmem [resolvable:$true] %s191
          %197 = dma.hbm_to_vmem [thread:$0]  %s3, 768, %s192, [#allocation8], 128, 128, 8
        $region24: #{tpu_custom_call.1} parent=11 // pred_fallthru
          _
        // Predicated region
        $region25: #{tpu_custom_call.1} parent=11 // pred_check
          %p198 = pneg %p128
        $region26: #{tpu_custom_call.1} parent=11 // pred_check_branch
          %200 = sbr.rel (%p198) target = $region28
        $region27: #{tpu_custom_call.1} parent=11 // pred_region
          _
        $region28: #{tpu_custom_call.1} parent=11 // pred_fallthru
          _
      $region12: #{tpu_custom_call.1} parent=5 // pred_fallthru
        _
      %p201 = scmp.lt.s32.totalorder %s18, 2
      // Predicated region
      $region29: #{tpu_custom_call.1} parent=5 // pred_check
        %p202 = pneg %p201
      $region30: #{tpu_custom_call.1} parent=5 // pred_check_branch
        %204 = sbr.rel (%p202) target = $region32
      $region31: #{tpu_custom_call.1} parent=5 // pred_region
        // Predicated region
        $region33: #{tpu_custom_call.1} parent=31 // pred_check
          %p205 = pneg %p38
        $region34: #{tpu_custom_call.1} parent=31 // pred_check_branch
          %207 = sbr.rel (%p205) target = $region36
        $region35: #{tpu_custom_call.1} parent=31 // pred_region
          %s208 = sand.u32 %s28, 1
          %s209 = scalar_lea.sflag [#allocation5], %s208
          %s210 = sand.u32 %s28, 1
          %s211 = smul.addr %s210, 16
          %s212 = scalar_lea.vmem [#allocation4], %s211
          %s213 = smul.u32 2, %s18
          %s215 = ssub.s32 256, 256
          %216 = vsyncadd %s209, %s215
          %s217 = smul.addr %s213, 128
          %s218 = scalar_lea.hbm %s0, %s217
          %s219 = sshll.u32 %s212, 4
          %s220 = int_to_ptr.vmem [resolvable:$true] %s219
          %225 = dma.hbm_to_vmem [thread:$0]  %s218, 256, %s220, %s209, 128, 128, 8
        $region36: #{tpu_custom_call.1} parent=31 // pred_fallthru
          _
      $region32: #{tpu_custom_call.1} parent=5 // pred_fallthru
        _
      %p226 = scmp.le.s32.totalorder 1, %s18
      %p227 = scmp.lt.s32.totalorder %s18, 3
      %p228 = pnand %p226, %p227
      %p229 = pneg %p228
      // Predicated region
      $region37: #{tpu_custom_call.1} parent=5 // pred_check
        _
      $region38: #{tpu_custom_call.1} parent=5 // pred_check_branch
        %231 = sbr.rel (%p228) target = $region40
      $region39: #{tpu_custom_call.1} parent=5 // pred_region
        %s232 = ssub.s32 %s18, 1
        %s233 = sand.u32 %s31, 1
        %s234 = scalar_lea.sflag [#allocation5], %s233
        %s235 = sand.u32 %s31, 1
        %s236 = smul.addr %s235, 16
        %s237 = scalar_lea.vmem [#allocation4], %s236
        // Predicated region
        $region41: #{tpu_custom_call.1} parent=39 // pred_check
          %p238 = pneg %p44
        $region42: #{tpu_custom_call.1} parent=39 // pred_check_branch
          %240 = sbr.rel (%p238) target = $region44
        $region43: #{tpu_custom_call.1} parent=39 // pred_region
          %241 = dma.done %s234, 256
        $region44: #{tpu_custom_call.1} parent=39 // pred_fallthru
          _
        // Predicated region
        $region45: #{tpu_custom_call.1} parent=39 // pred_check
          %p242 = pneg %p65
        $region46: #{tpu_custom_call.1} parent=39 // pred_check_branch
          %244 = sbr.rel (%p242) target = $region48
        $region47: #{tpu_custom_call.1} parent=39 // pred_region
          %245 = dma.done [#allocation8], 1536
        $region48: #{tpu_custom_call.1} parent=39 // pred_fallthru
          _
        // Predicated region
        $region49: #{tpu_custom_call.1} parent=39 // pred_check
          %p246 = pneg %p107
        $region50: #{tpu_custom_call.1} parent=39 // pred_check_branch
          %248 = sbr.rel (%p246) target = $region52
        $region51: #{tpu_custom_call.1} parent=39 // pred_region
          %249 = dma.done [#allocation8], 768
        $region52: #{tpu_custom_call.1} parent=39 // pred_fallthru
          _
        %s250 = sand.u32 %s31, 1
        %s251 = scalar_lea.sflag [#allocation5], %s250
        %s252 = sand.u32 %s31, 1
        %s253 = smul.addr %s252, 16
        %s254 = scalar_lea.vmem [#allocation4], %s253
        %p255 = pneg %p44
        %p256 = pneg %p41
        %p257 = pneg %p65
        %p258 = pneg %p62
        %p259 = pneg %p86
        %p260 = pneg %p83
        %p261 = pneg %p107
        %p262 = pneg %p104
        %p263 = pneg %p128
        %p264 = pneg %p125
        %p265 = pneg %p154
        %p266 = pneg %p151
        %s267 = sand.u32 %s141, 1
        %s268 = scalar_lea.sflag [#allocation6], %s267
        %s269 = sand.u32 %s141, 1
        %s270 = smul.addr %s269, 16
        %s271 = scalar_lea.vmem [#allocation10], %s270
        %s272 = smul.u32 2, %s23
        %s273 = smul.u32 2, %s23
        %v274 = vld [vmem:[%s237] sm:$0xff]
        %v275 = vld [vmem:[%s237 + $0x8] sm:$0xff]
        %v276 = vld [vmem:[#allocation7] sm:$0xff]
        %v277 = vld [vmem:[#allocation7 + $0x8] sm:$0xff]
        %v278 = vld [vmem:[#allocation7 + $0x10] sm:$0xff]
        %v279 = vld [vmem:[#allocation7 + $0x18] sm:$0xff]
        %v280 = vld [vmem:[#allocation7 + $0x20] sm:$0xff]
        %v281 = vld [vmem:[#allocation7 + $0x28] sm:$0xff]
        %v282 = vld [vmem:[#allocation7 + $0x30] sm:$0xff]
        %v283 = vld [vmem:[#allocation7 + $0x38] sm:$0xff]
        %v284 = vld [vmem:[#allocation7 + $0x40] sm:$0xff]
        %v285 = vld [vmem:[#allocation7 + $0x48] sm:$0xff]
        %v286 = vld [vmem:[#allocation7 + $0x50] sm:$0xff]
        %v287 = vld [vmem:[#allocation7 + $0x58] sm:$0xff]
        %v288 = vld [vmem:[%s2] sm:$0x3]
        %v290 = vlaneseq
        %v291 = vshrl.u32 %v290, 7
        %v292 = vsub.s32 0, %v291
        %v293 = vrot.slane %v288, %v292
        %v294 = vlaneseq
        %v295 = vshrl.u32 %v294, 7
        %v296 = vsub.s32 1, %v295
        %v297 = vrot.slane %v288, %v296
        %vm300 = vcmask 392192
        %v302 = vsel %vm300, %v274, 0
        %v305 = vsel %vm300, %v275, 0
        %307 = vmatprep.subr.mxu0 0.0
        %308 = vmatpush1.msra.mxu0 0.0
        %309 = vmatprep.subr.mxu0 0.0
        %310 = vmatpush1.msra.mxu0 0.0
        %311 = vmatprep.subr.mxu0 0.0
        %312 = vmatpush1.msra.mxu0 0.0
        %313 = vmatprep.subr.mxu0 0.0
        %314 = vmatpush1.msra.mxu0 0.0
        %315 = vmatprep.subr.mxu0 0.0
        %316 = vmatpush1.msra.mxu0 0.0
        %317 = vmatprep.subr.mxu0 0.0
        %318 = vmatpush1.msra.mxu0 0.0
        %319 = vmatprep.subr.mxu0 0.0
        %320 = vmatpush1.msra.mxu0 0.0
        %321 = vmatprep.subr.mxu0 0.0
        %322 = vmatpush1.msra.mxu0 0.0
        %323 = vmatprep.subr.mxu0 0.0
        %324 = vmatpush1.msra.mxu0 0.0
        %325 = vmatprep.subr.mxu0 0.0
        %326 = vmatpush1.msra.mxu0 0.0
        %327 = vmatprep.subr.mxu0 %v287
        %328 = vmatpush1.msra.mxu0 %v286
        %329 = vmatprep.subr.mxu0 %v285
        %330 = vmatpush1.msra.mxu0 %v284
        %331 = vmatprep.subr.mxu0 %v283
        %332 = vmatpush1.msra.mxu0 %v282
        %333 = vmatprep.subr.mxu0 %v281
        %334 = vmatpush1.msra.mxu0 %v280
        %335 = vmatprep.subr.mxu0 %v279
        %336 = vmatpush1.msra.mxu0 %v278
        %337 = vmatprep.subr.mxu0 %v277
        %338 = vmatpush1.msra.mxu0 %v276
        %339 = vmatprep.subr.mxu0 0.0
        %340 = vmatpush2.msra.mxu0 0.0
        %341 = vmatprep.subr.mxu0 0.0
        %342 = vmatpush2.msra.mxu0 0.0
        %343 = vmatprep.subr.mxu0 0.0
        %344 = vmatpush2.msra.mxu0 0.0
        %345 = vmatprep.subr.mxu0 0.0
        %346 = vmatpush2.msra.mxu0 0.0
        %347 = vmatprep.subr.mxu0 0.0
        %348 = vmatpush2.msra.mxu0 0.0
        %349 = vmatprep.subr.mxu0 0.0
        %350 = vmatpush2.msra.mxu0 0.0
        %351 = vmatprep.subr.mxu0 0.0
        %352 = vmatpush2.msra.mxu0 0.0
        %353 = vmatprep.subr.mxu0 0.0
        %354 = vmatpush2.msra.mxu0 0.0
        %355 = vmatprep.subr.mxu0 0.0
        %356 = vmatpush2.msra.mxu0 0.0
        %357 = vmatprep.subr.mxu0 0.0
        %358 = vmatpush2.msra.mxu0 0.0
        %359 = vmatprep.subr.mxu0 0.0
        %360 = vmatpush2.msra.mxu0 0.0
        %361 = vmatprep.subr.mxu0 0.0
        %362 = vmatpush2.msra.mxu0 0.0
        %363 = vmatprep.subr.mxu0 0.0
        %364 = vmatpush2.msra.mxu0 0.0
        %365 = vmatprep.subr.mxu0 0.0
        %366 = vmatpush2.msra.mxu0 0.0
        %367 = vmatprep.subr.mxu0 0.0
        %368 = vmatpush2.msra.mxu0 0.0
        %369 = vmatprep.subr.mxu0 0.0
        %370 = vmatpush2.msra.mxu0 0.0
        %371 = vmatprep.mubr.f32.mxu0 0.0
        %372 = vmatmul.mubr.f32.gmra.mxu0 %v302
        %v373 = vpop.f32.mrf.mxu0
        %v374 = vadd.f32 %v293, %v373
        %v375 = vpop.f32.mrf.mxu0
        %v376 = vadd.f32 %v297, %v375
        %377 = vmatprep.mubr.f32.mxu0 0.0
        %378 = vmatmul.mubr.f32.gmra.mxu0 %v305
        %v379 = vpop.f32.mrf.mxu0
        %v380 = vadd.f32 %v293, %v379
        %v381 = vpop.f32.mrf.mxu0
        %v382 = vadd.f32 %v297, %v381
        %383 = vdwg.mxu0
        %384 = vst [vmem:[#allocation2] sm:$0xff] %v374
        %vm385 = vcmask 130048
        %386 = vst.msk [vmem:[#allocation2 + $0x8] sm:$0xff] %vm385, %v376
        %387 = vst [vmem:[#allocation2 + $0x10] sm:$0xff] %v380
        %388 = vst.msk [vmem:[#allocation2 + $0x18] sm:$0xff] %vm385, %v382
        %v389 = vld [vmem:[#allocation2] sm:$0xff]
        %v390 = vld [vmem:[#allocation2 + $0x10] sm:$0xff]
        %v391 = vmul.f32 %v389, 0.28867513
        %v392 = vmul.f32 %v390, 0.28867513
        %395 = vrot.lane.b32.xlu0 %v391, 124
        %v396 = vpop.permute.xlu0 %395
        %397 = vrot.lane.b32.xlu0 %v392, 124
        %v398 = vpop.permute.xlu0 %397
        %401 = vrot.lane.b32.xlu0 %v389, 80
        %v402 = vpop.permute.xlu0 %401
        %403 = vrot.lane.b32.xlu0 %v390, 80
        %v404 = vpop.permute.xlu0 %403
        %vm405 = vcmask 31744
        %v406 = vsel %vm405, %v396, 0
        %v408 = vsel %vm405, %v398, 0
        %v410 = vsel %vm405, %v402, 0
        %v412 = vsel %vm405, %v404, 0
        %414 = vmatprep.subr.mxu0 0.0
        %415 = vmatpush1.xpose.msra.mxu0 0.0
        %416 = vmatprep.subr.mxu0 0.0
        %417 = vmatpush1.xpose.msra.mxu0 0.0
        %418 = vmatprep.subr.mxu0 0.0
        %419 = vmatpush1.xpose.msra.mxu0 0.0
        %420 = vmatprep.subr.mxu0 0.0
        %421 = vmatpush1.xpose.msra.mxu0 0.0
        %422 = vmatprep.subr.mxu0 0.0
        %423 = vmatpush1.xpose.msra.mxu0 0.0
        %424 = vmatprep.subr.mxu0 0.0
        %425 = vmatpush1.xpose.msra.mxu0 0.0
        %426 = vmatprep.subr.mxu0 0.0
        %427 = vmatpush1.xpose.msra.mxu0 0.0
        %428 = vmatprep.subr.mxu0 0.0
        %429 = vmatpush1.xpose.msra.mxu0 0.0
        %430 = vmatprep.subr.mxu0 0.0
        %431 = vmatpush1.xpose.msra.mxu0 0.0
        %432 = vmatprep.subr.mxu0 0.0
        %433 = vmatpush1.xpose.msra.mxu0 0.0
        %434 = vmatprep.subr.mxu0 0.0
        %435 = vmatpush1.xpose.msra.mxu0 0.0
        %436 = vmatprep.subr.mxu0 0.0
        %437 = vmatpush1.xpose.msra.mxu0 0.0
        %438 = vmatprep.subr.mxu0 0.0
        %439 = vmatpush1.xpose.msra.mxu0 0.0
        %440 = vmatprep.subr.mxu0 0.0
        %441 = vmatpush1.xpose.msra.mxu0 0.0
        %442 = vmatprep.subr.mxu0 0.0
        %443 = vmatpush1.xpose.msra.mxu0 %v412
        %444 = vmatprep.subr.mxu0 0.0
        %445 = vmatpush1.xpose.msra.mxu0 %v410
        %446 = vmatprep.subr.mxu0 0.0
        %447 = vmatpush2.xpose.msra.mxu0 0.0
        %448 = vmatprep.subr.mxu0 0.0
        %449 = vmatpush2.xpose.msra.mxu0 0.0
        %450 = vmatprep.subr.mxu0 0.0
        %451 = vmatpush2.xpose.msra.mxu0 0.0
        %452 = vmatprep.subr.mxu0 0.0
        %453 = vmatpush2.xpose.msra.mxu0 0.0
        %454 = vmatprep.subr.mxu0 0.0
        %455 = vmatpush2.xpose.msra.mxu0 0.0
        %456 = vmatprep.subr.mxu0 0.0
        %457 = vmatpush2.xpose.msra.mxu0 0.0
        %458 = vmatprep.subr.mxu0 0.0
        %459 = vmatpush2.xpose.msra.mxu0 0.0
        %460 = vmatprep.subr.mxu0 0.0
        %461 = vmatpush2.xpose.msra.mxu0 0.0
        %462 = vmatprep.subr.mxu0 0.0
        %463 = vmatpush2.xpose.msra.mxu0 0.0
        %464 = vmatprep.subr.mxu0 0.0
        %465 = vmatpush2.xpose.msra.mxu0 0.0
        %466 = vmatprep.subr.mxu0 0.0
        %467 = vmatpush2.xpose.msra.mxu0 0.0
        %468 = vmatprep.subr.mxu0 0.0
        %469 = vmatpush2.xpose.msra.mxu0 0.0
        %470 = vmatprep.subr.mxu0 0.0
        %471 = vmatpush2.xpose.msra.mxu0 0.0
        %472 = vmatprep.subr.mxu0 0.0
        %473 = vmatpush2.xpose.msra.mxu0 0.0
        %474 = vmatprep.subr.mxu0 0.0
        %475 = vmatpush2.xpose.msra.mxu0 0.0
        %476 = vmatprep.subr.mxu0 0.0
        %477 = vmatpush2.xpose.msra.mxu0 0.0
        %478 = vmatprep.mubr.f32.mxu0 0.0
        %479 = vmatmul.mubr.f32.gmra.mxu0 %v406
        %v480 = vpop.f32.mrf.mxu0
        %v481 = vadd.f32 0.0, %v480
        %v482 = vpop.f32.mrf.mxu0
        %483 = vmatprep.mubr.f32.mxu0 0.0
        %484 = vmatmul.mubr.f32.gmra.mxu0 %v408
        %v485 = vpop.f32.mrf.mxu0
        %v486 = vadd.f32 0.0, %v485
        %v487 = vpop.f32.mrf.mxu0
        %488 = vdwg.mxu0
        %489 = vrot.lane.b32.xlu0 %v389, 76
        %v490 = vpop.permute.xlu0 %489
        %491 = vrot.lane.b32.xlu0 %v390, 76
        %v492 = vpop.permute.xlu0 %491
        %v493 = vsel %vm405, %v490, 0
        %v495 = vsel %vm405, %v492, 0
        %497 = vmatprep.subr.mxu0 0.0
        %498 = vmatpush1.xpose.msra.mxu0 0.0
        %499 = vmatprep.subr.mxu0 0.0
        %500 = vmatpush1.xpose.msra.mxu0 0.0
        %501 = vmatprep.subr.mxu0 0.0
        %502 = vmatpush1.xpose.msra.mxu0 0.0
        %503 = vmatprep.subr.mxu0 0.0
        %504 = vmatpush1.xpose.msra.mxu0 0.0
        %505 = vmatprep.subr.mxu0 0.0
        %506 = vmatpush1.xpose.msra.mxu0 0.0
        %507 = vmatprep.subr.mxu0 0.0
        %508 = vmatpush1.xpose.msra.mxu0 0.0
        %509 = vmatprep.subr.mxu0 0.0
        %510 = vmatpush1.xpose.msra.mxu0 0.0
        %511 = vmatprep.subr.mxu0 0.0
        %512 = vmatpush1.xpose.msra.mxu0 0.0
        %513 = vmatprep.subr.mxu0 0.0
        %514 = vmatpush1.xpose.msra.mxu0 0.0
        %515 = vmatprep.subr.mxu0 0.0
        %516 = vmatpush1.xpose.msra.mxu0 0.0
        %517 = vmatprep.subr.mxu0 0.0
        %518 = vmatpush1.xpose.msra.mxu0 0.0
        %519 = vmatprep.subr.mxu0 0.0
        %520 = vmatpush1.xpose.msra.mxu0 0.0
        %521 = vmatprep.subr.mxu0 0.0
        %522 = vmatpush1.xpose.msra.mxu0 0.0
        %523 = vmatprep.subr.mxu0 0.0
        %524 = vmatpush1.xpose.msra.mxu0 0.0
        %525 = vmatprep.subr.mxu0 0.0
        %526 = vmatpush1.xpose.msra.mxu0 %v495
        %527 = vmatprep.subr.mxu0 0.0
        %528 = vmatpush1.xpose.msra.mxu0 %v493
        %529 = vmatprep.subr.mxu0 0.0
        %530 = vmatpush2.xpose.msra.mxu0 0.0
        %531 = vmatprep.subr.mxu0 0.0
        %532 = vmatpush2.xpose.msra.mxu0 0.0
        %533 = vmatprep.subr.mxu0 0.0
        %534 = vmatpush2.xpose.msra.mxu0 0.0
        %535 = vmatprep.subr.mxu0 0.0
        %536 = vmatpush2.xpose.msra.mxu0 0.0
        %537 = vmatprep.subr.mxu0 0.0
        %538 = vmatpush2.xpose.msra.mxu0 0.0
        %539 = vmatprep.subr.mxu0 0.0
        %540 = vmatpush2.xpose.msra.mxu0 0.0
        %541 = vmatprep.subr.mxu0 0.0
        %542 = vmatpush2.xpose.msra.mxu0 0.0
        %543 = vmatprep.subr.mxu0 0.0
        %544 = vmatpush2.xpose.msra.mxu0 0.0
        %545 = vmatprep.subr.mxu0 0.0
        %546 = vmatpush2.xpose.msra.mxu0 0.0
        %547 = vmatprep.subr.mxu0 0.0
        %548 = vmatpush2.xpose.msra.mxu0 0.0
        %549 = vmatprep.subr.mxu0 0.0
        %550 = vmatpush2.xpose.msra.mxu0 0.0
        %551 = vmatprep.subr.mxu0 0.0
        %552 = vmatpush2.xpose.msra.mxu0 0.0
        %553 = vmatprep.subr.mxu0 0.0
        %554 = vmatpush2.xpose.msra.mxu0 0.0
        %555 = vmatprep.subr.mxu0 0.0
        %556 = vmatpush2.xpose.msra.mxu0 0.0
        %557 = vmatprep.subr.mxu0 0.0
        %558 = vmatpush2.xpose.msra.mxu0 0.0
        %559 = vmatprep.subr.mxu0 0.0
        %560 = vmatpush2.xpose.msra.mxu0 0.0
        %561 = vmatprep.mubr.f32.mxu0 0.0
        %562 = vmatmul.mubr.f32.gmra.mxu0 %v406
        %v563 = vpop.f32.mrf.mxu0
        %v564 = vadd.f32 0.0, %v563
        %v565 = vpop.f32.mrf.mxu0
        %566 = vmatprep.mubr.f32.mxu0 0.0
        %567 = vmatmul.mubr.f32.gmra.mxu0 %v408
        %v568 = vpop.f32.mrf.mxu0
        %v569 = vadd.f32 0.0, %v568
        %v570 = vpop.f32.mrf.mxu0
        %571 = vdwg.mxu0
        %v572 = vsel %vm385, %v481, -inf
        %573 = vmax.xlane.f32.xlu0 %v572
        %v574 = vpop.xlane.xlu0 %573
        %v575 = vsel %vm385, %v486, -inf
        %576 = vmax.xlane.f32.xlu0 %v575
        %v577 = vpop.xlane.xlu0 %576
        %v578 = vsel %vm385, %v564, -inf
        %579 = vmax.xlane.f32.xlu0 %v578
        %v580 = vpop.xlane.xlu0 %579
        %v581 = vsel %vm385, %v569, -inf
        %582 = vmax.xlane.f32.xlu0 %v581
        %v583 = vpop.xlane.xlu0 %582
        %v584 = vmax.f32 %v574, %v580
        %v585 = vmax.f32 %v577, %v583
        %v586 = vsub.f32 %v481, %v584
        %v587 = vsub.f32 %v486, %v585
        %v588 = vmul.f32 %v586, 1.442695
        %v589 = vpow.pop %v588
        %v590 = vmul.f32 %v587, 1.442695
        %v591 = vpow.pop %v590
        %v592 = vsub.f32 %v564, %v584
        %v593 = vsub.f32 %v569, %v585
        %v594 = vmul.f32 %v592, 1.442695
        %v595 = vpow.pop %v594
        %v596 = vmul.f32 %v593, 1.442695
        %v597 = vpow.pop %v596
        %v598 = vsel %vm385, %v589, 0.0
        %599 = vadd.xlane.f32.xlu0 %v598
        %v600 = vpop.xlane.xlu0 %599
        %v601 = vsel %vm385, %v591, 0.0
        %602 = vadd.xlane.f32.xlu0 %v601
        %v603 = vpop.xlane.xlu0 %602
        %v604 = vsel %vm385, %v595, 0.0
        %605 = vadd.xlane.f32.xlu0 %v604
        %v606 = vpop.xlane.xlu0 %605
        %v607 = vsel %vm385, %v597, 0.0
        %608 = vadd.xlane.f32.xlu0 %v607
        %v609 = vpop.xlane.xlu0 %608
        %v610 = vadd.f32 %v600, %v606
        %v611 = vadd.f32 %v603, %v609
        %v612 = vrcp.pop %v610
        %v613 = vrcp.pop %v611
        %v614 = vmul.f32 %v610, %v612
        %v615 = vmul.f32 %v611, %v613
        %v616 = vsub.f32 2.0, %v614
        %v617 = vsub.f32 2.0, %v615
        %v618 = vmul.f32 %v612, %v616
        %v619 = vmul.f32 %v613, %v617
        %620 = vrot.lane.b32.xlu0 %v389, 28
        %v621 = vpop.permute.xlu0 %620
        %622 = vrot.lane.b32.xlu0 %v390, 28
        %v623 = vpop.permute.xlu0 %622
        %v627 = vsel %vm385, %v595, 0
        %v630 = vsel %vm385, %v597, 0
        %632 = vmatprep.subr.mxu0 0.0
        %633 = vmatpush1.msra.mxu0 0.0
        %634 = vmatprep.subr.mxu0 0.0
        %635 = vmatpush1.msra.mxu0 0.0
        %636 = vmatprep.subr.mxu0 0.0
        %637 = vmatpush1.msra.mxu0 0.0
        %638 = vmatprep.subr.mxu0 0.0
        %639 = vmatpush1.msra.mxu0 0.0
        %640 = vmatprep.subr.mxu0 0.0
        %641 = vmatpush1.msra.mxu0 0.0
        %642 = vmatprep.subr.mxu0 0.0
        %643 = vmatpush1.msra.mxu0 0.0
        %644 = vmatprep.subr.mxu0 0.0
        %645 = vmatpush1.msra.mxu0 0.0
        %646 = vmatprep.subr.mxu0 0.0
        %647 = vmatpush1.msra.mxu0 0.0
        %648 = vmatprep.subr.mxu0 0.0
        %649 = vmatpush1.msra.mxu0 0.0
        %650 = vmatprep.subr.mxu0 0.0
        %651 = vmatpush1.msra.mxu0 0.0
        %652 = vmatprep.subr.mxu0 0.0
        %653 = vmatpush1.msra.mxu0 0.0
        %654 = vmatprep.subr.mxu0 0.0
        %655 = vmatpush1.msra.mxu0 0.0
        %656 = vmatprep.subr.mxu0 0.0
        %657 = vmatpush1.msra.mxu0 0.0
        %658 = vmatprep.subr.mxu0 0.0
        %659 = vmatpush1.msra.mxu0 0.0
        %660 = vmatprep.subr.mxu0 0.0
        %661 = vmatpush1.msra.mxu0 %v623
        %662 = vmatprep.subr.mxu0 0.0
        %663 = vmatpush1.msra.mxu0 %v621
        %664 = vmatprep.subr.mxu0 0.0
        %665 = vmatpush2.msra.mxu0 0.0
        %666 = vmatprep.subr.mxu0 0.0
        %667 = vmatpush2.msra.mxu0 0.0
        %668 = vmatprep.subr.mxu0 0.0
        %669 = vmatpush2.msra.mxu0 0.0
        %670 = vmatprep.subr.mxu0 0.0
        %671 = vmatpush2.msra.mxu0 0.0
        %672 = vmatprep.subr.mxu0 0.0
        %673 = vmatpush2.msra.mxu0 0.0
        %674 = vmatprep.subr.mxu0 0.0
        %675 = vmatpush2.msra.mxu0 0.0
        %676 = vmatprep.subr.mxu0 0.0
        %677 = vmatpush2.msra.mxu0 0.0
        %678 = vmatprep.subr.mxu0 0.0
        %679 = vmatpush2.msra.mxu0 0.0
        %680 = vmatprep.subr.mxu0 0.0
        %681 = vmatpush2.msra.mxu0 0.0
        %682 = vmatprep.subr.mxu0 0.0
        %683 = vmatpush2.msra.mxu0 0.0
        %684 = vmatprep.subr.mxu0 0.0
        %685 = vmatpush2.msra.mxu0 0.0
        %686 = vmatprep.subr.mxu0 0.0
        %687 = vmatpush2.msra.mxu0 0.0
        %688 = vmatprep.subr.mxu0 0.0
        %689 = vmatpush2.msra.mxu0 0.0
        %690 = vmatprep.subr.mxu0 0.0
        %691 = vmatpush2.msra.mxu0 0.0
        %692 = vmatprep.subr.mxu0 0.0
        %693 = vmatpush2.msra.mxu0 0.0
        %694 = vmatprep.subr.mxu0 0.0
        %695 = vmatpush2.msra.mxu0 0.0
        %696 = vmatprep.mubr.f32.mxu0 0.0
        %697 = vmatmul.mubr.f32.gmra.mxu0 %v627
        %v698 = vpop.f32.mrf.mxu0
        %v699 = vadd.f32 0.0, %v698
        %v700 = vpop.f32.mrf.mxu0
        %701 = vmatprep.mubr.f32.mxu0 0.0
        %702 = vmatmul.mubr.f32.gmra.mxu0 %v630
        %v703 = vpop.f32.mrf.mxu0
        %v704 = vadd.f32 0.0, %v703
        %v705 = vpop.f32.mrf.mxu0
        %706 = vdwg.mxu0
        %707 = vrot.lane.b32.xlu0 %v389, 32
        %v708 = vpop.permute.xlu0 %707
        %709 = vrot.lane.b32.xlu0 %v390, 32
        %v710 = vpop.permute.xlu0 %709
        %v714 = vsel %vm385, %v589, 0
        %v717 = vsel %vm385, %v591, 0
        %719 = vmatprep.subr.mxu0 0.0
        %720 = vmatpush1.msra.mxu0 0.0
        %721 = vmatprep.subr.mxu0 0.0
        %722 = vmatpush1.msra.mxu0 0.0
        %723 = vmatprep.subr.mxu0 0.0
        %724 = vmatpush1.msra.mxu0 0.0
        %725 = vmatprep.subr.mxu0 0.0
        %726 = vmatpush1.msra.mxu0 0.0
        %727 = vmatprep.subr.mxu0 0.0
        %728 = vmatpush1.msra.mxu0 0.0
        %729 = vmatprep.subr.mxu0 0.0
        %730 = vmatpush1.msra.mxu0 0.0
        %731 = vmatprep.subr.mxu0 0.0
        %732 = vmatpush1.msra.mxu0 0.0
        %733 = vmatprep.subr.mxu0 0.0
        %734 = vmatpush1.msra.mxu0 0.0
        %735 = vmatprep.subr.mxu0 0.0
        %736 = vmatpush1.msra.mxu0 0.0
        %737 = vmatprep.subr.mxu0 0.0
        %738 = vmatpush1.msra.mxu0 0.0
        %739 = vmatprep.subr.mxu0 0.0
        %740 = vmatpush1.msra.mxu0 0.0
        %741 = vmatprep.subr.mxu0 0.0
        %742 = vmatpush1.msra.mxu0 0.0
        %743 = vmatprep.subr.mxu0 0.0
        %744 = vmatpush1.msra.mxu0 0.0
        %745 = vmatprep.subr.mxu0 0.0
        %746 = vmatpush1.msra.mxu0 0.0
        %747 = vmatprep.subr.mxu0 0.0
        %748 = vmatpush1.msra.mxu0 %v710
        %749 = vmatprep.subr.mxu0 0.0
        %750 = vmatpush1.msra.mxu0 %v708
        %751 = vmatprep.subr.mxu0 0.0
        %752 = vmatpush2.msra.mxu0 0.0
        %753 = vmatprep.subr.mxu0 0.0
        %754 = vmatpush2.msra.mxu0 0.0
        %755 = vmatprep.subr.mxu0 0.0
        %756 = vmatpush2.msra.mxu0 0.0
        %757 = vmatprep.subr.mxu0 0.0
        %758 = vmatpush2.msra.mxu0 0.0
        %759 = vmatprep.subr.mxu0 0.0
        %760 = vmatpush2.msra.mxu0 0.0
        %761 = vmatprep.subr.mxu0 0.0
        %762 = vmatpush2.msra.mxu0 0.0
        %763 = vmatprep.subr.mxu0 0.0
        %764 = vmatpush2.msra.mxu0 0.0
        %765 = vmatprep.subr.mxu0 0.0
        %766 = vmatpush2.msra.mxu0 0.0
        %767 = vmatprep.subr.mxu0 0.0
        %768 = vmatpush2.msra.mxu0 0.0
        %769 = vmatprep.subr.mxu0 0.0
        %770 = vmatpush2.msra.mxu0 0.0
        %771 = vmatprep.subr.mxu0 0.0
        %772 = vmatpush2.msra.mxu0 0.0
        %773 = vmatprep.subr.mxu0 0.0
        %774 = vmatpush2.msra.mxu0 0.0
        %775 = vmatprep.subr.mxu0 0.0
        %776 = vmatpush2.msra.mxu0 0.0
        %777 = vmatprep.subr.mxu0 0.0
        %778 = vmatpush2.msra.mxu0 0.0
        %779 = vmatprep.subr.mxu0 0.0
        %780 = vmatpush2.msra.mxu0 0.0
        %781 = vmatprep.subr.mxu0 0.0
        %782 = vmatpush2.msra.mxu0 0.0
        %783 = vmatprep.mubr.f32.mxu0 0.0
        %784 = vmatmul.mubr.f32.gmra.mxu0 %v714
        %v785 = vpop.f32.mrf.mxu0
        %v786 = vadd.f32 %v699, %v785
        %v787 = vpop.f32.mrf.mxu0
        %788 = vmatprep.mubr.f32.mxu0 0.0
        %789 = vmatmul.mubr.f32.gmra.mxu0 %v717
        %v790 = vpop.f32.mrf.mxu0
        %v791 = vadd.f32 %v704, %v790
        %v792 = vpop.f32.mrf.mxu0
        %793 = vdwg.mxu0
        %v794 = vmul.f32 %v786, %v618
        %v795 = vmul.f32 %v791, %v619
        %796 = vst.msk [vmem:[#allocation3] sm:$0xff] %vm405, %v794
        %797 = vst.msk [vmem:[#allocation3 + $0x8] sm:$0xff] %vm405, %v795
        %798 = vrot.lane.b32.xlu0 %v391, 120
        %v799 = vpop.permute.xlu0 %798
        %800 = vrot.lane.b32.xlu0 %v392, 120
        %v801 = vpop.permute.xlu0 %800
        %v802 = vsel %vm405, %v799, 0
        %v804 = vsel %vm405, %v801, 0
        %806 = vmatprep.subr.mxu0 0.0
        %807 = vmatpush1.xpose.msra.mxu0 0.0
        %808 = vmatprep.subr.mxu0 0.0
        %809 = vmatpush1.xpose.msra.mxu0 0.0
        %810 = vmatprep.subr.mxu0 0.0
        %811 = vmatpush1.xpose.msra.mxu0 0.0
        %812 = vmatprep.subr.mxu0 0.0
        %813 = vmatpush1.xpose.msra.mxu0 0.0
        %814 = vmatprep.subr.mxu0 0.0
        %815 = vmatpush1.xpose.msra.mxu0 0.0
        %816 = vmatprep.subr.mxu0 0.0
        %817 = vmatpush1.xpose.msra.mxu0 0.0
        %818 = vmatprep.subr.mxu0 0.0
        %819 = vmatpush1.xpose.msra.mxu0 0.0
        %820 = vmatprep.subr.mxu0 0.0
        %821 = vmatpush1.xpose.msra.mxu0 0.0
        %822 = vmatprep.subr.mxu0 0.0
        %823 = vmatpush1.xpose.msra.mxu0 0.0
        %824 = vmatprep.subr.mxu0 0.0
        %825 = vmatpush1.xpose.msra.mxu0 0.0
        %826 = vmatprep.subr.mxu0 0.0
        %827 = vmatpush1.xpose.msra.mxu0 0.0
        %828 = vmatprep.subr.mxu0 0.0
        %829 = vmatpush1.xpose.msra.mxu0 0.0
        %830 = vmatprep.subr.mxu0 0.0
        %831 = vmatpush1.xpose.msra.mxu0 0.0
        %832 = vmatprep.subr.mxu0 0.0
        %833 = vmatpush1.xpose.msra.mxu0 0.0
        %834 = vmatprep.subr.mxu0 0.0
        %835 = vmatpush1.xpose.msra.mxu0 %v412
        %836 = vmatprep.subr.mxu0 0.0
        %837 = vmatpush1.xpose.msra.mxu0 %v410
        %838 = vmatprep.subr.mxu0 0.0
        %839 = vmatpush2.xpose.msra.mxu0 0.0
        %840 = vmatprep.subr.mxu0 0.0
        %841 = vmatpush2.xpose.msra.mxu0 0.0
        %842 = vmatprep.subr.mxu0 0.0
        %843 = vmatpush2.xpose.msra.mxu0 0.0
        %844 = vmatprep.subr.mxu0 0.0
        %845 = vmatpush2.xpose.msra.mxu0 0.0
        %846 = vmatprep.subr.mxu0 0.0
        %847 = vmatpush2.xpose.msra.mxu0 0.0
        %848 = vmatprep.subr.mxu0 0.0
        %849 = vmatpush2.xpose.msra.mxu0 0.0
        %850 = vmatprep.subr.mxu0 0.0
        %851 = vmatpush2.xpose.msra.mxu0 0.0
        %852 = vmatprep.subr.mxu0 0.0
        %853 = vmatpush2.xpose.msra.mxu0 0.0
        %854 = vmatprep.subr.mxu0 0.0
        %855 = vmatpush2.xpose.msra.mxu0 0.0
        %856 = vmatprep.subr.mxu0 0.0
        %857 = vmatpush2.xpose.msra.mxu0 0.0
        %858 = vmatprep.subr.mxu0 0.0
        %859 = vmatpush2.xpose.msra.mxu0 0.0
        %860 = vmatprep.subr.mxu0 0.0
        %861 = vmatpush2.xpose.msra.mxu0 0.0
        %862 = vmatprep.subr.mxu0 0.0
        %863 = vmatpush2.xpose.msra.mxu0 0.0
        %864 = vmatprep.subr.mxu0 0.0
        %865 = vmatpush2.xpose.msra.mxu0 0.0
        %866 = vmatprep.subr.mxu0 0.0
        %867 = vmatpush2.xpose.msra.mxu0 0.0
        %868 = vmatprep.subr.mxu0 0.0
        %869 = vmatpush2.xpose.msra.mxu0 0.0
        %870 = vmatprep.mubr.f32.mxu0 0.0
        %871 = vmatmul.mubr.f32.gmra.mxu0 %v802
        %v872 = vpop.f32.mrf.mxu0
        %v873 = vadd.f32 0.0, %v872
        %v874 = vpop.f32.mrf.mxu0
        %875 = vmatprep.mubr.f32.mxu0 0.0
        %876 = vmatmul.mubr.f32.gmra.mxu0 %v804
        %v877 = vpop.f32.mrf.mxu0
        %v878 = vadd.f32 0.0, %v877
        %v879 = vpop.f32.mrf.mxu0
        %880 = vdwg.mxu0
        %881 = vmatprep.subr.mxu0 0.0
        %882 = vmatpush1.xpose.msra.mxu0 0.0
        %883 = vmatprep.subr.mxu0 0.0
        %884 = vmatpush1.xpose.msra.mxu0 0.0
        %885 = vmatprep.subr.mxu0 0.0
        %886 = vmatpush1.xpose.msra.mxu0 0.0
        %887 = vmatprep.subr.mxu0 0.0
        %888 = vmatpush1.xpose.msra.mxu0 0.0
        %889 = vmatprep.subr.mxu0 0.0
        %890 = vmatpush1.xpose.msra.mxu0 0.0
        %891 = vmatprep.subr.mxu0 0.0
        %892 = vmatpush1.xpose.msra.mxu0 0.0
        %893 = vmatprep.subr.mxu0 0.0
        %894 = vmatpush1.xpose.msra.mxu0 0.0
        %895 = vmatprep.subr.mxu0 0.0
        %896 = vmatpush1.xpose.msra.mxu0 0.0
        %897 = vmatprep.subr.mxu0 0.0
        %898 = vmatpush1.xpose.msra.mxu0 0.0
        %899 = vmatprep.subr.mxu0 0.0
        %900 = vmatpush1.xpose.msra.mxu0 0.0
        %901 = vmatprep.subr.mxu0 0.0
        %902 = vmatpush1.xpose.msra.mxu0 0.0
        %903 = vmatprep.subr.mxu0 0.0
        %904 = vmatpush1.xpose.msra.mxu0 0.0
        %905 = vmatprep.subr.mxu0 0.0
        %906 = vmatpush1.xpose.msra.mxu0 0.0
        %907 = vmatprep.subr.mxu0 0.0
        %908 = vmatpush1.xpose.msra.mxu0 0.0
        %909 = vmatprep.subr.mxu0 0.0
        %910 = vmatpush1.xpose.msra.mxu0 %v495
        %911 = vmatprep.subr.mxu0 0.0
        %912 = vmatpush1.xpose.msra.mxu0 %v493
        %913 = vmatprep.subr.mxu0 0.0
        %914 = vmatpush2.xpose.msra.mxu0 0.0
        %915 = vmatprep.subr.mxu0 0.0
        %916 = vmatpush2.xpose.msra.mxu0 0.0
        %917 = vmatprep.subr.mxu0 0.0
        %918 = vmatpush2.xpose.msra.mxu0 0.0
        %919 = vmatprep.subr.mxu0 0.0
        %920 = vmatpush2.xpose.msra.mxu0 0.0
        %921 = vmatprep.subr.mxu0 0.0
        %922 = vmatpush2.xpose.msra.mxu0 0.0
        %923 = vmatprep.subr.mxu0 0.0
        %924 = vmatpush2.xpose.msra.mxu0 0.0
        %925 = vmatprep.subr.mxu0 0.0
        %926 = vmatpush2.xpose.msra.mxu0 0.0
        %927 = vmatprep.subr.mxu0 0.0
        %928 = vmatpush2.xpose.msra.mxu0 0.0
        %929 = vmatprep.subr.mxu0 0.0
        %930 = vmatpush2.xpose.msra.mxu0 0.0
        %931 = vmatprep.subr.mxu0 0.0
        %932 = vmatpush2.xpose.msra.mxu0 0.0
        %933 = vmatprep.subr.mxu0 0.0
        %934 = vmatpush2.xpose.msra.mxu0 0.0
        %935 = vmatprep.subr.mxu0 0.0
        %936 = vmatpush2.xpose.msra.mxu0 0.0
        %937 = vmatprep.subr.mxu0 0.0
        %938 = vmatpush2.xpose.msra.mxu0 0.0
        %939 = vmatprep.subr.mxu0 0.0
        %940 = vmatpush2.xpose.msra.mxu0 0.0
        %941 = vmatprep.subr.mxu0 0.0
        %942 = vmatpush2.xpose.msra.mxu0 0.0
        %943 = vmatprep.subr.mxu0 0.0
        %944 = vmatpush2.xpose.msra.mxu0 0.0
        %945 = vmatprep.mubr.f32.mxu0 0.0
        %946 = vmatmul.mubr.f32.gmra.mxu0 %v802
        %v947 = vpop.f32.mrf.mxu0
        %v948 = vadd.f32 0.0, %v947
        %v949 = vpop.f32.mrf.mxu0
        %950 = vmatprep.mubr.f32.mxu0 0.0
        %951 = vmatmul.mubr.f32.gmra.mxu0 %v804
        %v952 = vpop.f32.mrf.mxu0
        %v953 = vadd.f32 0.0, %v952
        %v954 = vpop.f32.mrf.mxu0
        %955 = vdwg.mxu0
        %956 = vrot.lane.b32.xlu0 %v389, 72
        %v957 = vpop.permute.xlu0 %956
        %958 = vrot.lane.b32.xlu0 %v390, 72
        %v959 = vpop.permute.xlu0 %958
        %v960 = vsel %vm405, %v957, 0
        %v962 = vsel %vm405, %v959, 0
        %964 = vmatprep.subr.mxu0 0.0
        %965 = vmatpush1.xpose.msra.mxu0 0.0
        %966 = vmatprep.subr.mxu0 0.0
        %967 = vmatpush1.xpose.msra.mxu0 0.0
        %968 = vmatprep.subr.mxu0 0.0
        %969 = vmatpush1.xpose.msra.mxu0 0.0
        %970 = vmatprep.subr.mxu0 0.0
        %971 = vmatpush1.xpose.msra.mxu0 0.0
        %972 = vmatprep.subr.mxu0 0.0
        %973 = vmatpush1.xpose.msra.mxu0 0.0
        %974 = vmatprep.subr.mxu0 0.0
        %975 = vmatpush1.xpose.msra.mxu0 0.0
        %976 = vmatprep.subr.mxu0 0.0
        %977 = vmatpush1.xpose.msra.mxu0 0.0
        %978 = vmatprep.subr.mxu0 0.0
        %979 = vmatpush1.xpose.msra.mxu0 0.0
        %980 = vmatprep.subr.mxu0 0.0
        %981 = vmatpush1.xpose.msra.mxu0 0.0
        %982 = vmatprep.subr.mxu0 0.0
        %983 = vmatpush1.xpose.msra.mxu0 0.0
        %984 = vmatprep.subr.mxu0 0.0
        %985 = vmatpush1.xpose.msra.mxu0 0.0
        %986 = vmatprep.subr.mxu0 0.0
        %987 = vmatpush1.xpose.msra.mxu0 0.0
        %988 = vmatprep.subr.mxu0 0.0
        %989 = vmatpush1.xpose.msra.mxu0 0.0
        %990 = vmatprep.subr.mxu0 0.0
        %991 = vmatpush1.xpose.msra.mxu0 0.0
        %992 = vmatprep.subr.mxu0 0.0
        %993 = vmatpush1.xpose.msra.mxu0 %v962
        %994 = vmatprep.subr.mxu0 0.0
        %995 = vmatpush1.xpose.msra.mxu0 %v960
        %996 = vmatprep.subr.mxu0 0.0
        %997 = vmatpush2.xpose.msra.mxu0 0.0
        %998 = vmatprep.subr.mxu0 0.0
        %999 = vmatpush2.xpose.msra.mxu0 0.0
        %1000 = vmatprep.subr.mxu0 0.0
        %1001 = vmatpush2.xpose.msra.mxu0 0.0
        %1002 = vmatprep.subr.mxu0 0.0
        %1003 = vmatpush2.xpose.msra.mxu0 0.0
        %1004 = vmatprep.subr.mxu0 0.0
        %1005 = vmatpush2.xpose.msra.mxu0 0.0
        %1006 = vmatprep.subr.mxu0 0.0
        %1007 = vmatpush2.xpose.msra.mxu0 0.0
        %1008 = vmatprep.subr.mxu0 0.0
        %1009 = vmatpush2.xpose.msra.mxu0 0.0
        %1010 = vmatprep.subr.mxu0 0.0
        %1011 = vmatpush2.xpose.msra.mxu0 0.0
        %1012 = vmatprep.subr.mxu0 0.0
        %1013 = vmatpush2.xpose.msra.mxu0 0.0
        %1014 = vmatprep.subr.mxu0 0.0
        %1015 = vmatpush2.xpose.msra.mxu0 0.0
        %1016 = vmatprep.subr.mxu0 0.0
        %1017 = vmatpush2.xpose.msra.mxu0 0.0
        %1018 = vmatprep.subr.mxu0 0.0
        %1019 = vmatpush2.xpose.msra.mxu0 0.0
        %1020 = vmatprep.subr.mxu0 0.0
        %1021 = vmatpush2.xpose.msra.mxu0 0.0
        %1022 = vmatprep.subr.mxu0 0.0
        %1023 = vmatpush2.xpose.msra.mxu0 0.0
        %1024 = vmatprep.subr.mxu0 0.0
        %1025 = vmatpush2.xpose.msra.mxu0 0.0
        %1026 = vmatprep.subr.mxu0 0.0
        %1027 = vmatpush2.xpose.msra.mxu0 0.0
        %1028 = vmatprep.mubr.f32.mxu0 0.0
        %1029 = vmatmul.mubr.f32.gmra.mxu0 %v802
        %v1030 = vpop.f32.mrf.mxu0
        %v1031 = vadd.f32 0.0, %v1030
        %v1032 = vpop.f32.mrf.mxu0
        %1033 = vmatprep.mubr.f32.mxu0 0.0
        %1034 = vmatmul.mubr.f32.gmra.mxu0 %v804
        %v1035 = vpop.f32.mrf.mxu0
        %v1036 = vadd.f32 0.0, %v1035
        %v1037 = vpop.f32.mrf.mxu0
        %1038 = vdwg.mxu0
        %v1039 = vsel %vm385, %v873, -inf
        %1040 = vmax.xlane.f32.xlu0 %v1039
        %v1041 = vpop.xlane.xlu0 %1040
        %v1042 = vsel %vm385, %v878, -inf
        %1043 = vmax.xlane.f32.xlu0 %v1042
        %v1044 = vpop.xlane.xlu0 %1043
        %v1045 = vsel %vm385, %v948, -inf
        %1046 = vmax.xlane.f32.xlu0 %v1045
        %v1047 = vpop.xlane.xlu0 %1046
        %v1048 = vsel %vm385, %v953, -inf
        %1049 = vmax.xlane.f32.xlu0 %v1048
        %v1050 = vpop.xlane.xlu0 %1049
        %v1051 = vmax.f32 %v1041, %v1047
        %v1052 = vmax.f32 %v1044, %v1050
        %v1053 = vsel %vm385, %v1031, -inf
        %1054 = vmax.xlane.f32.xlu0 %v1053
        %v1055 = vpop.xlane.xlu0 %1054
        %v1056 = vsel %vm385, %v1036, -inf
        %1057 = vmax.xlane.f32.xlu0 %v1056
        %v1058 = vpop.xlane.xlu0 %1057
        %v1059 = vmax.f32 %v1051, %v1055
        %v1060 = vmax.f32 %v1052, %v1058
        %v1061 = vsub.f32 %v873, %v1059
        %v1062 = vsub.f32 %v878, %v1060
        %v1063 = vmul.f32 %v1061, 1.442695
        %v1064 = vpow.pop %v1063
        %v1065 = vmul.f32 %v1062, 1.442695
        %v1066 = vpow.pop %v1065
        %v1067 = vsub.f32 %v948, %v1059
        %v1068 = vsub.f32 %v953, %v1060
        %v1069 = vmul.f32 %v1067, 1.442695
        %v1070 = vpow.pop %v1069
        %v1071 = vmul.f32 %v1068, 1.442695
        %v1072 = vpow.pop %v1071
        %v1073 = vsub.f32 %v1031, %v1059
        %v1074 = vsub.f32 %v1036, %v1060
        %v1075 = vmul.f32 %v1073, 1.442695
        %v1076 = vpow.pop %v1075
        %v1077 = vmul.f32 %v1074, 1.442695
        %v1078 = vpow.pop %v1077
        %v1079 = vsel %vm385, %v1076, 0.0
        %1080 = vadd.xlane.f32.xlu0 %v1079
        %v1081 = vpop.xlane.xlu0 %1080
        %v1082 = vsel %vm385, %v1078, 0.0
        %1083 = vadd.xlane.f32.xlu0 %v1082
        %v1084 = vpop.xlane.xlu0 %1083
        %1085 = vrot.lane.b32.xlu0 %v389, 24
        %v1086 = vpop.permute.xlu0 %1085
        %1087 = vrot.lane.b32.xlu0 %v390, 24
        %v1088 = vpop.permute.xlu0 %1087
        %v1092 = vsel %vm385, %v1076, 0
        %v1095 = vsel %vm385, %v1078, 0
        %1097 = vmatprep.subr.mxu0 0.0
        %1098 = vmatpush1.msra.mxu0 0.0
        %1099 = vmatprep.subr.mxu0 0.0
        %1100 = vmatpush1.msra.mxu0 0.0
        %1101 = vmatprep.subr.mxu0 0.0
        %1102 = vmatpush1.msra.mxu0 0.0
        %1103 = vmatprep.subr.mxu0 0.0
        %1104 = vmatpush1.msra.mxu0 0.0
        %1105 = vmatprep.subr.mxu0 0.0
        %1106 = vmatpush1.msra.mxu0 0.0
        %1107 = vmatprep.subr.mxu0 0.0
        %1108 = vmatpush1.msra.mxu0 0.0
        %1109 = vmatprep.subr.mxu0 0.0
        %1110 = vmatpush1.msra.mxu0 0.0
        %1111 = vmatprep.subr.mxu0 0.0
        %1112 = vmatpush1.msra.mxu0 0.0
        %1113 = vmatprep.subr.mxu0 0.0
        %1114 = vmatpush1.msra.mxu0 0.0
        %1115 = vmatprep.subr.mxu0 0.0
        %1116 = vmatpush1.msra.mxu0 0.0
        %1117 = vmatprep.subr.mxu0 0.0
        %1118 = vmatpush1.msra.mxu0 0.0
        %1119 = vmatprep.subr.mxu0 0.0
        %1120 = vmatpush1.msra.mxu0 0.0
        %1121 = vmatprep.subr.mxu0 0.0
        %1122 = vmatpush1.msra.mxu0 0.0
        %1123 = vmatprep.subr.mxu0 0.0
        %1124 = vmatpush1.msra.mxu0 0.0
        %1125 = vmatprep.subr.mxu0 0.0
        %1126 = vmatpush1.msra.mxu0 %v1088
        %1127 = vmatprep.subr.mxu0 0.0
        %1128 = vmatpush1.msra.mxu0 %v1086
        %1129 = vmatprep.subr.mxu0 0.0
        %1130 = vmatpush2.msra.mxu0 0.0
        %1131 = vmatprep.subr.mxu0 0.0
        %1132 = vmatpush2.msra.mxu0 0.0
        %1133 = vmatprep.subr.mxu0 0.0
        %1134 = vmatpush2.msra.mxu0 0.0
        %1135 = vmatprep.subr.mxu0 0.0
        %1136 = vmatpush2.msra.mxu0 0.0
        %1137 = vmatprep.subr.mxu0 0.0
        %1138 = vmatpush2.msra.mxu0 0.0
        %1139 = vmatprep.subr.mxu0 0.0
        %1140 = vmatpush2.msra.mxu0 0.0
        %1141 = vmatprep.subr.mxu0 0.0
        %1142 = vmatpush2.msra.mxu0 0.0
        %1143 = vmatprep.subr.mxu0 0.0
        %1144 = vmatpush2.msra.mxu0 0.0
        %1145 = vmatprep.subr.mxu0 0.0
        %1146 = vmatpush2.msra.mxu0 0.0
        %1147 = vmatprep.subr.mxu0 0.0
        %1148 = vmatpush2.msra.mxu0 0.0
        %1149 = vmatprep.subr.mxu0 0.0
        %1150 = vmatpush2.msra.mxu0 0.0
        %1151 = vmatprep.subr.mxu0 0.0
        %1152 = vmatpush2.msra.mxu0 0.0
        %1153 = vmatprep.subr.mxu0 0.0
        %1154 = vmatpush2.msra.mxu0 0.0
        %1155 = vmatprep.subr.mxu0 0.0
        %1156 = vmatpush2.msra.mxu0 0.0
        %1157 = vmatprep.subr.mxu0 0.0
        %1158 = vmatpush2.msra.mxu0 0.0
        %1159 = vmatprep.subr.mxu0 0.0
        %1160 = vmatpush2.msra.mxu0 0.0
        %1161 = vmatprep.mubr.f32.mxu0 0.0
        %1162 = vmatmul.mubr.f32.gmra.mxu0 %v1092
        %v1163 = vpop.f32.mrf.mxu0
        %v1164 = vadd.f32 0.0, %v1163
        %v1165 = vpop.f32.mrf.mxu0
        %1166 = vmatprep.mubr.f32.mxu0 0.0
        %1167 = vmatmul.mubr.f32.gmra.mxu0 %v1095
        %v1168 = vpop.f32.mrf.mxu0
        %v1169 = vadd.f32 0.0, %v1168
        %v1170 = vpop.f32.mrf.mxu0
        %1171 = vdwg.mxu0
        %v1172 = vsel %vm385, %v1064, 0.0
        %1173 = vadd.xlane.f32.xlu0 %v1172
        %v1174 = vpop.xlane.xlu0 %1173
        %v1175 = vsel %vm385, %v1066, 0.0
        %1176 = vadd.xlane.f32.xlu0 %v1175
        %v1177 = vpop.xlane.xlu0 %1176
        %v1178 = vadd.f32 %v1174, %v1081
        %v1179 = vadd.f32 %v1177, %v1084
        %v1180 = vrcp.pop %v1178
        %v1181 = vrcp.pop %v1179
        %v1182 = vmul.f32 %v1178, %v1180
        %v1183 = vmul.f32 %v1179, %v1181
        %v1184 = vsub.f32 2.0, %v1182
        %v1185 = vsub.f32 2.0, %v1183
        %v1186 = vmul.f32 %v1180, %v1184
        %v1187 = vmul.f32 %v1181, %v1185
        %v1188 = vsel %vm385, %v1070, 0.0
        %1189 = vadd.xlane.f32.xlu0 %v1188
        %v1190 = vpop.xlane.xlu0 %1189
        %v1191 = vsel %vm385, %v1072, 0.0
        %1192 = vadd.xlane.f32.xlu0 %v1191
        %v1193 = vpop.xlane.xlu0 %1192
        %v1194 = vadd.f32 %v1190, %v1081
        %v1195 = vadd.f32 %v1193, %v1084
        %v1196 = vrcp.pop %v1194
        %v1197 = vrcp.pop %v1195
        %v1198 = vmul.f32 %v1194, %v1196
        %v1199 = vmul.f32 %v1195, %v1197
        %v1200 = vsub.f32 2.0, %v1198
        %v1201 = vsub.f32 2.0, %v1199
        %v1202 = vmul.f32 %v1196, %v1200
        %v1203 = vmul.f32 %v1197, %v1201
        %v1205 = vsel %vm385, %v1064, 0
        %v1208 = vsel %vm385, %v1066, 0
        %1210 = vmatprep.subr.mxu0 0.0
        %1211 = vmatpush1.msra.mxu0 0.0
        %1212 = vmatprep.subr.mxu0 0.0
        %1213 = vmatpush1.msra.mxu0 0.0
        %1214 = vmatprep.subr.mxu0 0.0
        %1215 = vmatpush1.msra.mxu0 0.0
        %1216 = vmatprep.subr.mxu0 0.0
        %1217 = vmatpush1.msra.mxu0 0.0
        %1218 = vmatprep.subr.mxu0 0.0
        %1219 = vmatpush1.msra.mxu0 0.0
        %1220 = vmatprep.subr.mxu0 0.0
        %1221 = vmatpush1.msra.mxu0 0.0
        %1222 = vmatprep.subr.mxu0 0.0
        %1223 = vmatpush1.msra.mxu0 0.0
        %1224 = vmatprep.subr.mxu0 0.0
        %1225 = vmatpush1.msra.mxu0 0.0
        %1226 = vmatprep.subr.mxu0 0.0
        %1227 = vmatpush1.msra.mxu0 0.0
        %1228 = vmatprep.subr.mxu0 0.0
        %1229 = vmatpush1.msra.mxu0 0.0
        %1230 = vmatprep.subr.mxu0 0.0
        %1231 = vmatpush1.msra.mxu0 0.0
        %1232 = vmatprep.subr.mxu0 0.0
        %1233 = vmatpush1.msra.mxu0 0.0
        %1234 = vmatprep.subr.mxu0 0.0
        %1235 = vmatpush1.msra.mxu0 0.0
        %1236 = vmatprep.subr.mxu0 0.0
        %1237 = vmatpush1.msra.mxu0 0.0
        %1238 = vmatprep.subr.mxu0 0.0
        %1239 = vmatpush1.msra.mxu0 %v710
        %1240 = vmatprep.subr.mxu0 0.0
        %1241 = vmatpush1.msra.mxu0 %v708
        %1242 = vmatprep.subr.mxu0 0.0
        %1243 = vmatpush2.msra.mxu0 0.0
        %1244 = vmatprep.subr.mxu0 0.0
        %1245 = vmatpush2.msra.mxu0 0.0
        %1246 = vmatprep.subr.mxu0 0.0
        %1247 = vmatpush2.msra.mxu0 0.0
        %1248 = vmatprep.subr.mxu0 0.0
        %1249 = vmatpush2.msra.mxu0 0.0
        %1250 = vmatprep.subr.mxu0 0.0
        %1251 = vmatpush2.msra.mxu0 0.0
        %1252 = vmatprep.subr.mxu0 0.0
        %1253 = vmatpush2.msra.mxu0 0.0
        %1254 = vmatprep.subr.mxu0 0.0
        %1255 = vmatpush2.msra.mxu0 0.0
        %1256 = vmatprep.subr.mxu0 0.0
        %1257 = vmatpush2.msra.mxu0 0.0
        %1258 = vmatprep.subr.mxu0 0.0
        %1259 = vmatpush2.msra.mxu0 0.0
        %1260 = vmatprep.subr.mxu0 0.0
        %1261 = vmatpush2.msra.mxu0 0.0
        %1262 = vmatprep.subr.mxu0 0.0
        %1263 = vmatpush2.msra.mxu0 0.0
        %1264 = vmatprep.subr.mxu0 0.0
        %1265 = vmatpush2.msra.mxu0 0.0
        %1266 = vmatprep.subr.mxu0 0.0
        %1267 = vmatpush2.msra.mxu0 0.0
        %1268 = vmatprep.subr.mxu0 0.0
        %1269 = vmatpush2.msra.mxu0 0.0
        %1270 = vmatprep.subr.mxu0 0.0
        %1271 = vmatpush2.msra.mxu0 0.0
        %1272 = vmatprep.subr.mxu0 0.0
        %1273 = vmatpush2.msra.mxu0 0.0
        %1274 = vmatprep.mubr.f32.mxu0 0.0
        %1275 = vmatmul.mubr.f32.gmra.mxu0 %v1205
        %v1276 = vpop.f32.mrf.mxu0
        %v1277 = vadd.f32 %v1164, %v1276
        %v1278 = vpop.f32.mrf.mxu0
        %1279 = vmatprep.mubr.f32.mxu0 0.0
        %1280 = vmatmul.mubr.f32.gmra.mxu0 %v1208
        %v1281 = vpop.f32.mrf.mxu0
        %v1282 = vadd.f32 %v1169, %v1281
        %v1283 = vpop.f32.mrf.mxu0
        %1284 = vdwg.mxu0
        %v1285 = vmul.f32 %v1277, %v1186
        %v1286 = vmul.f32 %v1282, %v1187
        %v1288 = vsel %vm385, %v1070, 0
        %v1291 = vsel %vm385, %v1072, 0
        %1293 = vmatprep.subr.mxu0 0.0
        %1294 = vmatpush1.msra.mxu0 0.0
        %1295 = vmatprep.subr.mxu0 0.0
        %1296 = vmatpush1.msra.mxu0 0.0
        %1297 = vmatprep.subr.mxu0 0.0
        %1298 = vmatpush1.msra.mxu0 0.0
        %1299 = vmatprep.subr.mxu0 0.0
        %1300 = vmatpush1.msra.mxu0 0.0
        %1301 = vmatprep.subr.mxu0 0.0
        %1302 = vmatpush1.msra.mxu0 0.0
        %1303 = vmatprep.subr.mxu0 0.0
        %1304 = vmatpush1.msra.mxu0 0.0
        %1305 = vmatprep.subr.mxu0 0.0
        %1306 = vmatpush1.msra.mxu0 0.0
        %1307 = vmatprep.subr.mxu0 0.0
        %1308 = vmatpush1.msra.mxu0 0.0
        %1309 = vmatprep.subr.mxu0 0.0
        %1310 = vmatpush1.msra.mxu0 0.0
        %1311 = vmatprep.subr.mxu0 0.0
        %1312 = vmatpush1.msra.mxu0 0.0
        %1313 = vmatprep.subr.mxu0 0.0
        %1314 = vmatpush1.msra.mxu0 0.0
        %1315 = vmatprep.subr.mxu0 0.0
        %1316 = vmatpush1.msra.mxu0 0.0
        %1317 = vmatprep.subr.mxu0 0.0
        %1318 = vmatpush1.msra.mxu0 0.0
        %1319 = vmatprep.subr.mxu0 0.0
        %1320 = vmatpush1.msra.mxu0 0.0
        %1321 = vmatprep.subr.mxu0 0.0
        %1322 = vmatpush1.msra.mxu0 %v623
        %1323 = vmatprep.subr.mxu0 0.0
        %1324 = vmatpush1.msra.mxu0 %v621
        %1325 = vmatprep.subr.mxu0 0.0
        %1326 = vmatpush2.msra.mxu0 0.0
        %1327 = vmatprep.subr.mxu0 0.0
        %1328 = vmatpush2.msra.mxu0 0.0
        %1329 = vmatprep.subr.mxu0 0.0
        %1330 = vmatpush2.msra.mxu0 0.0
        %1331 = vmatprep.subr.mxu0 0.0
        %1332 = vmatpush2.msra.mxu0 0.0
        %1333 = vmatprep.subr.mxu0 0.0
        %1334 = vmatpush2.msra.mxu0 0.0
        %1335 = vmatprep.subr.mxu0 0.0
        %1336 = vmatpush2.msra.mxu0 0.0
        %1337 = vmatprep.subr.mxu0 0.0
        %1338 = vmatpush2.msra.mxu0 0.0
        %1339 = vmatprep.subr.mxu0 0.0
        %1340 = vmatpush2.msra.mxu0 0.0
        %1341 = vmatprep.subr.mxu0 0.0
        %1342 = vmatpush2.msra.mxu0 0.0
        %1343 = vmatprep.subr.mxu0 0.0
        %1344 = vmatpush2.msra.mxu0 0.0
        %1345 = vmatprep.subr.mxu0 0.0
        %1346 = vmatpush2.msra.mxu0 0.0
        %1347 = vmatprep.subr.mxu0 0.0
        %1348 = vmatpush2.msra.mxu0 0.0
        %1349 = vmatprep.subr.mxu0 0.0
        %1350 = vmatpush2.msra.mxu0 0.0
        %1351 = vmatprep.subr.mxu0 0.0
        %1352 = vmatpush2.msra.mxu0 0.0
        %1353 = vmatprep.subr.mxu0 0.0
        %1354 = vmatpush2.msra.mxu0 0.0
        %1355 = vmatprep.subr.mxu0 0.0
        %1356 = vmatpush2.msra.mxu0 0.0
        %1357 = vmatprep.mubr.f32.mxu0 0.0
        %1358 = vmatmul.mubr.f32.gmra.mxu0 %v1288
        %v1359 = vpop.f32.mrf.mxu0
        %v1360 = vadd.f32 %v1164, %v1359
        %v1361 = vpop.f32.mrf.mxu0
        %1362 = vmatprep.mubr.f32.mxu0 0.0
        %1363 = vmatmul.mubr.f32.gmra.mxu0 %v1291
        %v1364 = vpop.f32.mrf.mxu0
        %v1365 = vadd.f32 %v1169, %v1364
        %v1366 = vpop.f32.mrf.mxu0
        %1367 = vdwg.mxu0
        %v1368 = vmul.f32 %v1360, %v1202
        %v1369 = vmul.f32 %v1365, %v1203
        %1372 = vrot.lane.b32.xlu0 %v1285, 16
        %v1373 = vpop.permute.xlu0 %1372
        %1374 = vrot.lane.b32.xlu0 %v1286, 16
        %v1375 = vpop.permute.xlu0 %1374
        %vm1378 = vcmask 162944
        %1379 = vst.msk [vmem:[#allocation3] sm:$0xff] %vm1378, %v1373
        %1380 = vst.msk [vmem:[#allocation3 + $0x8] sm:$0xff] %vm1378, %v1375
        %1383 = vrot.lane.b32.xlu0 %v1368, 32
        %v1384 = vpop.permute.xlu0 %1383
        %1385 = vrot.lane.b32.xlu0 %v1369, 32
        %v1386 = vpop.permute.xlu0 %1385
        %vm1389 = vcmask 294144
        %1390 = vst.msk [vmem:[#allocation3] sm:$0xff] %vm1389, %v1384
        %1391 = vst.msk [vmem:[#allocation3 + $0x8] sm:$0xff] %vm1389, %v1386
        %v1392 = vld [vmem:[#allocation2] sm:$0xff]
        %v1393 = vld [vmem:[#allocation2 + $0x10] sm:$0xff]
        %v1394 = vmul.f32 %v1392, 0.28867513
        %v1395 = vmul.f32 %v1393, 0.28867513
        %1398 = vrot.lane.b32.xlu0 %v1394, 112
        %v1399 = vpop.permute.xlu0 %1398
        %1400 = vrot.lane.b32.xlu0 %v1395, 112
        %v1401 = vpop.permute.xlu0 %1400
        %1404 = vrot.lane.b32.xlu0 %v1392, 68
        %v1405 = vpop.permute.xlu0 %1404
        %1406 = vrot.lane.b32.xlu0 %v1393, 68
        %v1407 = vpop.permute.xlu0 %1406
        %v1408 = vsel %vm405, %v1399, 0
        %v1410 = vsel %vm405, %v1401, 0
        %v1412 = vsel %vm405, %v1405, 0
        %v1414 = vsel %vm405, %v1407, 0
        %1416 = vmatprep.subr.mxu0 0.0
        %1417 = vmatpush1.xpose.msra.mxu0 0.0
        %1418 = vmatprep.subr.mxu0 0.0
        %1419 = vmatpush1.xpose.msra.mxu0 0.0
        %1420 = vmatprep.subr.mxu0 0.0
        %1421 = vmatpush1.xpose.msra.mxu0 0.0
        %1422 = vmatprep.subr.mxu0 0.0
        %1423 = vmatpush1.xpose.msra.mxu0 0.0
        %1424 = vmatprep.subr.mxu0 0.0
        %1425 = vmatpush1.xpose.msra.mxu0 0.0
        %1426 = vmatprep.subr.mxu0 0.0
        %1427 = vmatpush1.xpose.msra.mxu0 0.0
        %1428 = vmatprep.subr.mxu0 0.0
        %1429 = vmatpush1.xpose.msra.mxu0 0.0
        %1430 = vmatprep.subr.mxu0 0.0
        %1431 = vmatpush1.xpose.msra.mxu0 0.0
        %1432 = vmatprep.subr.mxu0 0.0
        %1433 = vmatpush1.xpose.msra.mxu0 0.0
        %1434 = vmatprep.subr.mxu0 0.0
        %1435 = vmatpush1.xpose.msra.mxu0 0.0
        %1436 = vmatprep.subr.mxu0 0.0
        %1437 = vmatpush1.xpose.msra.mxu0 0.0
        %1438 = vmatprep.subr.mxu0 0.0
        %1439 = vmatpush1.xpose.msra.mxu0 0.0
        %1440 = vmatprep.subr.mxu0 0.0
        %1441 = vmatpush1.xpose.msra.mxu0 0.0
        %1442 = vmatprep.subr.mxu0 0.0
        %1443 = vmatpush1.xpose.msra.mxu0 0.0
        %1444 = vmatprep.subr.mxu0 0.0
        %1445 = vmatpush1.xpose.msra.mxu0 %v1414
        %1446 = vmatprep.subr.mxu0 0.0
        %1447 = vmatpush1.xpose.msra.mxu0 %v1412
        %1448 = vmatprep.subr.mxu0 0.0
        %1449 = vmatpush2.xpose.msra.mxu0 0.0
        %1450 = vmatprep.subr.mxu0 0.0
        %1451 = vmatpush2.xpose.msra.mxu0 0.0
        %1452 = vmatprep.subr.mxu0 0.0
        %1453 = vmatpush2.xpose.msra.mxu0 0.0
        %1454 = vmatprep.subr.mxu0 0.0
        %1455 = vmatpush2.xpose.msra.mxu0 0.0
        %1456 = vmatprep.subr.mxu0 0.0
        %1457 = vmatpush2.xpose.msra.mxu0 0.0
        %1458 = vmatprep.subr.mxu0 0.0
        %1459 = vmatpush2.xpose.msra.mxu0 0.0
        %1460 = vmatprep.subr.mxu0 0.0
        %1461 = vmatpush2.xpose.msra.mxu0 0.0
        %1462 = vmatprep.subr.mxu0 0.0
        %1463 = vmatpush2.xpose.msra.mxu0 0.0
        %1464 = vmatprep.subr.mxu0 0.0
        %1465 = vmatpush2.xpose.msra.mxu0 0.0
        %1466 = vmatprep.subr.mxu0 0.0
        %1467 = vmatpush2.xpose.msra.mxu0 0.0
        %1468 = vmatprep.subr.mxu0 0.0
        %1469 = vmatpush2.xpose.msra.mxu0 0.0
        %1470 = vmatprep.subr.mxu0 0.0
        %1471 = vmatpush2.xpose.msra.mxu0 0.0
        %1472 = vmatprep.subr.mxu0 0.0
        %1473 = vmatpush2.xpose.msra.mxu0 0.0
        %1474 = vmatprep.subr.mxu0 0.0
        %1475 = vmatpush2.xpose.msra.mxu0 0.0
        %1476 = vmatprep.subr.mxu0 0.0
        %1477 = vmatpush2.xpose.msra.mxu0 0.0
        %1478 = vmatprep.subr.mxu0 0.0
        %1479 = vmatpush2.xpose.msra.mxu0 0.0
        %1480 = vmatprep.mubr.f32.mxu0 0.0
        %1481 = vmatmul.mubr.f32.gmra.mxu0 %v1408
        %v1482 = vpop.f32.mrf.mxu0
        %v1483 = vadd.f32 0.0, %v1482
        %v1484 = vpop.f32.mrf.mxu0
        %1485 = vmatprep.mubr.f32.mxu0 0.0
        %1486 = vmatmul.mubr.f32.gmra.mxu0 %v1410
        %v1487 = vpop.f32.mrf.mxu0
        %v1488 = vadd.f32 0.0, %v1487
        %v1489 = vpop.f32.mrf.mxu0
        %1490 = vdwg.mxu0
        %1491 = vrot.lane.b32.xlu0 %v1392, 64
        %v1492 = vpop.permute.xlu0 %1491
        %1493 = vrot.lane.b32.xlu0 %v1393, 64
        %v1494 = vpop.permute.xlu0 %1493
        %v1495 = vsel %vm405, %v1492, 0
        %v1497 = vsel %vm405, %v1494, 0
        %1499 = vmatprep.subr.mxu0 0.0
        %1500 = vmatpush1.xpose.msra.mxu0 0.0
        %1501 = vmatprep.subr.mxu0 0.0
        %1502 = vmatpush1.xpose.msra.mxu0 0.0
        %1503 = vmatprep.subr.mxu0 0.0
        %1504 = vmatpush1.xpose.msra.mxu0 0.0
        %1505 = vmatprep.subr.mxu0 0.0
        %1506 = vmatpush1.xpose.msra.mxu0 0.0
        %1507 = vmatprep.subr.mxu0 0.0
        %1508 = vmatpush1.xpose.msra.mxu0 0.0
        %1509 = vmatprep.subr.mxu0 0.0
        %1510 = vmatpush1.xpose.msra.mxu0 0.0
        %1511 = vmatprep.subr.mxu0 0.0
        %1512 = vmatpush1.xpose.msra.mxu0 0.0
        %1513 = vmatprep.subr.mxu0 0.0
        %1514 = vmatpush1.xpose.msra.mxu0 0.0
        %1515 = vmatprep.subr.mxu0 0.0
        %1516 = vmatpush1.xpose.msra.mxu0 0.0
        %1517 = vmatprep.subr.mxu0 0.0
        %1518 = vmatpush1.xpose.msra.mxu0 0.0
        %1519 = vmatprep.subr.mxu0 0.0
        %1520 = vmatpush1.xpose.msra.mxu0 0.0
        %1521 = vmatprep.subr.mxu0 0.0
        %1522 = vmatpush1.xpose.msra.mxu0 0.0
        %1523 = vmatprep.subr.mxu0 0.0
        %1524 = vmatpush1.xpose.msra.mxu0 0.0
        %1525 = vmatprep.subr.mxu0 0.0
        %1526 = vmatpush1.xpose.msra.mxu0 0.0
        %1527 = vmatprep.subr.mxu0 0.0
        %1528 = vmatpush1.xpose.msra.mxu0 %v1497
        %1529 = vmatprep.subr.mxu0 0.0
        %1530 = vmatpush1.xpose.msra.mxu0 %v1495
        %1531 = vmatprep.subr.mxu0 0.0
        %1532 = vmatpush2.xpose.msra.mxu0 0.0
        %1533 = vmatprep.subr.mxu0 0.0
        %1534 = vmatpush2.xpose.msra.mxu0 0.0
        %1535 = vmatprep.subr.mxu0 0.0
        %1536 = vmatpush2.xpose.msra.mxu0 0.0
        %1537 = vmatprep.subr.mxu0 0.0
        %1538 = vmatpush2.xpose.msra.mxu0 0.0
        %1539 = vmatprep.subr.mxu0 0.0
        %1540 = vmatpush2.xpose.msra.mxu0 0.0
        %1541 = vmatprep.subr.mxu0 0.0
        %1542 = vmatpush2.xpose.msra.mxu0 0.0
        %1543 = vmatprep.subr.mxu0 0.0
        %1544 = vmatpush2.xpose.msra.mxu0 0.0
        %1545 = vmatprep.subr.mxu0 0.0
        %1546 = vmatpush2.xpose.msra.mxu0 0.0
        %1547 = vmatprep.subr.mxu0 0.0
        %1548 = vmatpush2.xpose.msra.mxu0 0.0
        %1549 = vmatprep.subr.mxu0 0.0
        %1550 = vmatpush2.xpose.msra.mxu0 0.0
        %1551 = vmatprep.subr.mxu0 0.0
        %1552 = vmatpush2.xpose.msra.mxu0 0.0
        %1553 = vmatprep.subr.mxu0 0.0
        %1554 = vmatpush2.xpose.msra.mxu0 0.0
        %1555 = vmatprep.subr.mxu0 0.0
        %1556 = vmatpush2.xpose.msra.mxu0 0.0
        %1557 = vmatprep.subr.mxu0 0.0
        %1558 = vmatpush2.xpose.msra.mxu0 0.0
        %1559 = vmatprep.subr.mxu0 0.0
        %1560 = vmatpush2.xpose.msra.mxu0 0.0
        %1561 = vmatprep.subr.mxu0 0.0
        %1562 = vmatpush2.xpose.msra.mxu0 0.0
        %1563 = vmatprep.mubr.f32.mxu0 0.0
        %1564 = vmatmul.mubr.f32.gmra.mxu0 %v1408
        %v1565 = vpop.f32.mrf.mxu0
        %v1566 = vadd.f32 0.0, %v1565
        %v1567 = vpop.f32.mrf.mxu0
        %1568 = vmatprep.mubr.f32.mxu0 0.0
        %1569 = vmatmul.mubr.f32.gmra.mxu0 %v1410
        %v1570 = vpop.f32.mrf.mxu0
        %v1571 = vadd.f32 0.0, %v1570
        %v1572 = vpop.f32.mrf.mxu0
        %1573 = vdwg.mxu0
        %v1574 = vsel %vm385, %v1483, -inf
        %1575 = vmax.xlane.f32.xlu0 %v1574
        %v1576 = vpop.xlane.xlu0 %1575
        %v1577 = vsel %vm385, %v1488, -inf
        %1578 = vmax.xlane.f32.xlu0 %v1577
        %v1579 = vpop.xlane.xlu0 %1578
        %v1580 = vsel %vm385, %v1566, -inf
        %1581 = vmax.xlane.f32.xlu0 %v1580
        %v1582 = vpop.xlane.xlu0 %1581
        %v1583 = vsel %vm385, %v1571, -inf
        %1584 = vmax.xlane.f32.xlu0 %v1583
        %v1585 = vpop.xlane.xlu0 %1584
        %v1586 = vmax.f32 %v1576, %v1582
        %v1587 = vmax.f32 %v1579, %v1585
        %v1588 = vsub.f32 %v1483, %v1586
        %v1589 = vsub.f32 %v1488, %v1587
        %v1590 = vmul.f32 %v1588, 1.442695
        %v1591 = vpow.pop %v1590
        %v1592 = vmul.f32 %v1589, 1.442695
        %v1593 = vpow.pop %v1592
        %v1594 = vsub.f32 %v1566, %v1586
        %v1595 = vsub.f32 %v1571, %v1587
        %v1596 = vmul.f32 %v1594, 1.442695
        %v1597 = vpow.pop %v1596
        %v1598 = vmul.f32 %v1595, 1.442695
        %v1599 = vpow.pop %v1598
        %v1600 = vsel %vm385, %v1591, 0.0
        %1601 = vadd.xlane.f32.xlu0 %v1600
        %v1602 = vpop.xlane.xlu0 %1601
        %v1603 = vsel %vm385, %v1593, 0.0
        %1604 = vadd.xlane.f32.xlu0 %v1603
        %v1605 = vpop.xlane.xlu0 %1604
        %v1606 = vsel %vm385, %v1597, 0.0
        %1607 = vadd.xlane.f32.xlu0 %v1606
        %v1608 = vpop.xlane.xlu0 %1607
        %v1609 = vsel %vm385, %v1599, 0.0
        %1610 = vadd.xlane.f32.xlu0 %v1609
        %v1611 = vpop.xlane.xlu0 %1610
        %v1612 = vadd.f32 %v1602, %v1608
        %v1613 = vadd.f32 %v1605, %v1611
        %v1614 = vrcp.pop %v1612
        %v1615 = vrcp.pop %v1613
        %v1616 = vmul.f32 %v1612, %v1614
        %v1617 = vmul.f32 %v1613, %v1615
        %v1618 = vsub.f32 2.0, %v1616
        %v1619 = vsub.f32 2.0, %v1617
        %v1620 = vmul.f32 %v1614, %v1618
        %v1621 = vmul.f32 %v1615, %v1619
        %1622 = vrot.lane.b32.xlu0 %v1392, 16
        %v1623 = vpop.permute.xlu0 %1622
        %1624 = vrot.lane.b32.xlu0 %v1393, 16
        %v1625 = vpop.permute.xlu0 %1624
        %v1629 = vsel %vm385, %v1597, 0
        %v1632 = vsel %vm385, %v1599, 0
        %1634 = vmatprep.subr.mxu0 0.0
        %1635 = vmatpush1.msra.mxu0 0.0
        %1636 = vmatprep.subr.mxu0 0.0
        %1637 = vmatpush1.msra.mxu0 0.0
        %1638 = vmatprep.subr.mxu0 0.0
        %1639 = vmatpush1.msra.mxu0 0.0
        %1640 = vmatprep.subr.mxu0 0.0
        %1641 = vmatpush1.msra.mxu0 0.0
        %1642 = vmatprep.subr.mxu0 0.0
        %1643 = vmatpush1.msra.mxu0 0.0
        %1644 = vmatprep.subr.mxu0 0.0
        %1645 = vmatpush1.msra.mxu0 0.0
        %1646 = vmatprep.subr.mxu0 0.0
        %1647 = vmatpush1.msra.mxu0 0.0
        %1648 = vmatprep.subr.mxu0 0.0
        %1649 = vmatpush1.msra.mxu0 0.0
        %1650 = vmatprep.subr.mxu0 0.0
        %1651 = vmatpush1.msra.mxu0 0.0
        %1652 = vmatprep.subr.mxu0 0.0
        %1653 = vmatpush1.msra.mxu0 0.0
        %1654 = vmatprep.subr.mxu0 0.0
        %1655 = vmatpush1.msra.mxu0 0.0
        %1656 = vmatprep.subr.mxu0 0.0
        %1657 = vmatpush1.msra.mxu0 0.0
        %1658 = vmatprep.subr.mxu0 0.0
        %1659 = vmatpush1.msra.mxu0 0.0
        %1660 = vmatprep.subr.mxu0 0.0
        %1661 = vmatpush1.msra.mxu0 0.0
        %1662 = vmatprep.subr.mxu0 0.0
        %1663 = vmatpush1.msra.mxu0 %v1625
        %1664 = vmatprep.subr.mxu0 0.0
        %1665 = vmatpush1.msra.mxu0 %v1623
        %1666 = vmatprep.subr.mxu0 0.0
        %1667 = vmatpush2.msra.mxu0 0.0
        %1668 = vmatprep.subr.mxu0 0.0
        %1669 = vmatpush2.msra.mxu0 0.0
        %1670 = vmatprep.subr.mxu0 0.0
        %1671 = vmatpush2.msra.mxu0 0.0
        %1672 = vmatprep.subr.mxu0 0.0
        %1673 = vmatpush2.msra.mxu0 0.0
        %1674 = vmatprep.subr.mxu0 0.0
        %1675 = vmatpush2.msra.mxu0 0.0
        %1676 = vmatprep.subr.mxu0 0.0
        %1677 = vmatpush2.msra.mxu0 0.0
        %1678 = vmatprep.subr.mxu0 0.0
        %1679 = vmatpush2.msra.mxu0 0.0
        %1680 = vmatprep.subr.mxu0 0.0
        %1681 = vmatpush2.msra.mxu0 0.0
        %1682 = vmatprep.subr.mxu0 0.0
        %1683 = vmatpush2.msra.mxu0 0.0
        %1684 = vmatprep.subr.mxu0 0.0
        %1685 = vmatpush2.msra.mxu0 0.0
        %1686 = vmatprep.subr.mxu0 0.0
        %1687 = vmatpush2.msra.mxu0 0.0
        %1688 = vmatprep.subr.mxu0 0.0
        %1689 = vmatpush2.msra.mxu0 0.0
        %1690 = vmatprep.subr.mxu0 0.0
        %1691 = vmatpush2.msra.mxu0 0.0
        %1692 = vmatprep.subr.mxu0 0.0
        %1693 = vmatpush2.msra.mxu0 0.0
        %1694 = vmatprep.subr.mxu0 0.0
        %1695 = vmatpush2.msra.mxu0 0.0
        %1696 = vmatprep.subr.mxu0 0.0
        %1697 = vmatpush2.msra.mxu0 0.0
        %1698 = vmatprep.mubr.f32.mxu0 0.0
        %1699 = vmatmul.mubr.f32.gmra.mxu0 %v1629
        %v1700 = vpop.f32.mrf.mxu0
        %v1701 = vadd.f32 0.0, %v1700
        %v1702 = vpop.f32.mrf.mxu0
        %1703 = vmatprep.mubr.f32.mxu0 0.0
        %1704 = vmatmul.mubr.f32.gmra.mxu0 %v1632
        %v1705 = vpop.f32.mrf.mxu0
        %v1706 = vadd.f32 0.0, %v1705
        %v1707 = vpop.f32.mrf.mxu0
        %1708 = vdwg.mxu0
        %1709 = vrot.lane.b32.xlu0 %v1392, 20
        %v1710 = vpop.permute.xlu0 %1709
        %1711 = vrot.lane.b32.xlu0 %v1393, 20
        %v1712 = vpop.permute.xlu0 %1711
        %v1716 = vsel %vm385, %v1591, 0
        %v1719 = vsel %vm385, %v1593, 0
        %1721 = vmatprep.subr.mxu0 0.0
        %1722 = vmatpush1.msra.mxu0 0.0
        %1723 = vmatprep.subr.mxu0 0.0
        %1724 = vmatpush1.msra.mxu0 0.0
        %1725 = vmatprep.subr.mxu0 0.0
        %1726 = vmatpush1.msra.mxu0 0.0
        %1727 = vmatprep.subr.mxu0 0.0
        %1728 = vmatpush1.msra.mxu0 0.0
        %1729 = vmatprep.subr.mxu0 0.0
        %1730 = vmatpush1.msra.mxu0 0.0
        %1731 = vmatprep.subr.mxu0 0.0
        %1732 = vmatpush1.msra.mxu0 0.0
        %1733 = vmatprep.subr.mxu0 0.0
        %1734 = vmatpush1.msra.mxu0 0.0
        %1735 = vmatprep.subr.mxu0 0.0
        %1736 = vmatpush1.msra.mxu0 0.0
        %1737 = vmatprep.subr.mxu0 0.0
        %1738 = vmatpush1.msra.mxu0 0.0
        %1739 = vmatprep.subr.mxu0 0.0
        %1740 = vmatpush1.msra.mxu0 0.0
        %1741 = vmatprep.subr.mxu0 0.0
        %1742 = vmatpush1.msra.mxu0 0.0
        %1743 = vmatprep.subr.mxu0 0.0
        %1744 = vmatpush1.msra.mxu0 0.0
        %1745 = vmatprep.subr.mxu0 0.0
        %1746 = vmatpush1.msra.mxu0 0.0
        %1747 = vmatprep.subr.mxu0 0.0
        %1748 = vmatpush1.msra.mxu0 0.0
        %1749 = vmatprep.subr.mxu0 0.0
        %1750 = vmatpush1.msra.mxu0 %v1712
        %1751 = vmatprep.subr.mxu0 0.0
        %1752 = vmatpush1.msra.mxu0 %v1710
        %1753 = vmatprep.subr.mxu0 0.0
        %1754 = vmatpush2.msra.mxu0 0.0
        %1755 = vmatprep.subr.mxu0 0.0
        %1756 = vmatpush2.msra.mxu0 0.0
        %1757 = vmatprep.subr.mxu0 0.0
        %1758 = vmatpush2.msra.mxu0 0.0
        %1759 = vmatprep.subr.mxu0 0.0
        %1760 = vmatpush2.msra.mxu0 0.0
        %1761 = vmatprep.subr.mxu0 0.0
        %1762 = vmatpush2.msra.mxu0 0.0
        %1763 = vmatprep.subr.mxu0 0.0
        %1764 = vmatpush2.msra.mxu0 0.0
        %1765 = vmatprep.subr.mxu0 0.0
        %1766 = vmatpush2.msra.mxu0 0.0
        %1767 = vmatprep.subr.mxu0 0.0
        %1768 = vmatpush2.msra.mxu0 0.0
        %1769 = vmatprep.subr.mxu0 0.0
        %1770 = vmatpush2.msra.mxu0 0.0
        %1771 = vmatprep.subr.mxu0 0.0
        %1772 = vmatpush2.msra.mxu0 0.0
        %1773 = vmatprep.subr.mxu0 0.0
        %1774 = vmatpush2.msra.mxu0 0.0
        %1775 = vmatprep.subr.mxu0 0.0
        %1776 = vmatpush2.msra.mxu0 0.0
        %1777 = vmatprep.subr.mxu0 0.0
        %1778 = vmatpush2.msra.mxu0 0.0
        %1779 = vmatprep.subr.mxu0 0.0
        %1780 = vmatpush2.msra.mxu0 0.0
        %1781 = vmatprep.subr.mxu0 0.0
        %1782 = vmatpush2.msra.mxu0 0.0
        %1783 = vmatprep.subr.mxu0 0.0
        %1784 = vmatpush2.msra.mxu0 0.0
        %1785 = vmatprep.mubr.f32.mxu0 0.0
        %1786 = vmatmul.mubr.f32.gmra.mxu0 %v1716
        %v1787 = vpop.f32.mrf.mxu0
        %v1788 = vadd.f32 %v1701, %v1787
        %v1789 = vpop.f32.mrf.mxu0
        %1790 = vmatprep.mubr.f32.mxu0 0.0
        %1791 = vmatmul.mubr.f32.gmra.mxu0 %v1719
        %v1792 = vpop.f32.mrf.mxu0
        %v1793 = vadd.f32 %v1706, %v1792
        %v1794 = vpop.f32.mrf.mxu0
        %1795 = vdwg.mxu0
        %v1796 = vmul.f32 %v1788, %v1620
        %v1797 = vmul.f32 %v1793, %v1621
        %1800 = vrot.lane.b32.xlu0 %v1796, 4
        %v1801 = vpop.permute.xlu0 %1800
        %1802 = vrot.lane.b32.xlu0 %v1797, 4
        %v1803 = vpop.permute.xlu0 %1802
        %vm1806 = vcmask 64544
        %1807 = vst.msk [vmem:[#allocation3] sm:$0xff] %vm1806, %v1801
        %1808 = vst.msk [vmem:[#allocation3 + $0x8] sm:$0xff] %vm1806, %v1803
        %1809 = vrot.lane.b32.xlu0 %v1394, 108
        %v1810 = vpop.permute.xlu0 %1809
        %1811 = vrot.lane.b32.xlu0 %v1395, 108
        %v1812 = vpop.permute.xlu0 %1811
        %v1813 = vsel %vm405, %v1810, 0
        %v1815 = vsel %vm405, %v1812, 0
        %1817 = vmatprep.subr.mxu0 0.0
        %1818 = vmatpush1.xpose.msra.mxu0 0.0
        %1819 = vmatprep.subr.mxu0 0.0
        %1820 = vmatpush1.xpose.msra.mxu0 0.0
        %1821 = vmatprep.subr.mxu0 0.0
        %1822 = vmatpush1.xpose.msra.mxu0 0.0
        %1823 = vmatprep.subr.mxu0 0.0
        %1824 = vmatpush1.xpose.msra.mxu0 0.0
        %1825 = vmatprep.subr.mxu0 0.0
        %1826 = vmatpush1.xpose.msra.mxu0 0.0
        %1827 = vmatprep.subr.mxu0 0.0
        %1828 = vmatpush1.xpose.msra.mxu0 0.0
        %1829 = vmatprep.subr.mxu0 0.0
        %1830 = vmatpush1.xpose.msra.mxu0 0.0
        %1831 = vmatprep.subr.mxu0 0.0
        %1832 = vmatpush1.xpose.msra.mxu0 0.0
        %1833 = vmatprep.subr.mxu0 0.0
        %1834 = vmatpush1.xpose.msra.mxu0 0.0
        %1835 = vmatprep.subr.mxu0 0.0
        %1836 = vmatpush1.xpose.msra.mxu0 0.0
        %1837 = vmatprep.subr.mxu0 0.0
        %1838 = vmatpush1.xpose.msra.mxu0 0.0
        %1839 = vmatprep.subr.mxu0 0.0
        %1840 = vmatpush1.xpose.msra.mxu0 0.0
        %1841 = vmatprep.subr.mxu0 0.0
        %1842 = vmatpush1.xpose.msra.mxu0 0.0
        %1843 = vmatprep.subr.mxu0 0.0
        %1844 = vmatpush1.xpose.msra.mxu0 0.0
        %1845 = vmatprep.subr.mxu0 0.0
        %1846 = vmatpush1.xpose.msra.mxu0 %v1414
        %1847 = vmatprep.subr.mxu0 0.0
        %1848 = vmatpush1.xpose.msra.mxu0 %v1412
        %1849 = vmatprep.subr.mxu0 0.0
        %1850 = vmatpush2.xpose.msra.mxu0 0.0
        %1851 = vmatprep.subr.mxu0 0.0
        %1852 = vmatpush2.xpose.msra.mxu0 0.0
        %1853 = vmatprep.subr.mxu0 0.0
        %1854 = vmatpush2.xpose.msra.mxu0 0.0
        %1855 = vmatprep.subr.mxu0 0.0
        %1856 = vmatpush2.xpose.msra.mxu0 0.0
        %1857 = vmatprep.subr.mxu0 0.0
        %1858 = vmatpush2.xpose.msra.mxu0 0.0
        %1859 = vmatprep.subr.mxu0 0.0
        %1860 = vmatpush2.xpose.msra.mxu0 0.0
        %1861 = vmatprep.subr.mxu0 0.0
        %1862 = vmatpush2.xpose.msra.mxu0 0.0
        %1863 = vmatprep.subr.mxu0 0.0
        %1864 = vmatpush2.xpose.msra.mxu0 0.0
        %1865 = vmatprep.subr.mxu0 0.0
        %1866 = vmatpush2.xpose.msra.mxu0 0.0
        %1867 = vmatprep.subr.mxu0 0.0
        %1868 = vmatpush2.xpose.msra.mxu0 0.0
        %1869 = vmatprep.subr.mxu0 0.0
        %1870 = vmatpush2.xpose.msra.mxu0 0.0
        %1871 = vmatprep.subr.mxu0 0.0
        %1872 = vmatpush2.xpose.msra.mxu0 0.0
        %1873 = vmatprep.subr.mxu0 0.0
        %1874 = vmatpush2.xpose.msra.mxu0 0.0
        %1875 = vmatprep.subr.mxu0 0.0
        %1876 = vmatpush2.xpose.msra.mxu0 0.0
        %1877 = vmatprep.subr.mxu0 0.0
        %1878 = vmatpush2.xpose.msra.mxu0 0.0
        %1879 = vmatprep.subr.mxu0 0.0
        %1880 = vmatpush2.xpose.msra.mxu0 0.0
        %1881 = vmatprep.mubr.f32.mxu0 0.0
        %1882 = vmatmul.mubr.f32.gmra.mxu0 %v1813
        %v1883 = vpop.f32.mrf.mxu0
        %v1884 = vadd.f32 0.0, %v1883
        %v1885 = vpop.f32.mrf.mxu0
        %1886 = vmatprep.mubr.f32.mxu0 0.0
        %1887 = vmatmul.mubr.f32.gmra.mxu0 %v1815
        %v1888 = vpop.f32.mrf.mxu0
        %v1889 = vadd.f32 0.0, %v1888
        %v1890 = vpop.f32.mrf.mxu0
        %1891 = vdwg.mxu0
        %1892 = vmatprep.subr.mxu0 0.0
        %1893 = vmatpush1.xpose.msra.mxu0 0.0
        %1894 = vmatprep.subr.mxu0 0.0
        %1895 = vmatpush1.xpose.msra.mxu0 0.0
        %1896 = vmatprep.subr.mxu0 0.0
        %1897 = vmatpush1.xpose.msra.mxu0 0.0
        %1898 = vmatprep.subr.mxu0 0.0
        %1899 = vmatpush1.xpose.msra.mxu0 0.0
        %1900 = vmatprep.subr.mxu0 0.0
        %1901 = vmatpush1.xpose.msra.mxu0 0.0
        %1902 = vmatprep.subr.mxu0 0.0
        %1903 = vmatpush1.xpose.msra.mxu0 0.0
        %1904 = vmatprep.subr.mxu0 0.0
        %1905 = vmatpush1.xpose.msra.mxu0 0.0
        %1906 = vmatprep.subr.mxu0 0.0
        %1907 = vmatpush1.xpose.msra.mxu0 0.0
        %1908 = vmatprep.subr.mxu0 0.0
        %1909 = vmatpush1.xpose.msra.mxu0 0.0
        %1910 = vmatprep.subr.mxu0 0.0
        %1911 = vmatpush1.xpose.msra.mxu0 0.0
        %1912 = vmatprep.subr.mxu0 0.0
        %1913 = vmatpush1.xpose.msra.mxu0 0.0
        %1914 = vmatprep.subr.mxu0 0.0
        %1915 = vmatpush1.xpose.msra.mxu0 0.0
        %1916 = vmatprep.subr.mxu0 0.0
        %1917 = vmatpush1.xpose.msra.mxu0 0.0
        %1918 = vmatprep.subr.mxu0 0.0
        %1919 = vmatpush1.xpose.msra.mxu0 0.0
        %1920 = vmatprep.subr.mxu0 0.0
        %1921 = vmatpush1.xpose.msra.mxu0 %v1497
        %1922 = vmatprep.subr.mxu0 0.0
        %1923 = vmatpush1.xpose.msra.mxu0 %v1495
        %1924 = vmatprep.subr.mxu0 0.0
        %1925 = vmatpush2.xpose.msra.mxu0 0.0
        %1926 = vmatprep.subr.mxu0 0.0
        %1927 = vmatpush2.xpose.msra.mxu0 0.0
        %1928 = vmatprep.subr.mxu0 0.0
        %1929 = vmatpush2.xpose.msra.mxu0 0.0
        %1930 = vmatprep.subr.mxu0 0.0
        %1931 = vmatpush2.xpose.msra.mxu0 0.0
        %1932 = vmatprep.subr.mxu0 0.0
        %1933 = vmatpush2.xpose.msra.mxu0 0.0
        %1934 = vmatprep.subr.mxu0 0.0
        %1935 = vmatpush2.xpose.msra.mxu0 0.0
        %1936 = vmatprep.subr.mxu0 0.0
        %1937 = vmatpush2.xpose.msra.mxu0 0.0
        %1938 = vmatprep.subr.mxu0 0.0
        %1939 = vmatpush2.xpose.msra.mxu0 0.0
        %1940 = vmatprep.subr.mxu0 0.0
        %1941 = vmatpush2.xpose.msra.mxu0 0.0
        %1942 = vmatprep.subr.mxu0 0.0
        %1943 = vmatpush2.xpose.msra.mxu0 0.0
        %1944 = vmatprep.subr.mxu0 0.0
        %1945 = vmatpush2.xpose.msra.mxu0 0.0
        %1946 = vmatprep.subr.mxu0 0.0
        %1947 = vmatpush2.xpose.msra.mxu0 0.0
        %1948 = vmatprep.subr.mxu0 0.0
        %1949 = vmatpush2.xpose.msra.mxu0 0.0
        %1950 = vmatprep.subr.mxu0 0.0
        %1951 = vmatpush2.xpose.msra.mxu0 0.0
        %1952 = vmatprep.subr.mxu0 0.0
        %1953 = vmatpush2.xpose.msra.mxu0 0.0
        %1954 = vmatprep.subr.mxu0 0.0
        %1955 = vmatpush2.xpose.msra.mxu0 0.0
        %1956 = vmatprep.mubr.f32.mxu0 0.0
        %1957 = vmatmul.mubr.f32.gmra.mxu0 %v1813
        %v1958 = vpop.f32.mrf.mxu0
        %v1959 = vadd.f32 0.0, %v1958
        %v1960 = vpop.f32.mrf.mxu0
        %1961 = vmatprep.mubr.f32.mxu0 0.0
        %1962 = vmatmul.mubr.f32.gmra.mxu0 %v1815
        %v1963 = vpop.f32.mrf.mxu0
        %v1964 = vadd.f32 0.0, %v1963
        %v1965 = vpop.f32.mrf.mxu0
        %1966 = vdwg.mxu0
        %1967 = vrot.lane.b32.xlu0 %v1392, 60
        %v1968 = vpop.permute.xlu0 %1967
        %1969 = vrot.lane.b32.xlu0 %v1393, 60
        %v1970 = vpop.permute.xlu0 %1969
        %v1971 = vsel %vm405, %v1968, 0
        %v1973 = vsel %vm405, %v1970, 0
        %1975 = vmatprep.subr.mxu0 0.0
        %1976 = vmatpush1.xpose.msra.mxu0 0.0
        %1977 = vmatprep.subr.mxu0 0.0
        %1978 = vmatpush1.xpose.msra.mxu0 0.0
        %1979 = vmatprep.subr.mxu0 0.0
        %1980 = vmatpush1.xpose.msra.mxu0 0.0
        %1981 = vmatprep.subr.mxu0 0.0
        %1982 = vmatpush1.xpose.msra.mxu0 0.0
        %1983 = vmatprep.subr.mxu0 0.0
        %1984 = vmatpush1.xpose.msra.mxu0 0.0
        %1985 = vmatprep.subr.mxu0 0.0
        %1986 = vmatpush1.xpose.msra.mxu0 0.0
        %1987 = vmatprep.subr.mxu0 0.0
        %1988 = vmatpush1.xpose.msra.mxu0 0.0
        %1989 = vmatprep.subr.mxu0 0.0
        %1990 = vmatpush1.xpose.msra.mxu0 0.0
        %1991 = vmatprep.subr.mxu0 0.0
        %1992 = vmatpush1.xpose.msra.mxu0 0.0
        %1993 = vmatprep.subr.mxu0 0.0
        %1994 = vmatpush1.xpose.msra.mxu0 0.0
        %1995 = vmatprep.subr.mxu0 0.0
        %1996 = vmatpush1.xpose.msra.mxu0 0.0
        %1997 = vmatprep.subr.mxu0 0.0
        %1998 = vmatpush1.xpose.msra.mxu0 0.0
        %1999 = vmatprep.subr.mxu0 0.0
        %2000 = vmatpush1.xpose.msra.mxu0 0.0
        %2001 = vmatprep.subr.mxu0 0.0
        %2002 = vmatpush1.xpose.msra.mxu0 0.0
        %2003 = vmatprep.subr.mxu0 0.0
        %2004 = vmatpush1.xpose.msra.mxu0 %v1973
        %2005 = vmatprep.subr.mxu0 0.0
        %2006 = vmatpush1.xpose.msra.mxu0 %v1971
        %2007 = vmatprep.subr.mxu0 0.0
        %2008 = vmatpush2.xpose.msra.mxu0 0.0
        %2009 = vmatprep.subr.mxu0 0.0
        %2010 = vmatpush2.xpose.msra.mxu0 0.0
        %2011 = vmatprep.subr.mxu0 0.0
        %2012 = vmatpush2.xpose.msra.mxu0 0.0
        %2013 = vmatprep.subr.mxu0 0.0
        %2014 = vmatpush2.xpose.msra.mxu0 0.0
        %2015 = vmatprep.subr.mxu0 0.0
        %2016 = vmatpush2.xpose.msra.mxu0 0.0
        %2017 = vmatprep.subr.mxu0 0.0
        %2018 = vmatpush2.xpose.msra.mxu0 0.0
        %2019 = vmatprep.subr.mxu0 0.0
        %2020 = vmatpush2.xpose.msra.mxu0 0.0
        %2021 = vmatprep.subr.mxu0 0.0
        %2022 = vmatpush2.xpose.msra.mxu0 0.0
        %2023 = vmatprep.subr.mxu0 0.0
        %2024 = vmatpush2.xpose.msra.mxu0 0.0
        %2025 = vmatprep.subr.mxu0 0.0
        %2026 = vmatpush2.xpose.msra.mxu0 0.0
        %2027 = vmatprep.subr.mxu0 0.0
        %2028 = vmatpush2.xpose.msra.mxu0 0.0
        %2029 = vmatprep.subr.mxu0 0.0
        %2030 = vmatpush2.xpose.msra.mxu0 0.0
        %2031 = vmatprep.subr.mxu0 0.0
        %2032 = vmatpush2.xpose.msra.mxu0 0.0
        %2033 = vmatprep.subr.mxu0 0.0
        %2034 = vmatpush2.xpose.msra.mxu0 0.0
        %2035 = vmatprep.subr.mxu0 0.0
        %2036 = vmatpush2.xpose.msra.mxu0 0.0
        %2037 = vmatprep.subr.mxu0 0.0
        %2038 = vmatpush2.xpose.msra.mxu0 0.0
        %2039 = vmatprep.mubr.f32.mxu0 0.0
        %2040 = vmatmul.mubr.f32.gmra.mxu0 %v1813
        %v2041 = vpop.f32.mrf.mxu0
        %v2042 = vadd.f32 0.0, %v2041
        %v2043 = vpop.f32.mrf.mxu0
        %2044 = vmatprep.mubr.f32.mxu0 0.0
        %2045 = vmatmul.mubr.f32.gmra.mxu0 %v1815
        %v2046 = vpop.f32.mrf.mxu0
        %v2047 = vadd.f32 0.0, %v2046
        %v2048 = vpop.f32.mrf.mxu0
        %2049 = vdwg.mxu0
        %v2050 = vsel %vm385, %v1884, -inf
        %2051 = vmax.xlane.f32.xlu0 %v2050
        %v2052 = vpop.xlane.xlu0 %2051
        %v2053 = vsel %vm385, %v1889, -inf
        %2054 = vmax.xlane.f32.xlu0 %v2053
        %v2055 = vpop.xlane.xlu0 %2054
        %v2056 = vsel %vm385, %v1959, -inf
        %2057 = vmax.xlane.f32.xlu0 %v2056
        %v2058 = vpop.xlane.xlu0 %2057
        %v2059 = vsel %vm385, %v1964, -inf
        %2060 = vmax.xlane.f32.xlu0 %v2059
        %v2061 = vpop.xlane.xlu0 %2060
        %v2062 = vmax.f32 %v2052, %v2058
        %v2063 = vmax.f32 %v2055, %v2061
        %v2064 = vsel %vm385, %v2042, -inf
        %2065 = vmax.xlane.f32.xlu0 %v2064
        %v2066 = vpop.xlane.xlu0 %2065
        %v2067 = vsel %vm385, %v2047, -inf
        %2068 = vmax.xlane.f32.xlu0 %v2067
        %v2069 = vpop.xlane.xlu0 %2068
        %v2070 = vmax.f32 %v2062, %v2066
        %v2071 = vmax.f32 %v2063, %v2069
        %v2072 = vsub.f32 %v1884, %v2070
        %v2073 = vsub.f32 %v1889, %v2071
        %v2074 = vmul.f32 %v2072, 1.442695
        %v2075 = vpow.pop %v2074
        %v2076 = vmul.f32 %v2073, 1.442695
        %v2077 = vpow.pop %v2076
        %v2078 = vsub.f32 %v1959, %v2070
        %v2079 = vsub.f32 %v1964, %v2071
        %v2080 = vmul.f32 %v2078, 1.442695
        %v2081 = vpow.pop %v2080
        %v2082 = vmul.f32 %v2079, 1.442695
        %v2083 = vpow.pop %v2082
        %v2084 = vsub.f32 %v2042, %v2070
        %v2085 = vsub.f32 %v2047, %v2071
        %v2086 = vmul.f32 %v2084, 1.442695
        %v2087 = vpow.pop %v2086
        %v2088 = vmul.f32 %v2085, 1.442695
        %v2089 = vpow.pop %v2088
        %v2090 = vsel %vm385, %v2087, 0.0
        %2091 = vadd.xlane.f32.xlu0 %v2090
        %v2092 = vpop.xlane.xlu0 %2091
        %v2093 = vsel %vm385, %v2089, 0.0
        %2094 = vadd.xlane.f32.xlu0 %v2093
        %v2095 = vpop.xlane.xlu0 %2094
        %2096 = vrot.lane.b32.xlu0 %v1392, 12
        %v2097 = vpop.permute.xlu0 %2096
        %2098 = vrot.lane.b32.xlu0 %v1393, 12
        %v2099 = vpop.permute.xlu0 %2098
        %v2103 = vsel %vm385, %v2087, 0
        %v2106 = vsel %vm385, %v2089, 0
        %2108 = vmatprep.subr.mxu0 0.0
        %2109 = vmatpush1.msra.mxu0 0.0
        %2110 = vmatprep.subr.mxu0 0.0
        %2111 = vmatpush1.msra.mxu0 0.0
        %2112 = vmatprep.subr.mxu0 0.0
        %2113 = vmatpush1.msra.mxu0 0.0
        %2114 = vmatprep.subr.mxu0 0.0
        %2115 = vmatpush1.msra.mxu0 0.0
        %2116 = vmatprep.subr.mxu0 0.0
        %2117 = vmatpush1.msra.mxu0 0.0
        %2118 = vmatprep.subr.mxu0 0.0
        %2119 = vmatpush1.msra.mxu0 0.0
        %2120 = vmatprep.subr.mxu0 0.0
        %2121 = vmatpush1.msra.mxu0 0.0
        %2122 = vmatprep.subr.mxu0 0.0
        %2123 = vmatpush1.msra.mxu0 0.0
        %2124 = vmatprep.subr.mxu0 0.0
        %2125 = vmatpush1.msra.mxu0 0.0
        %2126 = vmatprep.subr.mxu0 0.0
        %2127 = vmatpush1.msra.mxu0 0.0
        %2128 = vmatprep.subr.mxu0 0.0
        %2129 = vmatpush1.msra.mxu0 0.0
        %2130 = vmatprep.subr.mxu0 0.0
        %2131 = vmatpush1.msra.mxu0 0.0
        %2132 = vmatprep.subr.mxu0 0.0
        %2133 = vmatpush1.msra.mxu0 0.0
        %2134 = vmatprep.subr.mxu0 0.0
        %2135 = vmatpush1.msra.mxu0 0.0
        %2136 = vmatprep.subr.mxu0 0.0
        %2137 = vmatpush1.msra.mxu0 %v2099
        %2138 = vmatprep.subr.mxu0 0.0
        %2139 = vmatpush1.msra.mxu0 %v2097
        %2140 = vmatprep.subr.mxu0 0.0
        %2141 = vmatpush2.msra.mxu0 0.0
        %2142 = vmatprep.subr.mxu0 0.0
        %2143 = vmatpush2.msra.mxu0 0.0
        %2144 = vmatprep.subr.mxu0 0.0
        %2145 = vmatpush2.msra.mxu0 0.0
        %2146 = vmatprep.subr.mxu0 0.0
        %2147 = vmatpush2.msra.mxu0 0.0
        %2148 = vmatprep.subr.mxu0 0.0
        %2149 = vmatpush2.msra.mxu0 0.0
        %2150 = vmatprep.subr.mxu0 0.0
        %2151 = vmatpush2.msra.mxu0 0.0
        %2152 = vmatprep.subr.mxu0 0.0
        %2153 = vmatpush2.msra.mxu0 0.0
        %2154 = vmatprep.subr.mxu0 0.0
        %2155 = vmatpush2.msra.mxu0 0.0
        %2156 = vmatprep.subr.mxu0 0.0
        %2157 = vmatpush2.msra.mxu0 0.0
        %2158 = vmatprep.subr.mxu0 0.0
        %2159 = vmatpush2.msra.mxu0 0.0
        %2160 = vmatprep.subr.mxu0 0.0
        %2161 = vmatpush2.msra.mxu0 0.0
        %2162 = vmatprep.subr.mxu0 0.0
        %2163 = vmatpush2.msra.mxu0 0.0
        %2164 = vmatprep.subr.mxu0 0.0
        %2165 = vmatpush2.msra.mxu0 0.0
        %2166 = vmatprep.subr.mxu0 0.0
        %2167 = vmatpush2.msra.mxu0 0.0
        %2168 = vmatprep.subr.mxu0 0.0
        %2169 = vmatpush2.msra.mxu0 0.0
        %2170 = vmatprep.subr.mxu0 0.0
        %2171 = vmatpush2.msra.mxu0 0.0
        %2172 = vmatprep.mubr.f32.mxu0 0.0
        %2173 = vmatmul.mubr.f32.gmra.mxu0 %v2103
        %v2174 = vpop.f32.mrf.mxu0
        %v2175 = vadd.f32 0.0, %v2174
        %v2176 = vpop.f32.mrf.mxu0
        %2177 = vmatprep.mubr.f32.mxu0 0.0
        %2178 = vmatmul.mubr.f32.gmra.mxu0 %v2106
        %v2179 = vpop.f32.mrf.mxu0
        %v2180 = vadd.f32 0.0, %v2179
        %v2181 = vpop.f32.mrf.mxu0
        %2182 = vdwg.mxu0
        %v2183 = vsel %vm385, %v2075, 0.0
        %2184 = vadd.xlane.f32.xlu0 %v2183
        %v2185 = vpop.xlane.xlu0 %2184
        %v2186 = vsel %vm385, %v2077, 0.0
        %2187 = vadd.xlane.f32.xlu0 %v2186
        %v2188 = vpop.xlane.xlu0 %2187
        %v2189 = vadd.f32 %v2185, %v2092
        %v2190 = vadd.f32 %v2188, %v2095
        %v2191 = vrcp.pop %v2189
        %v2192 = vrcp.pop %v2190
        %v2193 = vmul.f32 %v2189, %v2191
        %v2194 = vmul.f32 %v2190, %v2192
        %v2195 = vsub.f32 2.0, %v2193
        %v2196 = vsub.f32 2.0, %v2194
        %v2197 = vmul.f32 %v2191, %v2195
        %v2198 = vmul.f32 %v2192, %v2196
        %v2199 = vsel %vm385, %v2081, 0.0
        %2200 = vadd.xlane.f32.xlu0 %v2199
        %v2201 = vpop.xlane.xlu0 %2200
        %v2202 = vsel %vm385, %v2083, 0.0
        %2203 = vadd.xlane.f32.xlu0 %v2202
        %v2204 = vpop.xlane.xlu0 %2203
        %v2205 = vadd.f32 %v2201, %v2092
        %v2206 = vadd.f32 %v2204, %v2095
        %v2207 = vrcp.pop %v2205
        %v2208 = vrcp.pop %v2206
        %v2209 = vmul.f32 %v2205, %v2207
        %v2210 = vmul.f32 %v2206, %v2208
        %v2211 = vsub.f32 2.0, %v2209
        %v2212 = vsub.f32 2.0, %v2210
        %v2213 = vmul.f32 %v2207, %v2211
        %v2214 = vmul.f32 %v2208, %v2212
        %v2216 = vsel %vm385, %v2075, 0
        %v2219 = vsel %vm385, %v2077, 0
        %2221 = vmatprep.subr.mxu0 0.0
        %2222 = vmatpush1.msra.mxu0 0.0
        %2223 = vmatprep.subr.mxu0 0.0
        %2224 = vmatpush1.msra.mxu0 0.0
        %2225 = vmatprep.subr.mxu0 0.0
        %2226 = vmatpush1.msra.mxu0 0.0
        %2227 = vmatprep.subr.mxu0 0.0
        %2228 = vmatpush1.msra.mxu0 0.0
        %2229 = vmatprep.subr.mxu0 0.0
        %2230 = vmatpush1.msra.mxu0 0.0
        %2231 = vmatprep.subr.mxu0 0.0
        %2232 = vmatpush1.msra.mxu0 0.0
        %2233 = vmatprep.subr.mxu0 0.0
        %2234 = vmatpush1.msra.mxu0 0.0
        %2235 = vmatprep.subr.mxu0 0.0
        %2236 = vmatpush1.msra.mxu0 0.0
        %2237 = vmatprep.subr.mxu0 0.0
        %2238 = vmatpush1.msra.mxu0 0.0
        %2239 = vmatprep.subr.mxu0 0.0
        %2240 = vmatpush1.msra.mxu0 0.0
        %2241 = vmatprep.subr.mxu0 0.0
        %2242 = vmatpush1.msra.mxu0 0.0
        %2243 = vmatprep.subr.mxu0 0.0
        %2244 = vmatpush1.msra.mxu0 0.0
        %2245 = vmatprep.subr.mxu0 0.0
        %2246 = vmatpush1.msra.mxu0 0.0
        %2247 = vmatprep.subr.mxu0 0.0
        %2248 = vmatpush1.msra.mxu0 0.0
        %2249 = vmatprep.subr.mxu0 0.0
        %2250 = vmatpush1.msra.mxu0 %v1712
        %2251 = vmatprep.subr.mxu0 0.0
        %2252 = vmatpush1.msra.mxu0 %v1710
        %2253 = vmatprep.subr.mxu0 0.0
        %2254 = vmatpush2.msra.mxu0 0.0
        %2255 = vmatprep.subr.mxu0 0.0
        %2256 = vmatpush2.msra.mxu0 0.0
        %2257 = vmatprep.subr.mxu0 0.0
        %2258 = vmatpush2.msra.mxu0 0.0
        %2259 = vmatprep.subr.mxu0 0.0
        %2260 = vmatpush2.msra.mxu0 0.0
        %2261 = vmatprep.subr.mxu0 0.0
        %2262 = vmatpush2.msra.mxu0 0.0
        %2263 = vmatprep.subr.mxu0 0.0
        %2264 = vmatpush2.msra.mxu0 0.0
        %2265 = vmatprep.subr.mxu0 0.0
        %2266 = vmatpush2.msra.mxu0 0.0
        %2267 = vmatprep.subr.mxu0 0.0
        %2268 = vmatpush2.msra.mxu0 0.0
        %2269 = vmatprep.subr.mxu0 0.0
        %2270 = vmatpush2.msra.mxu0 0.0
        %2271 = vmatprep.subr.mxu0 0.0
        %2272 = vmatpush2.msra.mxu0 0.0
        %2273 = vmatprep.subr.mxu0 0.0
        %2274 = vmatpush2.msra.mxu0 0.0
        %2275 = vmatprep.subr.mxu0 0.0
        %2276 = vmatpush2.msra.mxu0 0.0
        %2277 = vmatprep.subr.mxu0 0.0
        %2278 = vmatpush2.msra.mxu0 0.0
        %2279 = vmatprep.subr.mxu0 0.0
        %2280 = vmatpush2.msra.mxu0 0.0
        %2281 = vmatprep.subr.mxu0 0.0
        %2282 = vmatpush2.msra.mxu0 0.0
        %2283 = vmatprep.subr.mxu0 0.0
        %2284 = vmatpush2.msra.mxu0 0.0
        %2285 = vmatprep.mubr.f32.mxu0 0.0
        %2286 = vmatmul.mubr.f32.gmra.mxu0 %v2216
        %v2287 = vpop.f32.mrf.mxu0
        %v2288 = vadd.f32 %v2175, %v2287
        %v2289 = vpop.f32.mrf.mxu0
        %2290 = vmatprep.mubr.f32.mxu0 0.0
        %2291 = vmatmul.mubr.f32.gmra.mxu0 %v2219
        %v2292 = vpop.f32.mrf.mxu0
        %v2293 = vadd.f32 %v2180, %v2292
        %v2294 = vpop.f32.mrf.mxu0
        %2295 = vdwg.mxu0
        %v2296 = vmul.f32 %v2288, %v2197
        %v2297 = vmul.f32 %v2293, %v2198
        %v2299 = vsel %vm385, %v2081, 0
        %v2302 = vsel %vm385, %v2083, 0
        %2304 = vmatprep.subr.mxu0 0.0
        %2305 = vmatpush1.msra.mxu0 0.0
        %2306 = vmatprep.subr.mxu0 0.0
        %2307 = vmatpush1.msra.mxu0 0.0
        %2308 = vmatprep.subr.mxu0 0.0
        %2309 = vmatpush1.msra.mxu0 0.0
        %2310 = vmatprep.subr.mxu0 0.0
        %2311 = vmatpush1.msra.mxu0 0.0
        %2312 = vmatprep.subr.mxu0 0.0
        %2313 = vmatpush1.msra.mxu0 0.0
        %2314 = vmatprep.subr.mxu0 0.0
        %2315 = vmatpush1.msra.mxu0 0.0
        %2316 = vmatprep.subr.mxu0 0.0
        %2317 = vmatpush1.msra.mxu0 0.0
        %2318 = vmatprep.subr.mxu0 0.0
        %2319 = vmatpush1.msra.mxu0 0.0
        %2320 = vmatprep.subr.mxu0 0.0
        %2321 = vmatpush1.msra.mxu0 0.0
        %2322 = vmatprep.subr.mxu0 0.0
        %2323 = vmatpush1.msra.mxu0 0.0
        %2324 = vmatprep.subr.mxu0 0.0
        %2325 = vmatpush1.msra.mxu0 0.0
        %2326 = vmatprep.subr.mxu0 0.0
        %2327 = vmatpush1.msra.mxu0 0.0
        %2328 = vmatprep.subr.mxu0 0.0
        %2329 = vmatpush1.msra.mxu0 0.0
        %2330 = vmatprep.subr.mxu0 0.0
        %2331 = vmatpush1.msra.mxu0 0.0
        %2332 = vmatprep.subr.mxu0 0.0
        %2333 = vmatpush1.msra.mxu0 %v1625
        %2334 = vmatprep.subr.mxu0 0.0
        %2335 = vmatpush1.msra.mxu0 %v1623
        %2336 = vmatprep.subr.mxu0 0.0
        %2337 = vmatpush2.msra.mxu0 0.0
        %2338 = vmatprep.subr.mxu0 0.0
        %2339 = vmatpush2.msra.mxu0 0.0
        %2340 = vmatprep.subr.mxu0 0.0
        %2341 = vmatpush2.msra.mxu0 0.0
        %2342 = vmatprep.subr.mxu0 0.0
        %2343 = vmatpush2.msra.mxu0 0.0
        %2344 = vmatprep.subr.mxu0 0.0
        %2345 = vmatpush2.msra.mxu0 0.0
        %2346 = vmatprep.subr.mxu0 0.0
        %2347 = vmatpush2.msra.mxu0 0.0
        %2348 = vmatprep.subr.mxu0 0.0
        %2349 = vmatpush2.msra.mxu0 0.0
        %2350 = vmatprep.subr.mxu0 0.0
        %2351 = vmatpush2.msra.mxu0 0.0
        %2352 = vmatprep.subr.mxu0 0.0
        %2353 = vmatpush2.msra.mxu0 0.0
        %2354 = vmatprep.subr.mxu0 0.0
        %2355 = vmatpush2.msra.mxu0 0.0
        %2356 = vmatprep.subr.mxu0 0.0
        %2357 = vmatpush2.msra.mxu0 0.0
        %2358 = vmatprep.subr.mxu0 0.0
        %2359 = vmatpush2.msra.mxu0 0.0
        %2360 = vmatprep.subr.mxu0 0.0
        %2361 = vmatpush2.msra.mxu0 0.0
        %2362 = vmatprep.subr.mxu0 0.0
        %2363 = vmatpush2.msra.mxu0 0.0
        %2364 = vmatprep.subr.mxu0 0.0
        %2365 = vmatpush2.msra.mxu0 0.0
        %2366 = vmatprep.subr.mxu0 0.0
        %2367 = vmatpush2.msra.mxu0 0.0
        %2368 = vmatprep.mubr.f32.mxu0 0.0
        %2369 = vmatmul.mubr.f32.gmra.mxu0 %v2299
        %v2370 = vpop.f32.mrf.mxu0
        %v2371 = vadd.f32 %v2175, %v2370
        %v2372 = vpop.f32.mrf.mxu0
        %2373 = vmatprep.mubr.f32.mxu0 0.0
        %2374 = vmatmul.mubr.f32.gmra.mxu0 %v2302
        %v2375 = vpop.f32.mrf.mxu0
        %v2376 = vadd.f32 %v2180, %v2375
        %v2377 = vpop.f32.mrf.mxu0
        %2378 = vdwg.mxu0
        %v2379 = vmul.f32 %v2371, %v2213
        %v2380 = vmul.f32 %v2376, %v2214
        %2383 = vrot.lane.b32.xlu0 %v2296, 20
        %v2384 = vpop.permute.xlu0 %2383
        %2385 = vrot.lane.b32.xlu0 %v2297, 20
        %v2386 = vpop.permute.xlu0 %2385
        %vm2389 = vcmask 195744
        %2390 = vst.msk [vmem:[#allocation3] sm:$0xff] %vm2389, %v2384
        %2391 = vst.msk [vmem:[#allocation3 + $0x8] sm:$0xff] %vm2389, %v2386
        %2394 = vrot.lane.b32.xlu0 %v2379, 36
        %v2395 = vpop.permute.xlu0 %2394
        %2396 = vrot.lane.b32.xlu0 %v2380, 36
        %v2397 = vpop.permute.xlu0 %2396
        %vm2400 = vcmask 326944
        %2401 = vst.msk [vmem:[#allocation3] sm:$0xff] %vm2400, %v2395
        %2402 = vst.msk [vmem:[#allocation3 + $0x8] sm:$0xff] %vm2400, %v2397
        %v2403 = vld [vmem:[#allocation2] sm:$0xff]
        %v2404 = vld [vmem:[#allocation2 + $0x10] sm:$0xff]
        %v2405 = vmul.f32 %v2403, 0.28867513
        %v2406 = vmul.f32 %v2404, 0.28867513
        %v2407 = vld [vmem:[#allocation2 + $0x8] sm:$0xff]
        %v2408 = vld [vmem:[#allocation2 + $0x18] sm:$0xff]
        %2411 = vrot.lane.b32.xlu0 %v2405, 100
        %v2412 = vpop.permute.xlu0 %2411
        %2413 = vrot.lane.b32.xlu0 %v2406, 100
        %v2414 = vpop.permute.xlu0 %2413
        %2417 = vrot.lane.b32.xlu0 %v2403, 56
        %v2418 = vpop.permute.xlu0 %2417
        %2419 = vrot.lane.b32.xlu0 %v2404, 56
        %v2420 = vpop.permute.xlu0 %2419
        %v2421 = vsel %vm405, %v2412, 0
        %v2423 = vsel %vm405, %v2414, 0
        %v2425 = vsel %vm405, %v2418, 0
        %v2427 = vsel %vm405, %v2420, 0
        %2429 = vmatprep.subr.mxu0 0.0
        %2430 = vmatpush1.xpose.msra.mxu0 0.0
        %2431 = vmatprep.subr.mxu0 0.0
        %2432 = vmatpush1.xpose.msra.mxu0 0.0
        %2433 = vmatprep.subr.mxu0 0.0
        %2434 = vmatpush1.xpose.msra.mxu0 0.0
        %2435 = vmatprep.subr.mxu0 0.0
        %2436 = vmatpush1.xpose.msra.mxu0 0.0
        %2437 = vmatprep.subr.mxu0 0.0
        %2438 = vmatpush1.xpose.msra.mxu0 0.0
        %2439 = vmatprep.subr.mxu0 0.0
        %2440 = vmatpush1.xpose.msra.mxu0 0.0
        %2441 = vmatprep.subr.mxu0 0.0
        %2442 = vmatpush1.xpose.msra.mxu0 0.0
        %2443 = vmatprep.subr.mxu0 0.0
        %2444 = vmatpush1.xpose.msra.mxu0 0.0
        %2445 = vmatprep.subr.mxu0 0.0
        %2446 = vmatpush1.xpose.msra.mxu0 0.0
        %2447 = vmatprep.subr.mxu0 0.0
        %2448 = vmatpush1.xpose.msra.mxu0 0.0
        %2449 = vmatprep.subr.mxu0 0.0
        %2450 = vmatpush1.xpose.msra.mxu0 0.0
        %2451 = vmatprep.subr.mxu0 0.0
        %2452 = vmatpush1.xpose.msra.mxu0 0.0
        %2453 = vmatprep.subr.mxu0 0.0
        %2454 = vmatpush1.xpose.msra.mxu0 0.0
        %2455 = vmatprep.subr.mxu0 0.0
        %2456 = vmatpush1.xpose.msra.mxu0 0.0
        %2457 = vmatprep.subr.mxu0 0.0
        %2458 = vmatpush1.xpose.msra.mxu0 %v2427
        %2459 = vmatprep.subr.mxu0 0.0
        %2460 = vmatpush1.xpose.msra.mxu0 %v2425
        %2461 = vmatprep.subr.mxu0 0.0
        %2462 = vmatpush2.xpose.msra.mxu0 0.0
        %2463 = vmatprep.subr.mxu0 0.0
        %2464 = vmatpush2.xpose.msra.mxu0 0.0
        %2465 = vmatprep.subr.mxu0 0.0
        %2466 = vmatpush2.xpose.msra.mxu0 0.0
        %2467 = vmatprep.subr.mxu0 0.0
        %2468 = vmatpush2.xpose.msra.mxu0 0.0
        %2469 = vmatprep.subr.mxu0 0.0
        %2470 = vmatpush2.xpose.msra.mxu0 0.0
        %2471 = vmatprep.subr.mxu0 0.0
        %2472 = vmatpush2.xpose.msra.mxu0 0.0
        %2473 = vmatprep.subr.mxu0 0.0
        %2474 = vmatpush2.xpose.msra.mxu0 0.0
        %2475 = vmatprep.subr.mxu0 0.0
        %2476 = vmatpush2.xpose.msra.mxu0 0.0
        %2477 = vmatprep.subr.mxu0 0.0
        %2478 = vmatpush2.xpose.msra.mxu0 0.0
        %2479 = vmatprep.subr.mxu0 0.0
        %2480 = vmatpush2.xpose.msra.mxu0 0.0
        %2481 = vmatprep.subr.mxu0 0.0
        %2482 = vmatpush2.xpose.msra.mxu0 0.0
        %2483 = vmatprep.subr.mxu0 0.0
        %2484 = vmatpush2.xpose.msra.mxu0 0.0
        %2485 = vmatprep.subr.mxu0 0.0
        %2486 = vmatpush2.xpose.msra.mxu0 0.0
        %2487 = vmatprep.subr.mxu0 0.0
        %2488 = vmatpush2.xpose.msra.mxu0 0.0
        %2489 = vmatprep.subr.mxu0 0.0
        %2490 = vmatpush2.xpose.msra.mxu0 0.0
        %2491 = vmatprep.subr.mxu0 0.0
        %2492 = vmatpush2.xpose.msra.mxu0 0.0
        %2493 = vmatprep.mubr.f32.mxu0 0.0
        %2494 = vmatmul.mubr.f32.gmra.mxu0 %v2421
        %v2495 = vpop.f32.mrf.mxu0
        %v2496 = vadd.f32 0.0, %v2495
        %v2497 = vpop.f32.mrf.mxu0
        %2498 = vmatprep.mubr.f32.mxu0 0.0
        %2499 = vmatmul.mubr.f32.gmra.mxu0 %v2423
        %v2500 = vpop.f32.mrf.mxu0
        %v2501 = vadd.f32 0.0, %v2500
        %v2502 = vpop.f32.mrf.mxu0
        %2503 = vdwg.mxu0
        %2504 = vrot.lane.b32.xlu0 %v2403, 52
        %v2505 = vpop.permute.xlu0 %2504
        %2506 = vrot.lane.b32.xlu0 %v2404, 52
        %v2507 = vpop.permute.xlu0 %2506
        %v2508 = vsel %vm405, %v2505, 0
        %v2510 = vsel %vm405, %v2507, 0
        %2512 = vmatprep.subr.mxu0 0.0
        %2513 = vmatpush1.xpose.msra.mxu0 0.0
        %2514 = vmatprep.subr.mxu0 0.0
        %2515 = vmatpush1.xpose.msra.mxu0 0.0
        %2516 = vmatprep.subr.mxu0 0.0
        %2517 = vmatpush1.xpose.msra.mxu0 0.0
        %2518 = vmatprep.subr.mxu0 0.0
        %2519 = vmatpush1.xpose.msra.mxu0 0.0
        %2520 = vmatprep.subr.mxu0 0.0
        %2521 = vmatpush1.xpose.msra.mxu0 0.0
        %2522 = vmatprep.subr.mxu0 0.0
        %2523 = vmatpush1.xpose.msra.mxu0 0.0
        %2524 = vmatprep.subr.mxu0 0.0
        %2525 = vmatpush1.xpose.msra.mxu0 0.0
        %2526 = vmatprep.subr.mxu0 0.0
        %2527 = vmatpush1.xpose.msra.mxu0 0.0
        %2528 = vmatprep.subr.mxu0 0.0
        %2529 = vmatpush1.xpose.msra.mxu0 0.0
        %2530 = vmatprep.subr.mxu0 0.0
        %2531 = vmatpush1.xpose.msra.mxu0 0.0
        %2532 = vmatprep.subr.mxu0 0.0
        %2533 = vmatpush1.xpose.msra.mxu0 0.0
        %2534 = vmatprep.subr.mxu0 0.0
        %2535 = vmatpush1.xpose.msra.mxu0 0.0
        %2536 = vmatprep.subr.mxu0 0.0
        %2537 = vmatpush1.xpose.msra.mxu0 0.0
        %2538 = vmatprep.subr.mxu0 0.0
        %2539 = vmatpush1.xpose.msra.mxu0 0.0
        %2540 = vmatprep.subr.mxu0 0.0
        %2541 = vmatpush1.xpose.msra.mxu0 %v2510
        %2542 = vmatprep.subr.mxu0 0.0
        %2543 = vmatpush1.xpose.msra.mxu0 %v2508
        %2544 = vmatprep.subr.mxu0 0.0
        %2545 = vmatpush2.xpose.msra.mxu0 0.0
        %2546 = vmatprep.subr.mxu0 0.0
        %2547 = vmatpush2.xpose.msra.mxu0 0.0
        %2548 = vmatprep.subr.mxu0 0.0
        %2549 = vmatpush2.xpose.msra.mxu0 0.0
        %2550 = vmatprep.subr.mxu0 0.0
        %2551 = vmatpush2.xpose.msra.mxu0 0.0
        %2552 = vmatprep.subr.mxu0 0.0
        %2553 = vmatpush2.xpose.msra.mxu0 0.0
        %2554 = vmatprep.subr.mxu0 0.0
        %2555 = vmatpush2.xpose.msra.mxu0 0.0
        %2556 = vmatprep.subr.mxu0 0.0
        %2557 = vmatpush2.xpose.msra.mxu0 0.0
        %2558 = vmatprep.subr.mxu0 0.0
        %2559 = vmatpush2.xpose.msra.mxu0 0.0
        %2560 = vmatprep.subr.mxu0 0.0
        %2561 = vmatpush2.xpose.msra.mxu0 0.0
        %2562 = vmatprep.subr.mxu0 0.0
        %2563 = vmatpush2.xpose.msra.mxu0 0.0
        %2564 = vmatprep.subr.mxu0 0.0
        %2565 = vmatpush2.xpose.msra.mxu0 0.0
        %2566 = vmatprep.subr.mxu0 0.0
        %2567 = vmatpush2.xpose.msra.mxu0 0.0
        %2568 = vmatprep.subr.mxu0 0.0
        %2569 = vmatpush2.xpose.msra.mxu0 0.0
        %2570 = vmatprep.subr.mxu0 0.0
        %2571 = vmatpush2.xpose.msra.mxu0 0.0
        %2572 = vmatprep.subr.mxu0 0.0
        %2573 = vmatpush2.xpose.msra.mxu0 0.0
        %2574 = vmatprep.subr.mxu0 0.0
        %2575 = vmatpush2.xpose.msra.mxu0 0.0
        %2576 = vmatprep.mubr.f32.mxu0 0.0
        %2577 = vmatmul.mubr.f32.gmra.mxu0 %v2421
        %v2578 = vpop.f32.mrf.mxu0
        %v2579 = vadd.f32 0.0, %v2578
        %v2580 = vpop.f32.mrf.mxu0
        %2581 = vmatprep.mubr.f32.mxu0 0.0
        %2582 = vmatmul.mubr.f32.gmra.mxu0 %v2423
        %v2583 = vpop.f32.mrf.mxu0
        %v2584 = vadd.f32 0.0, %v2583
        %v2585 = vpop.f32.mrf.mxu0
        %2586 = vdwg.mxu0
        %v2587 = vsel %vm385, %v2496, -inf
        %2588 = vmax.xlane.f32.xlu0 %v2587
        %v2589 = vpop.xlane.xlu0 %2588
        %v2590 = vsel %vm385, %v2501, -inf
        %2591 = vmax.xlane.f32.xlu0 %v2590
        %v2592 = vpop.xlane.xlu0 %2591
        %v2593 = vsel %vm385, %v2579, -inf
        %2594 = vmax.xlane.f32.xlu0 %v2593
        %v2595 = vpop.xlane.xlu0 %2594
        %v2596 = vsel %vm385, %v2584, -inf
        %2597 = vmax.xlane.f32.xlu0 %v2596
        %v2598 = vpop.xlane.xlu0 %2597
        %v2599 = vmax.f32 %v2589, %v2595
        %v2600 = vmax.f32 %v2592, %v2598
        %v2601 = vsub.f32 %v2496, %v2599
        %v2602 = vsub.f32 %v2501, %v2600
        %v2603 = vmul.f32 %v2601, 1.442695
        %v2604 = vpow.pop %v2603
        %v2605 = vmul.f32 %v2602, 1.442695
        %v2606 = vpow.pop %v2605
        %v2607 = vsub.f32 %v2579, %v2599
        %v2608 = vsub.f32 %v2584, %v2600
        %v2609 = vmul.f32 %v2607, 1.442695
        %v2610 = vpow.pop %v2609
        %v2611 = vmul.f32 %v2608, 1.442695
        %v2612 = vpow.pop %v2611
        %v2613 = vsel %vm385, %v2604, 0.0
        %2614 = vadd.xlane.f32.xlu0 %v2613
        %v2615 = vpop.xlane.xlu0 %2614
        %v2616 = vsel %vm385, %v2606, 0.0
        %2617 = vadd.xlane.f32.xlu0 %v2616
        %v2618 = vpop.xlane.xlu0 %2617
        %v2619 = vsel %vm385, %v2610, 0.0
        %2620 = vadd.xlane.f32.xlu0 %v2619
        %v2621 = vpop.xlane.xlu0 %2620
        %v2622 = vsel %vm385, %v2612, 0.0
        %2623 = vadd.xlane.f32.xlu0 %v2622
        %v2624 = vpop.xlane.xlu0 %2623
        %v2625 = vadd.f32 %v2615, %v2621
        %v2626 = vadd.f32 %v2618, %v2624
        %v2627 = vrcp.pop %v2625
        %v2628 = vrcp.pop %v2626
        %v2629 = vmul.f32 %v2625, %v2627
        %v2630 = vmul.f32 %v2626, %v2628
        %v2631 = vsub.f32 2.0, %v2629
        %v2632 = vsub.f32 2.0, %v2630
        %v2633 = vmul.f32 %v2627, %v2631
        %v2634 = vmul.f32 %v2628, %v2632
        %2635 = vrot.lane.b32.xlu0 %v2403, 4
        %v2636 = vpop.permute.xlu0 %2635
        %2637 = vrot.lane.b32.xlu0 %v2404, 4
        %v2638 = vpop.permute.xlu0 %2637
        %v2642 = vsel %vm385, %v2610, 0
        %v2645 = vsel %vm385, %v2612, 0
        %2647 = vmatprep.subr.mxu0 0.0
        %2648 = vmatpush1.msra.mxu0 0.0
        %2649 = vmatprep.subr.mxu0 0.0
        %2650 = vmatpush1.msra.mxu0 0.0
        %2651 = vmatprep.subr.mxu0 0.0
        %2652 = vmatpush1.msra.mxu0 0.0
        %2653 = vmatprep.subr.mxu0 0.0
        %2654 = vmatpush1.msra.mxu0 0.0
        %2655 = vmatprep.subr.mxu0 0.0
        %2656 = vmatpush1.msra.mxu0 0.0
        %2657 = vmatprep.subr.mxu0 0.0
        %2658 = vmatpush1.msra.mxu0 0.0
        %2659 = vmatprep.subr.mxu0 0.0
        %2660 = vmatpush1.msra.mxu0 0.0
        %2661 = vmatprep.subr.mxu0 0.0
        %2662 = vmatpush1.msra.mxu0 0.0
        %2663 = vmatprep.subr.mxu0 0.0
        %2664 = vmatpush1.msra.mxu0 0.0
        %2665 = vmatprep.subr.mxu0 0.0
        %2666 = vmatpush1.msra.mxu0 0.0
        %2667 = vmatprep.subr.mxu0 0.0
        %2668 = vmatpush1.msra.mxu0 0.0
        %2669 = vmatprep.subr.mxu0 0.0
        %2670 = vmatpush1.msra.mxu0 0.0
        %2671 = vmatprep.subr.mxu0 0.0
        %2672 = vmatpush1.msra.mxu0 0.0
        %2673 = vmatprep.subr.mxu0 0.0
        %2674 = vmatpush1.msra.mxu0 0.0
        %2675 = vmatprep.subr.mxu0 0.0
        %2676 = vmatpush1.msra.mxu0 %v2638
        %2677 = vmatprep.subr.mxu0 0.0
        %2678 = vmatpush1.msra.mxu0 %v2636
        %2679 = vmatprep.subr.mxu0 0.0
        %2680 = vmatpush2.msra.mxu0 0.0
        %2681 = vmatprep.subr.mxu0 0.0
        %2682 = vmatpush2.msra.mxu0 0.0
        %2683 = vmatprep.subr.mxu0 0.0
        %2684 = vmatpush2.msra.mxu0 0.0
        %2685 = vmatprep.subr.mxu0 0.0
        %2686 = vmatpush2.msra.mxu0 0.0
        %2687 = vmatprep.subr.mxu0 0.0
        %2688 = vmatpush2.msra.mxu0 0.0
        %2689 = vmatprep.subr.mxu0 0.0
        %2690 = vmatpush2.msra.mxu0 0.0
        %2691 = vmatprep.subr.mxu0 0.0
        %2692 = vmatpush2.msra.mxu0 0.0
        %2693 = vmatprep.subr.mxu0 0.0
        %2694 = vmatpush2.msra.mxu0 0.0
        %2695 = vmatprep.subr.mxu0 0.0
        %2696 = vmatpush2.msra.mxu0 0.0
        %2697 = vmatprep.subr.mxu0 0.0
        %2698 = vmatpush2.msra.mxu0 0.0
        %2699 = vmatprep.subr.mxu0 0.0
        %2700 = vmatpush2.msra.mxu0 0.0
        %2701 = vmatprep.subr.mxu0 0.0
        %2702 = vmatpush2.msra.mxu0 0.0
        %2703 = vmatprep.subr.mxu0 0.0
        %2704 = vmatpush2.msra.mxu0 0.0
        %2705 = vmatprep.subr.mxu0 0.0
        %2706 = vmatpush2.msra.mxu0 0.0
        %2707 = vmatprep.subr.mxu0 0.0
        %2708 = vmatpush2.msra.mxu0 0.0
        %2709 = vmatprep.subr.mxu0 0.0
        %2710 = vmatpush2.msra.mxu0 0.0
        %2711 = vmatprep.mubr.f32.mxu0 0.0
        %2712 = vmatmul.mubr.f32.gmra.mxu0 %v2642
        %v2713 = vpop.f32.mrf.mxu0
        %v2714 = vadd.f32 0.0, %v2713
        %v2715 = vpop.f32.mrf.mxu0
        %2716 = vmatprep.mubr.f32.mxu0 0.0
        %2717 = vmatmul.mubr.f32.gmra.mxu0 %v2645
        %v2718 = vpop.f32.mrf.mxu0
        %v2719 = vadd.f32 0.0, %v2718
        %v2720 = vpop.f32.mrf.mxu0
        %2721 = vdwg.mxu0
        %2722 = vrot.lane.b32.xlu0 %v2403, 8
        %v2723 = vpop.permute.xlu0 %2722
        %2724 = vrot.lane.b32.xlu0 %v2404, 8
        %v2725 = vpop.permute.xlu0 %2724
        %v2729 = vsel %vm385, %v2604, 0
        %v2732 = vsel %vm385, %v2606, 0
        %2734 = vmatprep.subr.mxu0 0.0
        %2735 = vmatpush1.msra.mxu0 0.0
        %2736 = vmatprep.subr.mxu0 0.0
        %2737 = vmatpush1.msra.mxu0 0.0
        %2738 = vmatprep.subr.mxu0 0.0
        %2739 = vmatpush1.msra.mxu0 0.0
        %2740 = vmatprep.subr.mxu0 0.0
        %2741 = vmatpush1.msra.mxu0 0.0
        %2742 = vmatprep.subr.mxu0 0.0
        %2743 = vmatpush1.msra.mxu0 0.0
        %2744 = vmatprep.subr.mxu0 0.0
        %2745 = vmatpush1.msra.mxu0 0.0
        %2746 = vmatprep.subr.mxu0 0.0
        %2747 = vmatpush1.msra.mxu0 0.0
        %2748 = vmatprep.subr.mxu0 0.0
        %2749 = vmatpush1.msra.mxu0 0.0
        %2750 = vmatprep.subr.mxu0 0.0
        %2751 = vmatpush1.msra.mxu0 0.0
        %2752 = vmatprep.subr.mxu0 0.0
        %2753 = vmatpush1.msra.mxu0 0.0
        %2754 = vmatprep.subr.mxu0 0.0
        %2755 = vmatpush1.msra.mxu0 0.0
        %2756 = vmatprep.subr.mxu0 0.0
        %2757 = vmatpush1.msra.mxu0 0.0
        %2758 = vmatprep.subr.mxu0 0.0
        %2759 = vmatpush1.msra.mxu0 0.0
        %2760 = vmatprep.subr.mxu0 0.0
        %2761 = vmatpush1.msra.mxu0 0.0
        %2762 = vmatprep.subr.mxu0 0.0
        %2763 = vmatpush1.msra.mxu0 %v2725
        %2764 = vmatprep.subr.mxu0 0.0
        %2765 = vmatpush1.msra.mxu0 %v2723
        %2766 = vmatprep.subr.mxu0 0.0
        %2767 = vmatpush2.msra.mxu0 0.0
        %2768 = vmatprep.subr.mxu0 0.0
        %2769 = vmatpush2.msra.mxu0 0.0
        %2770 = vmatprep.subr.mxu0 0.0
        %2771 = vmatpush2.msra.mxu0 0.0
        %2772 = vmatprep.subr.mxu0 0.0
        %2773 = vmatpush2.msra.mxu0 0.0
        %2774 = vmatprep.subr.mxu0 0.0
        %2775 = vmatpush2.msra.mxu0 0.0
        %2776 = vmatprep.subr.mxu0 0.0
        %2777 = vmatpush2.msra.mxu0 0.0
        %2778 = vmatprep.subr.mxu0 0.0
        %2779 = vmatpush2.msra.mxu0 0.0
        %2780 = vmatprep.subr.mxu0 0.0
        %2781 = vmatpush2.msra.mxu0 0.0
        %2782 = vmatprep.subr.mxu0 0.0
        %2783 = vmatpush2.msra.mxu0 0.0
        %2784 = vmatprep.subr.mxu0 0.0
        %2785 = vmatpush2.msra.mxu0 0.0
        %2786 = vmatprep.subr.mxu0 0.0
        %2787 = vmatpush2.msra.mxu0 0.0
        %2788 = vmatprep.subr.mxu0 0.0
        %2789 = vmatpush2.msra.mxu0 0.0
        %2790 = vmatprep.subr.mxu0 0.0
        %2791 = vmatpush2.msra.mxu0 0.0
        %2792 = vmatprep.subr.mxu0 0.0
        %2793 = vmatpush2.msra.mxu0 0.0
        %2794 = vmatprep.subr.mxu0 0.0
        %2795 = vmatpush2.msra.mxu0 0.0
        %2796 = vmatprep.subr.mxu0 0.0
        %2797 = vmatpush2.msra.mxu0 0.0
        %2798 = vmatprep.mubr.f32.mxu0 0.0
        %2799 = vmatmul.mubr.f32.gmra.mxu0 %v2729
        %v2800 = vpop.f32.mrf.mxu0
        %v2801 = vadd.f32 %v2714, %v2800
        %v2802 = vpop.f32.mrf.mxu0
        %2803 = vmatprep.mubr.f32.mxu0 0.0
        %2804 = vmatmul.mubr.f32.gmra.mxu0 %v2732
        %v2805 = vpop.f32.mrf.mxu0
        %v2806 = vadd.f32 %v2719, %v2805
        %v2807 = vpop.f32.mrf.mxu0
        %2808 = vdwg.mxu0
        %v2809 = vmul.f32 %v2801, %v2633
        %v2810 = vmul.f32 %v2806, %v2634
        %2813 = vrot.lane.b32.xlu0 %v2809, 8
        %v2814 = vpop.permute.xlu0 %2813
        %2815 = vrot.lane.b32.xlu0 %v2810, 8
        %v2816 = vpop.permute.xlu0 %2815
        %vm2819 = vcmask 97344
        %2820 = vst.msk [vmem:[#allocation3] sm:$0xff] %vm2819, %v2814
        %2821 = vst.msk [vmem:[#allocation3 + $0x8] sm:$0xff] %vm2819, %v2816
        %2822 = vrot.lane.b32.xlu0 %v2405, 96
        %v2823 = vpop.permute.xlu0 %2822
        %2824 = vrot.lane.b32.xlu0 %v2406, 96
        %v2825 = vpop.permute.xlu0 %2824
        %v2826 = vsel %vm405, %v2823, 0
        %v2828 = vsel %vm405, %v2825, 0
        %2830 = vmatprep.subr.mxu0 0.0
        %2831 = vmatpush1.xpose.msra.mxu0 0.0
        %2832 = vmatprep.subr.mxu0 0.0
        %2833 = vmatpush1.xpose.msra.mxu0 0.0
        %2834 = vmatprep.subr.mxu0 0.0
        %2835 = vmatpush1.xpose.msra.mxu0 0.0
        %2836 = vmatprep.subr.mxu0 0.0
        %2837 = vmatpush1.xpose.msra.mxu0 0.0
        %2838 = vmatprep.subr.mxu0 0.0
        %2839 = vmatpush1.xpose.msra.mxu0 0.0
        %2840 = vmatprep.subr.mxu0 0.0
        %2841 = vmatpush1.xpose.msra.mxu0 0.0
        %2842 = vmatprep.subr.mxu0 0.0
        %2843 = vmatpush1.xpose.msra.mxu0 0.0
        %2844 = vmatprep.subr.mxu0 0.0
        %2845 = vmatpush1.xpose.msra.mxu0 0.0
        %2846 = vmatprep.subr.mxu0 0.0
        %2847 = vmatpush1.xpose.msra.mxu0 0.0
        %2848 = vmatprep.subr.mxu0 0.0
        %2849 = vmatpush1.xpose.msra.mxu0 0.0
        %2850 = vmatprep.subr.mxu0 0.0
        %2851 = vmatpush1.xpose.msra.mxu0 0.0
        %2852 = vmatprep.subr.mxu0 0.0
        %2853 = vmatpush1.xpose.msra.mxu0 0.0
        %2854 = vmatprep.subr.mxu0 0.0
        %2855 = vmatpush1.xpose.msra.mxu0 0.0
        %2856 = vmatprep.subr.mxu0 0.0
        %2857 = vmatpush1.xpose.msra.mxu0 0.0
        %2858 = vmatprep.subr.mxu0 0.0
        %2859 = vmatpush1.xpose.msra.mxu0 %v2427
        %2860 = vmatprep.subr.mxu0 0.0
        %2861 = vmatpush1.xpose.msra.mxu0 %v2425
        %2862 = vmatprep.subr.mxu0 0.0
        %2863 = vmatpush2.xpose.msra.mxu0 0.0
        %2864 = vmatprep.subr.mxu0 0.0
        %2865 = vmatpush2.xpose.msra.mxu0 0.0
        %2866 = vmatprep.subr.mxu0 0.0
        %2867 = vmatpush2.xpose.msra.mxu0 0.0
        %2868 = vmatprep.subr.mxu0 0.0
        %2869 = vmatpush2.xpose.msra.mxu0 0.0
        %2870 = vmatprep.subr.mxu0 0.0
        %2871 = vmatpush2.xpose.msra.mxu0 0.0
        %2872 = vmatprep.subr.mxu0 0.0
        %2873 = vmatpush2.xpose.msra.mxu0 0.0
        %2874 = vmatprep.subr.mxu0 0.0
        %2875 = vmatpush2.xpose.msra.mxu0 0.0
        %2876 = vmatprep.subr.mxu0 0.0
        %2877 = vmatpush2.xpose.msra.mxu0 0.0
        %2878 = vmatprep.subr.mxu0 0.0
        %2879 = vmatpush2.xpose.msra.mxu0 0.0
        %2880 = vmatprep.subr.mxu0 0.0
        %2881 = vmatpush2.xpose.msra.mxu0 0.0
        %2882 = vmatprep.subr.mxu0 0.0
        %2883 = vmatpush2.xpose.msra.mxu0 0.0
        %2884 = vmatprep.subr.mxu0 0.0
        %2885 = vmatpush2.xpose.msra.mxu0 0.0
        %2886 = vmatprep.subr.mxu0 0.0
        %2887 = vmatpush2.xpose.msra.mxu0 0.0
        %2888 = vmatprep.subr.mxu0 0.0
        %2889 = vmatpush2.xpose.msra.mxu0 0.0
        %2890 = vmatprep.subr.mxu0 0.0
        %2891 = vmatpush2.xpose.msra.mxu0 0.0
        %2892 = vmatprep.subr.mxu0 0.0
        %2893 = vmatpush2.xpose.msra.mxu0 0.0
        %2894 = vmatprep.mubr.f32.mxu0 0.0
        %2895 = vmatmul.mubr.f32.gmra.mxu0 %v2826
        %v2896 = vpop.f32.mrf.mxu0
        %v2897 = vadd.f32 0.0, %v2896
        %v2898 = vpop.f32.mrf.mxu0
        %2899 = vmatprep.mubr.f32.mxu0 0.0
        %2900 = vmatmul.mubr.f32.gmra.mxu0 %v2828
        %v2901 = vpop.f32.mrf.mxu0
        %v2902 = vadd.f32 0.0, %v2901
        %v2903 = vpop.f32.mrf.mxu0
        %2904 = vdwg.mxu0
        %2905 = vmatprep.subr.mxu0 0.0
        %2906 = vmatpush1.xpose.msra.mxu0 0.0
        %2907 = vmatprep.subr.mxu0 0.0
        %2908 = vmatpush1.xpose.msra.mxu0 0.0
        %2909 = vmatprep.subr.mxu0 0.0
        %2910 = vmatpush1.xpose.msra.mxu0 0.0
        %2911 = vmatprep.subr.mxu0 0.0
        %2912 = vmatpush1.xpose.msra.mxu0 0.0
        %2913 = vmatprep.subr.mxu0 0.0
        %2914 = vmatpush1.xpose.msra.mxu0 0.0
        %2915 = vmatprep.subr.mxu0 0.0
        %2916 = vmatpush1.xpose.msra.mxu0 0.0
        %2917 = vmatprep.subr.mxu0 0.0
        %2918 = vmatpush1.xpose.msra.mxu0 0.0
        %2919 = vmatprep.subr.mxu0 0.0
        %2920 = vmatpush1.xpose.msra.mxu0 0.0
        %2921 = vmatprep.subr.mxu0 0.0
        %2922 = vmatpush1.xpose.msra.mxu0 0.0
        %2923 = vmatprep.subr.mxu0 0.0
        %2924 = vmatpush1.xpose.msra.mxu0 0.0
        %2925 = vmatprep.subr.mxu0 0.0
        %2926 = vmatpush1.xpose.msra.mxu0 0.0
        %2927 = vmatprep.subr.mxu0 0.0
        %2928 = vmatpush1.xpose.msra.mxu0 0.0
        %2929 = vmatprep.subr.mxu0 0.0
        %2930 = vmatpush1.xpose.msra.mxu0 0.0
        %2931 = vmatprep.subr.mxu0 0.0
        %2932 = vmatpush1.xpose.msra.mxu0 0.0
        %2933 = vmatprep.subr.mxu0 0.0
        %2934 = vmatpush1.xpose.msra.mxu0 %v2510
        %2935 = vmatprep.subr.mxu0 0.0
        %2936 = vmatpush1.xpose.msra.mxu0 %v2508
        %2937 = vmatprep.subr.mxu0 0.0
        %2938 = vmatpush2.xpose.msra.mxu0 0.0
        %2939 = vmatprep.subr.mxu0 0.0
        %2940 = vmatpush2.xpose.msra.mxu0 0.0
        %2941 = vmatprep.subr.mxu0 0.0
        %2942 = vmatpush2.xpose.msra.mxu0 0.0
        %2943 = vmatprep.subr.mxu0 0.0
        %2944 = vmatpush2.xpose.msra.mxu0 0.0
        %2945 = vmatprep.subr.mxu0 0.0
        %2946 = vmatpush2.xpose.msra.mxu0 0.0
        %2947 = vmatprep.subr.mxu0 0.0
        %2948 = vmatpush2.xpose.msra.mxu0 0.0
        %2949 = vmatprep.subr.mxu0 0.0
        %2950 = vmatpush2.xpose.msra.mxu0 0.0
        %2951 = vmatprep.subr.mxu0 0.0
        %2952 = vmatpush2.xpose.msra.mxu0 0.0
        %2953 = vmatprep.subr.mxu0 0.0
        %2954 = vmatpush2.xpose.msra.mxu0 0.0
        %2955 = vmatprep.subr.mxu0 0.0
        %2956 = vmatpush2.xpose.msra.mxu0 0.0
        %2957 = vmatprep.subr.mxu0 0.0
        %2958 = vmatpush2.xpose.msra.mxu0 0.0
        %2959 = vmatprep.subr.mxu0 0.0
        %2960 = vmatpush2.xpose.msra.mxu0 0.0
        %2961 = vmatprep.subr.mxu0 0.0
        %2962 = vmatpush2.xpose.msra.mxu0 0.0
        %2963 = vmatprep.subr.mxu0 0.0
        %2964 = vmatpush2.xpose.msra.mxu0 0.0
        %2965 = vmatprep.subr.mxu0 0.0
        %2966 = vmatpush2.xpose.msra.mxu0 0.0
        %2967 = vmatprep.subr.mxu0 0.0
        %2968 = vmatpush2.xpose.msra.mxu0 0.0
        %2969 = vmatprep.mubr.f32.mxu0 0.0
        %2970 = vmatmul.mubr.f32.gmra.mxu0 %v2826
        %v2971 = vpop.f32.mrf.mxu0
        %v2972 = vadd.f32 0.0, %v2971
        %v2973 = vpop.f32.mrf.mxu0
        %2974 = vmatprep.mubr.f32.mxu0 0.0
        %2975 = vmatmul.mubr.f32.gmra.mxu0 %v2828
        %v2976 = vpop.f32.mrf.mxu0
        %v2977 = vadd.f32 0.0, %v2976
        %v2978 = vpop.f32.mrf.mxu0
        %2979 = vdwg.mxu0
        %2980 = vrot.lane.b32.xlu0 %v2403, 48
        %v2981 = vpop.permute.xlu0 %2980
        %2982 = vrot.lane.b32.xlu0 %v2404, 48
        %v2983 = vpop.permute.xlu0 %2982
        %v2984 = vsel %vm405, %v2981, 0
        %v2986 = vsel %vm405, %v2983, 0
        %2988 = vmatprep.subr.mxu0 0.0
        %2989 = vmatpush1.xpose.msra.mxu0 0.0
        %2990 = vmatprep.subr.mxu0 0.0
        %2991 = vmatpush1.xpose.msra.mxu0 0.0
        %2992 = vmatprep.subr.mxu0 0.0
        %2993 = vmatpush1.xpose.msra.mxu0 0.0
        %2994 = vmatprep.subr.mxu0 0.0
        %2995 = vmatpush1.xpose.msra.mxu0 0.0
        %2996 = vmatprep.subr.mxu0 0.0
        %2997 = vmatpush1.xpose.msra.mxu0 0.0
        %2998 = vmatprep.subr.mxu0 0.0
        %2999 = vmatpush1.xpose.msra.mxu0 0.0
        %3000 = vmatprep.subr.mxu0 0.0
        %3001 = vmatpush1.xpose.msra.mxu0 0.0
        %3002 = vmatprep.subr.mxu0 0.0
        %3003 = vmatpush1.xpose.msra.mxu0 0.0
        %3004 = vmatprep.subr.mxu0 0.0
        %3005 = vmatpush1.xpose.msra.mxu0 0.0
        %3006 = vmatprep.subr.mxu0 0.0
        %3007 = vmatpush1.xpose.msra.mxu0 0.0
        %3008 = vmatprep.subr.mxu0 0.0
        %3009 = vmatpush1.xpose.msra.mxu0 0.0
        %3010 = vmatprep.subr.mxu0 0.0
        %3011 = vmatpush1.xpose.msra.mxu0 0.0
        %3012 = vmatprep.subr.mxu0 0.0
        %3013 = vmatpush1.xpose.msra.mxu0 0.0
        %3014 = vmatprep.subr.mxu0 0.0
        %3015 = vmatpush1.xpose.msra.mxu0 0.0
        %3016 = vmatprep.subr.mxu0 0.0
        %3017 = vmatpush1.xpose.msra.mxu0 %v2986
        %3018 = vmatprep.subr.mxu0 0.0
        %3019 = vmatpush1.xpose.msra.mxu0 %v2984
        %3020 = vmatprep.subr.mxu0 0.0
        %3021 = vmatpush2.xpose.msra.mxu0 0.0
        %3022 = vmatprep.subr.mxu0 0.0
        %3023 = vmatpush2.xpose.msra.mxu0 0.0
        %3024 = vmatprep.subr.mxu0 0.0
        %3025 = vmatpush2.xpose.msra.mxu0 0.0
        %3026 = vmatprep.subr.mxu0 0.0
        %3027 = vmatpush2.xpose.msra.mxu0 0.0
        %3028 = vmatprep.subr.mxu0 0.0
        %3029 = vmatpush2.xpose.msra.mxu0 0.0
        %3030 = vmatprep.subr.mxu0 0.0
        %3031 = vmatpush2.xpose.msra.mxu0 0.0
        %3032 = vmatprep.subr.mxu0 0.0
        %3033 = vmatpush2.xpose.msra.mxu0 0.0
        %3034 = vmatprep.subr.mxu0 0.0
        %3035 = vmatpush2.xpose.msra.mxu0 0.0
        %3036 = vmatprep.subr.mxu0 0.0
        %3037 = vmatpush2.xpose.msra.mxu0 0.0
        %3038 = vmatprep.subr.mxu0 0.0
        %3039 = vmatpush2.xpose.msra.mxu0 0.0
        %3040 = vmatprep.subr.mxu0 0.0
        %3041 = vmatpush2.xpose.msra.mxu0 0.0
        %3042 = vmatprep.subr.mxu0 0.0
        %3043 = vmatpush2.xpose.msra.mxu0 0.0
        %3044 = vmatprep.subr.mxu0 0.0
        %3045 = vmatpush2.xpose.msra.mxu0 0.0
        %3046 = vmatprep.subr.mxu0 0.0
        %3047 = vmatpush2.xpose.msra.mxu0 0.0
        %3048 = vmatprep.subr.mxu0 0.0
        %3049 = vmatpush2.xpose.msra.mxu0 0.0
        %3050 = vmatprep.subr.mxu0 0.0
        %3051 = vmatpush2.xpose.msra.mxu0 0.0
        %3052 = vmatprep.mubr.f32.mxu0 0.0
        %3053 = vmatmul.mubr.f32.gmra.mxu0 %v2826
        %v3054 = vpop.f32.mrf.mxu0
        %v3055 = vadd.f32 0.0, %v3054
        %v3056 = vpop.f32.mrf.mxu0
        %3057 = vmatprep.mubr.f32.mxu0 0.0
        %3058 = vmatmul.mubr.f32.gmra.mxu0 %v2828
        %v3059 = vpop.f32.mrf.mxu0
        %v3060 = vadd.f32 0.0, %v3059
        %v3061 = vpop.f32.mrf.mxu0
        %3062 = vdwg.mxu0
        %v3063 = vsel %vm385, %v2897, -inf
        %3064 = vmax.xlane.f32.xlu0 %v3063
        %v3065 = vpop.xlane.xlu0 %3064
        %v3066 = vsel %vm385, %v2902, -inf
        %3067 = vmax.xlane.f32.xlu0 %v3066
        %v3068 = vpop.xlane.xlu0 %3067
        %v3069 = vsel %vm385, %v2972, -inf
        %3070 = vmax.xlane.f32.xlu0 %v3069
        %v3071 = vpop.xlane.xlu0 %3070
        %v3072 = vsel %vm385, %v2977, -inf
        %3073 = vmax.xlane.f32.xlu0 %v3072
        %v3074 = vpop.xlane.xlu0 %3073
        %v3075 = vmax.f32 %v3065, %v3071
        %v3076 = vmax.f32 %v3068, %v3074
        %v3077 = vsel %vm385, %v3055, -inf
        %3078 = vmax.xlane.f32.xlu0 %v3077
        %v3079 = vpop.xlane.xlu0 %3078
        %v3080 = vsel %vm385, %v3060, -inf
        %3081 = vmax.xlane.f32.xlu0 %v3080
        %v3082 = vpop.xlane.xlu0 %3081
        %v3083 = vmax.f32 %v3075, %v3079
        %v3084 = vmax.f32 %v3076, %v3082
        %v3085 = vsub.f32 %v2897, %v3083
        %v3086 = vsub.f32 %v2902, %v3084
        %v3087 = vmul.f32 %v3085, 1.442695
        %v3088 = vpow.pop %v3087
        %v3089 = vmul.f32 %v3086, 1.442695
        %v3090 = vpow.pop %v3089
        %v3091 = vsub.f32 %v2972, %v3083
        %v3092 = vsub.f32 %v2977, %v3084
        %v3093 = vmul.f32 %v3091, 1.442695
        %v3094 = vpow.pop %v3093
        %v3095 = vmul.f32 %v3092, 1.442695
        %v3096 = vpow.pop %v3095
        %v3097 = vsub.f32 %v3055, %v3083
        %v3098 = vsub.f32 %v3060, %v3084
        %v3099 = vmul.f32 %v3097, 1.442695
        %v3100 = vpow.pop %v3099
        %v3101 = vmul.f32 %v3098, 1.442695
        %v3102 = vpow.pop %v3101
        %v3103 = vsel %vm385, %v3100, 0.0
        %3104 = vadd.xlane.f32.xlu0 %v3103
        %v3105 = vpop.xlane.xlu0 %3104
        %v3106 = vsel %vm385, %v3102, 0.0
        %3107 = vadd.xlane.f32.xlu0 %v3106
        %v3108 = vpop.xlane.xlu0 %3107
        %v3110 = vsel %vm385, %v3100, 0
        %v3113 = vsel %vm385, %v3102, 0
        %3115 = vmatprep.subr.mxu0 0.0
        %3116 = vmatpush1.msra.mxu0 0.0
        %3117 = vmatprep.subr.mxu0 0.0
        %3118 = vmatpush1.msra.mxu0 0.0
        %3119 = vmatprep.subr.mxu0 0.0
        %3120 = vmatpush1.msra.mxu0 0.0
        %3121 = vmatprep.subr.mxu0 0.0
        %3122 = vmatpush1.msra.mxu0 0.0
        %3123 = vmatprep.subr.mxu0 0.0
        %3124 = vmatpush1.msra.mxu0 0.0
        %3125 = vmatprep.subr.mxu0 0.0
        %3126 = vmatpush1.msra.mxu0 0.0
        %3127 = vmatprep.subr.mxu0 0.0
        %3128 = vmatpush1.msra.mxu0 0.0
        %3129 = vmatprep.subr.mxu0 0.0
        %3130 = vmatpush1.msra.mxu0 0.0
        %3131 = vmatprep.subr.mxu0 0.0
        %3132 = vmatpush1.msra.mxu0 0.0
        %3133 = vmatprep.subr.mxu0 0.0
        %3134 = vmatpush1.msra.mxu0 0.0
        %3135 = vmatprep.subr.mxu0 0.0
        %3136 = vmatpush1.msra.mxu0 0.0
        %3137 = vmatprep.subr.mxu0 0.0
        %3138 = vmatpush1.msra.mxu0 0.0
        %3139 = vmatprep.subr.mxu0 0.0
        %3140 = vmatpush1.msra.mxu0 0.0
        %3141 = vmatprep.subr.mxu0 0.0
        %3142 = vmatpush1.msra.mxu0 0.0
        %3143 = vmatprep.subr.mxu0 0.0
        %3144 = vmatpush1.msra.mxu0 %v2408
        %3145 = vmatprep.subr.mxu0 0.0
        %3146 = vmatpush1.msra.mxu0 %v2407
        %3147 = vmatprep.subr.mxu0 0.0
        %3148 = vmatpush2.msra.mxu0 0.0
        %3149 = vmatprep.subr.mxu0 0.0
        %3150 = vmatpush2.msra.mxu0 0.0
        %3151 = vmatprep.subr.mxu0 0.0
        %3152 = vmatpush2.msra.mxu0 0.0
        %3153 = vmatprep.subr.mxu0 0.0
        %3154 = vmatpush2.msra.mxu0 0.0
        %3155 = vmatprep.subr.mxu0 0.0
        %3156 = vmatpush2.msra.mxu0 0.0
        %3157 = vmatprep.subr.mxu0 0.0
        %3158 = vmatpush2.msra.mxu0 0.0
        %3159 = vmatprep.subr.mxu0 0.0
        %3160 = vmatpush2.msra.mxu0 0.0
        %3161 = vmatprep.subr.mxu0 0.0
        %3162 = vmatpush2.msra.mxu0 0.0
        %3163 = vmatprep.subr.mxu0 0.0
        %3164 = vmatpush2.msra.mxu0 0.0
        %3165 = vmatprep.subr.mxu0 0.0
        %3166 = vmatpush2.msra.mxu0 0.0
        %3167 = vmatprep.subr.mxu0 0.0
        %3168 = vmatpush2.msra.mxu0 0.0
        %3169 = vmatprep.subr.mxu0 0.0
        %3170 = vmatpush2.msra.mxu0 0.0
        %3171 = vmatprep.subr.mxu0 0.0
        %3172 = vmatpush2.msra.mxu0 0.0
        %3173 = vmatprep.subr.mxu0 0.0
        %3174 = vmatpush2.msra.mxu0 0.0
        %3175 = vmatprep.subr.mxu0 0.0
        %3176 = vmatpush2.msra.mxu0 0.0
        %3177 = vmatprep.subr.mxu0 0.0
        %3178 = vmatpush2.msra.mxu0 0.0
        %3179 = vmatprep.mubr.f32.mxu0 0.0
        %3180 = vmatmul.mubr.f32.gmra.mxu0 %v3110
        %v3181 = vpop.f32.mrf.mxu0
        %v3182 = vadd.f32 0.0, %v3181
        %v3183 = vpop.f32.mrf.mxu0
        %3184 = vmatprep.mubr.f32.mxu0 0.0
        %3185 = vmatmul.mubr.f32.gmra.mxu0 %v3113
        %v3186 = vpop.f32.mrf.mxu0
        %v3187 = vadd.f32 0.0, %v3186
        %v3188 = vpop.f32.mrf.mxu0
        %3189 = vdwg.mxu0
        %v3190 = vsel %vm385, %v3088, 0.0
        %3191 = vadd.xlane.f32.xlu0 %v3190
        %v3192 = vpop.xlane.xlu0 %3191
        %v3193 = vsel %vm385, %v3090, 0.0
        %3194 = vadd.xlane.f32.xlu0 %v3193
        %v3195 = vpop.xlane.xlu0 %3194
        %v3196 = vadd.f32 %v3192, %v3105
        %v3197 = vadd.f32 %v3195, %v3108
        %v3198 = vrcp.pop %v3196
        %v3199 = vrcp.pop %v3197
        %v3200 = vmul.f32 %v3196, %v3198
        %v3201 = vmul.f32 %v3197, %v3199
        %v3202 = vsub.f32 2.0, %v3200
        %v3203 = vsub.f32 2.0, %v3201
        %v3204 = vmul.f32 %v3198, %v3202
        %v3205 = vmul.f32 %v3199, %v3203
        %v3206 = vsel %vm385, %v3094, 0.0
        %3207 = vadd.xlane.f32.xlu0 %v3206
        %v3208 = vpop.xlane.xlu0 %3207
        %v3209 = vsel %vm385, %v3096, 0.0
        %3210 = vadd.xlane.f32.xlu0 %v3209
        %v3211 = vpop.xlane.xlu0 %3210
        %v3212 = vadd.f32 %v3208, %v3105
        %v3213 = vadd.f32 %v3211, %v3108
        %v3214 = vrcp.pop %v3212
        %v3215 = vrcp.pop %v3213
        %v3216 = vmul.f32 %v3212, %v3214
        %v3217 = vmul.f32 %v3213, %v3215
        %v3218 = vsub.f32 2.0, %v3216
        %v3219 = vsub.f32 2.0, %v3217
        %v3220 = vmul.f32 %v3214, %v3218
        %v3221 = vmul.f32 %v3215, %v3219
        %v3223 = vsel %vm385, %v3088, 0
        %v3226 = vsel %vm385, %v3090, 0
        %3228 = vmatprep.subr.mxu0 0.0
        %3229 = vmatpush1.msra.mxu0 0.0
        %3230 = vmatprep.subr.mxu0 0.0
        %3231 = vmatpush1.msra.mxu0 0.0
        %3232 = vmatprep.subr.mxu0 0.0
        %3233 = vmatpush1.msra.mxu0 0.0
        %3234 = vmatprep.subr.mxu0 0.0
        %3235 = vmatpush1.msra.mxu0 0.0
        %3236 = vmatprep.subr.mxu0 0.0
        %3237 = vmatpush1.msra.mxu0 0.0
        %3238 = vmatprep.subr.mxu0 0.0
        %3239 = vmatpush1.msra.mxu0 0.0
        %3240 = vmatprep.subr.mxu0 0.0
        %3241 = vmatpush1.msra.mxu0 0.0
        %3242 = vmatprep.subr.mxu0 0.0
        %3243 = vmatpush1.msra.mxu0 0.0
        %3244 = vmatprep.subr.mxu0 0.0
        %3245 = vmatpush1.msra.mxu0 0.0
        %3246 = vmatprep.subr.mxu0 0.0
        %3247 = vmatpush1.msra.mxu0 0.0
        %3248 = vmatprep.subr.mxu0 0.0
        %3249 = vmatpush1.msra.mxu0 0.0
        %3250 = vmatprep.subr.mxu0 0.0
        %3251 = vmatpush1.msra.mxu0 0.0
        %3252 = vmatprep.subr.mxu0 0.0
        %3253 = vmatpush1.msra.mxu0 0.0
        %3254 = vmatprep.subr.mxu0 0.0
        %3255 = vmatpush1.msra.mxu0 0.0
        %3256 = vmatprep.subr.mxu0 0.0
        %3257 = vmatpush1.msra.mxu0 %v2725
        %3258 = vmatprep.subr.mxu0 0.0
        %3259 = vmatpush1.msra.mxu0 %v2723
        %3260 = vmatprep.subr.mxu0 0.0
        %3261 = vmatpush2.msra.mxu0 0.0
        %3262 = vmatprep.subr.mxu0 0.0
        %3263 = vmatpush2.msra.mxu0 0.0
        %3264 = vmatprep.subr.mxu0 0.0
        %3265 = vmatpush2.msra.mxu0 0.0
        %3266 = vmatprep.subr.mxu0 0.0
        %3267 = vmatpush2.msra.mxu0 0.0
        %3268 = vmatprep.subr.mxu0 0.0
        %3269 = vmatpush2.msra.mxu0 0.0
        %3270 = vmatprep.subr.mxu0 0.0
        %3271 = vmatpush2.msra.mxu0 0.0
        %3272 = vmatprep.subr.mxu0 0.0
        %3273 = vmatpush2.msra.mxu0 0.0
        %3274 = vmatprep.subr.mxu0 0.0
        %3275 = vmatpush2.msra.mxu0 0.0
        %3276 = vmatprep.subr.mxu0 0.0
        %3277 = vmatpush2.msra.mxu0 0.0
        %3278 = vmatprep.subr.mxu0 0.0
        %3279 = vmatpush2.msra.mxu0 0.0
        %3280 = vmatprep.subr.mxu0 0.0
        %3281 = vmatpush2.msra.mxu0 0.0
        %3282 = vmatprep.subr.mxu0 0.0
        %3283 = vmatpush2.msra.mxu0 0.0
        %3284 = vmatprep.subr.mxu0 0.0
        %3285 = vmatpush2.msra.mxu0 0.0
        %3286 = vmatprep.subr.mxu0 0.0
        %3287 = vmatpush2.msra.mxu0 0.0
        %3288 = vmatprep.subr.mxu0 0.0
        %3289 = vmatpush2.msra.mxu0 0.0
        %3290 = vmatprep.subr.mxu0 0.0
        %3291 = vmatpush2.msra.mxu0 0.0
        %3292 = vmatprep.mubr.f32.mxu0 0.0
        %3293 = vmatmul.mubr.f32.gmra.mxu0 %v3223
        %v3294 = vpop.f32.mrf.mxu0
        %v3295 = vadd.f32 %v3182, %v3294
        %v3296 = vpop.f32.mrf.mxu0
        %3297 = vmatprep.mubr.f32.mxu0 0.0
        %3298 = vmatmul.mubr.f32.gmra.mxu0 %v3226
        %v3299 = vpop.f32.mrf.mxu0
        %v3300 = vadd.f32 %v3187, %v3299
        %v3301 = vpop.f32.mrf.mxu0
        %3302 = vdwg.mxu0
        %v3303 = vmul.f32 %v3295, %v3204
        %v3304 = vmul.f32 %v3300, %v3205
        %v3306 = vsel %vm385, %v3094, 0
        %v3309 = vsel %vm385, %v3096, 0
        %3311 = vmatprep.subr.mxu0 0.0
        %3312 = vmatpush1.msra.mxu0 0.0
        %3313 = vmatprep.subr.mxu0 0.0
        %3314 = vmatpush1.msra.mxu0 0.0
        %3315 = vmatprep.subr.mxu0 0.0
        %3316 = vmatpush1.msra.mxu0 0.0
        %3317 = vmatprep.subr.mxu0 0.0
        %3318 = vmatpush1.msra.mxu0 0.0
        %3319 = vmatprep.subr.mxu0 0.0
        %3320 = vmatpush1.msra.mxu0 0.0
        %3321 = vmatprep.subr.mxu0 0.0
        %3322 = vmatpush1.msra.mxu0 0.0
        %3323 = vmatprep.subr.mxu0 0.0
        %3324 = vmatpush1.msra.mxu0 0.0
        %3325 = vmatprep.subr.mxu0 0.0
        %3326 = vmatpush1.msra.mxu0 0.0
        %3327 = vmatprep.subr.mxu0 0.0
        %3328 = vmatpush1.msra.mxu0 0.0
        %3329 = vmatprep.subr.mxu0 0.0
        %3330 = vmatpush1.msra.mxu0 0.0
        %3331 = vmatprep.subr.mxu0 0.0
        %3332 = vmatpush1.msra.mxu0 0.0
        %3333 = vmatprep.subr.mxu0 0.0
        %3334 = vmatpush1.msra.mxu0 0.0
        %3335 = vmatprep.subr.mxu0 0.0
        %3336 = vmatpush1.msra.mxu0 0.0
        %3337 = vmatprep.subr.mxu0 0.0
        %3338 = vmatpush1.msra.mxu0 0.0
        %3339 = vmatprep.subr.mxu0 0.0
        %3340 = vmatpush1.msra.mxu0 %v2638
        %3341 = vmatprep.subr.mxu0 0.0
        %3342 = vmatpush1.msra.mxu0 %v2636
        %3343 = vmatprep.subr.mxu0 0.0
        %3344 = vmatpush2.msra.mxu0 0.0
        %3345 = vmatprep.subr.mxu0 0.0
        %3346 = vmatpush2.msra.mxu0 0.0
        %3347 = vmatprep.subr.mxu0 0.0
        %3348 = vmatpush2.msra.mxu0 0.0
        %3349 = vmatprep.subr.mxu0 0.0
        %3350 = vmatpush2.msra.mxu0 0.0
        %3351 = vmatprep.subr.mxu0 0.0
        %3352 = vmatpush2.msra.mxu0 0.0
        %3353 = vmatprep.subr.mxu0 0.0
        %3354 = vmatpush2.msra.mxu0 0.0
        %3355 = vmatprep.subr.mxu0 0.0
        %3356 = vmatpush2.msra.mxu0 0.0
        %3357 = vmatprep.subr.mxu0 0.0
        %3358 = vmatpush2.msra.mxu0 0.0
        %3359 = vmatprep.subr.mxu0 0.0
        %3360 = vmatpush2.msra.mxu0 0.0
        %3361 = vmatprep.subr.mxu0 0.0
        %3362 = vmatpush2.msra.mxu0 0.0
        %3363 = vmatprep.subr.mxu0 0.0
        %3364 = vmatpush2.msra.mxu0 0.0
        %3365 = vmatprep.subr.mxu0 0.0
        %3366 = vmatpush2.msra.mxu0 0.0
        %3367 = vmatprep.subr.mxu0 0.0
        %3368 = vmatpush2.msra.mxu0 0.0
        %3369 = vmatprep.subr.mxu0 0.0
        %3370 = vmatpush2.msra.mxu0 0.0
        %3371 = vmatprep.subr.mxu0 0.0
        %3372 = vmatpush2.msra.mxu0 0.0
        %3373 = vmatprep.subr.mxu0 0.0
        %3374 = vmatpush2.msra.mxu0 0.0
        %3375 = vmatprep.mubr.f32.mxu0 0.0
        %3376 = vmatmul.mubr.f32.gmra.mxu0 %v3306
        %v3377 = vpop.f32.mrf.mxu0
        %v3378 = vadd.f32 %v3182, %v3377
        %v3379 = vpop.f32.mrf.mxu0
        %3380 = vmatprep.mubr.f32.mxu0 0.0
        %3381 = vmatmul.mubr.f32.gmra.mxu0 %v3309
        %v3382 = vpop.f32.mrf.mxu0
        %v3383 = vadd.f32 %v3187, %v3382
        %v3384 = vpop.f32.mrf.mxu0
        %3385 = vdwg.mxu0
        %v3386 = vmul.f32 %v3378, %v3220
        %v3387 = vmul.f32 %v3383, %v3221
        %3390 = vrot.lane.b32.xlu0 %v3303, 24
        %v3391 = vpop.permute.xlu0 %3390
        %3392 = vrot.lane.b32.xlu0 %v3304, 24
        %v3393 = vpop.permute.xlu0 %3392
        %vm3396 = vcmask 228544
        %3397 = vst.msk [vmem:[#allocation3] sm:$0xff] %vm3396, %v3391
        %3398 = vst.msk [vmem:[#allocation3 + $0x8] sm:$0xff] %vm3396, %v3393
        %3401 = vrot.lane.b32.xlu0 %v3386, 40
        %v3402 = vpop.permute.xlu0 %3401
        %3403 = vrot.lane.b32.xlu0 %v3387, 40
        %v3404 = vpop.permute.xlu0 %3403
        %vm3407 = vcmask 359744
        %3408 = vst.msk [vmem:[#allocation3] sm:$0xff] %vm3407, %v3402
        %3409 = vst.msk [vmem:[#allocation3 + $0x8] sm:$0xff] %vm3407, %v3404
        %v3410 = vld [vmem:[#allocation2] sm:$0xff]
        %v3411 = vld [vmem:[#allocation2 + $0x10] sm:$0xff]
        %v3412 = vmul.f32 %v3410, 0.28867513
        %v3413 = vmul.f32 %v3411, 0.28867513
        %v3414 = vld [vmem:[#allocation2 + $0x8] sm:$0xff]
        %v3415 = vld [vmem:[#allocation2 + $0x18] sm:$0xff]
        %3418 = vrot.lane.b32.xlu0 %v3412, 88
        %v3419 = vpop.permute.xlu0 %3418
        %3420 = vrot.lane.b32.xlu0 %v3413, 88
        %v3421 = vpop.permute.xlu0 %3420
        %3424 = vrot.lane.b32.xlu0 %v3410, 44
        %v3425 = vpop.permute.xlu0 %3424
        %3426 = vrot.lane.b32.xlu0 %v3411, 44
        %v3427 = vpop.permute.xlu0 %3426
        %v3428 = vsel %vm405, %v3419, 0
        %v3430 = vsel %vm405, %v3421, 0
        %v3432 = vsel %vm405, %v3425, 0
        %v3434 = vsel %vm405, %v3427, 0
        %3436 = vmatprep.subr.mxu0 0.0
        %3437 = vmatpush1.xpose.msra.mxu0 0.0
        %3438 = vmatprep.subr.mxu0 0.0
        %3439 = vmatpush1.xpose.msra.mxu0 0.0
        %3440 = vmatprep.subr.mxu0 0.0
        %3441 = vmatpush1.xpose.msra.mxu0 0.0
        %3442 = vmatprep.subr.mxu0 0.0
        %3443 = vmatpush1.xpose.msra.mxu0 0.0
        %3444 = vmatprep.subr.mxu0 0.0
        %3445 = vmatpush1.xpose.msra.mxu0 0.0
        %3446 = vmatprep.subr.mxu0 0.0
        %3447 = vmatpush1.xpose.msra.mxu0 0.0
        %3448 = vmatprep.subr.mxu0 0.0
        %3449 = vmatpush1.xpose.msra.mxu0 0.0
        %3450 = vmatprep.subr.mxu0 0.0
        %3451 = vmatpush1.xpose.msra.mxu0 0.0
        %3452 = vmatprep.subr.mxu0 0.0
        %3453 = vmatpush1.xpose.msra.mxu0 0.0
        %3454 = vmatprep.subr.mxu0 0.0
        %3455 = vmatpush1.xpose.msra.mxu0 0.0
        %3456 = vmatprep.subr.mxu0 0.0
        %3457 = vmatpush1.xpose.msra.mxu0 0.0
        %3458 = vmatprep.subr.mxu0 0.0
        %3459 = vmatpush1.xpose.msra.mxu0 0.0
        %3460 = vmatprep.subr.mxu0 0.0
        %3461 = vmatpush1.xpose.msra.mxu0 0.0
        %3462 = vmatprep.subr.mxu0 0.0
        %3463 = vmatpush1.xpose.msra.mxu0 0.0
        %3464 = vmatprep.subr.mxu0 0.0
        %3465 = vmatpush1.xpose.msra.mxu0 %v3434
        %3466 = vmatprep.subr.mxu0 0.0
        %3467 = vmatpush1.xpose.msra.mxu0 %v3432
        %3468 = vmatprep.subr.mxu0 0.0
        %3469 = vmatpush2.xpose.msra.mxu0 0.0
        %3470 = vmatprep.subr.mxu0 0.0
        %3471 = vmatpush2.xpose.msra.mxu0 0.0
        %3472 = vmatprep.subr.mxu0 0.0
        %3473 = vmatpush2.xpose.msra.mxu0 0.0
        %3474 = vmatprep.subr.mxu0 0.0
        %3475 = vmatpush2.xpose.msra.mxu0 0.0
        %3476 = vmatprep.subr.mxu0 0.0
        %3477 = vmatpush2.xpose.msra.mxu0 0.0
        %3478 = vmatprep.subr.mxu0 0.0
        %3479 = vmatpush2.xpose.msra.mxu0 0.0
        %3480 = vmatprep.subr.mxu0 0.0
        %3481 = vmatpush2.xpose.msra.mxu0 0.0
        %3482 = vmatprep.subr.mxu0 0.0
        %3483 = vmatpush2.xpose.msra.mxu0 0.0
        %3484 = vmatprep.subr.mxu0 0.0
        %3485 = vmatpush2.xpose.msra.mxu0 0.0
        %3486 = vmatprep.subr.mxu0 0.0
        %3487 = vmatpush2.xpose.msra.mxu0 0.0
        %3488 = vmatprep.subr.mxu0 0.0
        %3489 = vmatpush2.xpose.msra.mxu0 0.0
        %3490 = vmatprep.subr.mxu0 0.0
        %3491 = vmatpush2.xpose.msra.mxu0 0.0
        %3492 = vmatprep.subr.mxu0 0.0
        %3493 = vmatpush2.xpose.msra.mxu0 0.0
        %3494 = vmatprep.subr.mxu0 0.0
        %3495 = vmatpush2.xpose.msra.mxu0 0.0
        %3496 = vmatprep.subr.mxu0 0.0
        %3497 = vmatpush2.xpose.msra.mxu0 0.0
        %3498 = vmatprep.subr.mxu0 0.0
        %3499 = vmatpush2.xpose.msra.mxu0 0.0
        %3500 = vmatprep.mubr.f32.mxu0 0.0
        %3501 = vmatmul.mubr.f32.gmra.mxu0 %v3428
        %v3502 = vpop.f32.mrf.mxu0
        %v3503 = vadd.f32 0.0, %v3502
        %v3504 = vpop.f32.mrf.mxu0
        %3505 = vmatprep.mubr.f32.mxu0 0.0
        %3506 = vmatmul.mubr.f32.gmra.mxu0 %v3430
        %v3507 = vpop.f32.mrf.mxu0
        %v3508 = vadd.f32 0.0, %v3507
        %v3509 = vpop.f32.mrf.mxu0
        %3510 = vdwg.mxu0
        %3511 = vrot.lane.b32.xlu0 %v3410, 40
        %v3512 = vpop.permute.xlu0 %3511
        %3513 = vrot.lane.b32.xlu0 %v3411, 40
        %v3514 = vpop.permute.xlu0 %3513
        %v3515 = vsel %vm405, %v3512, 0
        %v3517 = vsel %vm405, %v3514, 0
        %3519 = vmatprep.subr.mxu0 0.0
        %3520 = vmatpush1.xpose.msra.mxu0 0.0
        %3521 = vmatprep.subr.mxu0 0.0
        %3522 = vmatpush1.xpose.msra.mxu0 0.0
        %3523 = vmatprep.subr.mxu0 0.0
        %3524 = vmatpush1.xpose.msra.mxu0 0.0
        %3525 = vmatprep.subr.mxu0 0.0
        %3526 = vmatpush1.xpose.msra.mxu0 0.0
        %3527 = vmatprep.subr.mxu0 0.0
        %3528 = vmatpush1.xpose.msra.mxu0 0.0
        %3529 = vmatprep.subr.mxu0 0.0
        %3530 = vmatpush1.xpose.msra.mxu0 0.0
        %3531 = vmatprep.subr.mxu0 0.0
        %3532 = vmatpush1.xpose.msra.mxu0 0.0
        %3533 = vmatprep.subr.mxu0 0.0
        %3534 = vmatpush1.xpose.msra.mxu0 0.0
        %3535 = vmatprep.subr.mxu0 0.0
        %3536 = vmatpush1.xpose.msra.mxu0 0.0
        %3537 = vmatprep.subr.mxu0 0.0
        %3538 = vmatpush1.xpose.msra.mxu0 0.0
        %3539 = vmatprep.subr.mxu0 0.0
        %3540 = vmatpush1.xpose.msra.mxu0 0.0
        %3541 = vmatprep.subr.mxu0 0.0
        %3542 = vmatpush1.xpose.msra.mxu0 0.0
        %3543 = vmatprep.subr.mxu0 0.0
        %3544 = vmatpush1.xpose.msra.mxu0 0.0
        %3545 = vmatprep.subr.mxu0 0.0
        %3546 = vmatpush1.xpose.msra.mxu0 0.0
        %3547 = vmatprep.subr.mxu0 0.0
        %3548 = vmatpush1.xpose.msra.mxu0 %v3517
        %3549 = vmatprep.subr.mxu0 0.0
        %3550 = vmatpush1.xpose.msra.mxu0 %v3515
        %3551 = vmatprep.subr.mxu0 0.0
        %3552 = vmatpush2.xpose.msra.mxu0 0.0
        %3553 = vmatprep.subr.mxu0 0.0
        %3554 = vmatpush2.xpose.msra.mxu0 0.0
        %3555 = vmatprep.subr.mxu0 0.0
        %3556 = vmatpush2.xpose.msra.mxu0 0.0
        %3557 = vmatprep.subr.mxu0 0.0
        %3558 = vmatpush2.xpose.msra.mxu0 0.0
        %3559 = vmatprep.subr.mxu0 0.0
        %3560 = vmatpush2.xpose.msra.mxu0 0.0
        %3561 = vmatprep.subr.mxu0 0.0
        %3562 = vmatpush2.xpose.msra.mxu0 0.0
        %3563 = vmatprep.subr.mxu0 0.0
        %3564 = vmatpush2.xpose.msra.mxu0 0.0
        %3565 = vmatprep.subr.mxu0 0.0
        %3566 = vmatpush2.xpose.msra.mxu0 0.0
        %3567 = vmatprep.subr.mxu0 0.0
        %3568 = vmatpush2.xpose.msra.mxu0 0.0
        %3569 = vmatprep.subr.mxu0 0.0
        %3570 = vmatpush2.xpose.msra.mxu0 0.0
        %3571 = vmatprep.subr.mxu0 0.0
        %3572 = vmatpush2.xpose.msra.mxu0 0.0
        %3573 = vmatprep.subr.mxu0 0.0
        %3574 = vmatpush2.xpose.msra.mxu0 0.0
        %3575 = vmatprep.subr.mxu0 0.0
        %3576 = vmatpush2.xpose.msra.mxu0 0.0
        %3577 = vmatprep.subr.mxu0 0.0
        %3578 = vmatpush2.xpose.msra.mxu0 0.0
        %3579 = vmatprep.subr.mxu0 0.0
        %3580 = vmatpush2.xpose.msra.mxu0 0.0
        %3581 = vmatprep.subr.mxu0 0.0
        %3582 = vmatpush2.xpose.msra.mxu0 0.0
        %3583 = vmatprep.mubr.f32.mxu0 0.0
        %3584 = vmatmul.mubr.f32.gmra.mxu0 %v3428
        %v3585 = vpop.f32.mrf.mxu0
        %v3586 = vadd.f32 0.0, %v3585
        %v3587 = vpop.f32.mrf.mxu0
        %3588 = vmatprep.mubr.f32.mxu0 0.0
        %3589 = vmatmul.mubr.f32.gmra.mxu0 %v3430
        %v3590 = vpop.f32.mrf.mxu0
        %v3591 = vadd.f32 0.0, %v3590
        %v3592 = vpop.f32.mrf.mxu0
        %3593 = vdwg.mxu0
        %v3594 = vsel %vm385, %v3503, -inf
        %3595 = vmax.xlane.f32.xlu0 %v3594
        %v3596 = vpop.xlane.xlu0 %3595
        %v3597 = vsel %vm385, %v3508, -inf
        %3598 = vmax.xlane.f32.xlu0 %v3597
        %v3599 = vpop.xlane.xlu0 %3598
        %v3600 = vsel %vm385, %v3586, -inf
        %3601 = vmax.xlane.f32.xlu0 %v3600
        %v3602 = vpop.xlane.xlu0 %3601
        %v3603 = vsel %vm385, %v3591, -inf
        %3604 = vmax.xlane.f32.xlu0 %v3603
        %v3605 = vpop.xlane.xlu0 %3604
        %v3606 = vmax.f32 %v3596, %v3602
        %v3607 = vmax.f32 %v3599, %v3605
        %v3608 = vsub.f32 %v3503, %v3606
        %v3609 = vsub.f32 %v3508, %v3607
        %v3610 = vmul.f32 %v3608, 1.442695
        %v3611 = vpow.pop %v3610
        %v3612 = vmul.f32 %v3609, 1.442695
        %v3613 = vpow.pop %v3612
        %v3614 = vsub.f32 %v3586, %v3606
        %v3615 = vsub.f32 %v3591, %v3607
        %v3616 = vmul.f32 %v3614, 1.442695
        %v3617 = vpow.pop %v3616
        %v3618 = vmul.f32 %v3615, 1.442695
        %v3619 = vpow.pop %v3618
        %v3620 = vsel %vm385, %v3611, 0.0
        %3621 = vadd.xlane.f32.xlu0 %v3620
        %v3622 = vpop.xlane.xlu0 %3621
        %v3623 = vsel %vm385, %v3613, 0.0
        %3624 = vadd.xlane.f32.xlu0 %v3623
        %v3625 = vpop.xlane.xlu0 %3624
        %v3626 = vsel %vm385, %v3617, 0.0
        %3627 = vadd.xlane.f32.xlu0 %v3626
        %v3628 = vpop.xlane.xlu0 %3627
        %v3629 = vsel %vm385, %v3619, 0.0
        %3630 = vadd.xlane.f32.xlu0 %v3629
        %v3631 = vpop.xlane.xlu0 %3630
        %v3632 = vadd.f32 %v3622, %v3628
        %v3633 = vadd.f32 %v3625, %v3631
        %v3634 = vrcp.pop %v3632
        %v3635 = vrcp.pop %v3633
        %v3636 = vmul.f32 %v3632, %v3634
        %v3637 = vmul.f32 %v3633, %v3635
        %v3638 = vsub.f32 2.0, %v3636
        %v3639 = vsub.f32 2.0, %v3637
        %v3640 = vmul.f32 %v3634, %v3638
        %v3641 = vmul.f32 %v3635, %v3639
        %3644 = vrot.lane.b32.xlu0 %v3414, 120
        %v3645 = vpop.permute.xlu0 %3644
        %3646 = vrot.lane.b32.xlu0 %v3415, 120
        %v3647 = vpop.permute.xlu0 %3646
        %v3651 = vsel %vm385, %v3617, 0
        %v3654 = vsel %vm385, %v3619, 0
        %3656 = vmatprep.subr.mxu0 0.0
        %3657 = vmatpush1.msra.mxu0 0.0
        %3658 = vmatprep.subr.mxu0 0.0
        %3659 = vmatpush1.msra.mxu0 0.0
        %3660 = vmatprep.subr.mxu0 0.0
        %3661 = vmatpush1.msra.mxu0 0.0
        %3662 = vmatprep.subr.mxu0 0.0
        %3663 = vmatpush1.msra.mxu0 0.0
        %3664 = vmatprep.subr.mxu0 0.0
        %3665 = vmatpush1.msra.mxu0 0.0
        %3666 = vmatprep.subr.mxu0 0.0
        %3667 = vmatpush1.msra.mxu0 0.0
        %3668 = vmatprep.subr.mxu0 0.0
        %3669 = vmatpush1.msra.mxu0 0.0
        %3670 = vmatprep.subr.mxu0 0.0
        %3671 = vmatpush1.msra.mxu0 0.0
        %3672 = vmatprep.subr.mxu0 0.0
        %3673 = vmatpush1.msra.mxu0 0.0
        %3674 = vmatprep.subr.mxu0 0.0
        %3675 = vmatpush1.msra.mxu0 0.0
        %3676 = vmatprep.subr.mxu0 0.0
        %3677 = vmatpush1.msra.mxu0 0.0
        %3678 = vmatprep.subr.mxu0 0.0
        %3679 = vmatpush1.msra.mxu0 0.0
        %3680 = vmatprep.subr.mxu0 0.0
        %3681 = vmatpush1.msra.mxu0 0.0
        %3682 = vmatprep.subr.mxu0 0.0
        %3683 = vmatpush1.msra.mxu0 0.0
        %3684 = vmatprep.subr.mxu0 0.0
        %3685 = vmatpush1.msra.mxu0 %v3647
        %3686 = vmatprep.subr.mxu0 0.0
        %3687 = vmatpush1.msra.mxu0 %v3645
        %3688 = vmatprep.subr.mxu0 0.0
        %3689 = vmatpush2.msra.mxu0 0.0
        %3690 = vmatprep.subr.mxu0 0.0
        %3691 = vmatpush2.msra.mxu0 0.0
        %3692 = vmatprep.subr.mxu0 0.0
        %3693 = vmatpush2.msra.mxu0 0.0
        %3694 = vmatprep.subr.mxu0 0.0
        %3695 = vmatpush2.msra.mxu0 0.0
        %3696 = vmatprep.subr.mxu0 0.0
        %3697 = vmatpush2.msra.mxu0 0.0
        %3698 = vmatprep.subr.mxu0 0.0
        %3699 = vmatpush2.msra.mxu0 0.0
        %3700 = vmatprep.subr.mxu0 0.0
        %3701 = vmatpush2.msra.mxu0 0.0
        %3702 = vmatprep.subr.mxu0 0.0
        %3703 = vmatpush2.msra.mxu0 0.0
        %3704 = vmatprep.subr.mxu0 0.0
        %3705 = vmatpush2.msra.mxu0 0.0
        %3706 = vmatprep.subr.mxu0 0.0
        %3707 = vmatpush2.msra.mxu0 0.0
        %3708 = vmatprep.subr.mxu0 0.0
        %3709 = vmatpush2.msra.mxu0 0.0
        %3710 = vmatprep.subr.mxu0 0.0
        %3711 = vmatpush2.msra.mxu0 0.0
        %3712 = vmatprep.subr.mxu0 0.0
        %3713 = vmatpush2.msra.mxu0 0.0
        %3714 = vmatprep.subr.mxu0 0.0
        %3715 = vmatpush2.msra.mxu0 0.0
        %3716 = vmatprep.subr.mxu0 0.0
        %3717 = vmatpush2.msra.mxu0 0.0
        %3718 = vmatprep.subr.mxu0 0.0
        %3719 = vmatpush2.msra.mxu0 0.0
        %3720 = vmatprep.mubr.f32.mxu0 0.0
        %3721 = vmatmul.mubr.f32.gmra.mxu0 %v3651
        %v3722 = vpop.f32.mrf.mxu0
        %v3723 = vadd.f32 0.0, %v3722
        %v3724 = vpop.f32.mrf.mxu0
        %3725 = vmatprep.mubr.f32.mxu0 0.0
        %3726 = vmatmul.mubr.f32.gmra.mxu0 %v3654
        %v3727 = vpop.f32.mrf.mxu0
        %v3728 = vadd.f32 0.0, %v3727
        %v3729 = vpop.f32.mrf.mxu0
        %3730 = vdwg.mxu0
        %3731 = vrot.lane.b32.xlu0 %v3414, 124
        %v3732 = vpop.permute.xlu0 %3731
        %3733 = vrot.lane.b32.xlu0 %v3415, 124
        %v3734 = vpop.permute.xlu0 %3733
        %v3738 = vsel %vm385, %v3611, 0
        %v3741 = vsel %vm385, %v3613, 0
        %3743 = vmatprep.subr.mxu0 0.0
        %3744 = vmatpush1.msra.mxu0 0.0
        %3745 = vmatprep.subr.mxu0 0.0
        %3746 = vmatpush1.msra.mxu0 0.0
        %3747 = vmatprep.subr.mxu0 0.0
        %3748 = vmatpush1.msra.mxu0 0.0
        %3749 = vmatprep.subr.mxu0 0.0
        %3750 = vmatpush1.msra.mxu0 0.0
        %3751 = vmatprep.subr.mxu0 0.0
        %3752 = vmatpush1.msra.mxu0 0.0
        %3753 = vmatprep.subr.mxu0 0.0
        %3754 = vmatpush1.msra.mxu0 0.0
        %3755 = vmatprep.subr.mxu0 0.0
        %3756 = vmatpush1.msra.mxu0 0.0
        %3757 = vmatprep.subr.mxu0 0.0
        %3758 = vmatpush1.msra.mxu0 0.0
        %3759 = vmatprep.subr.mxu0 0.0
        %3760 = vmatpush1.msra.mxu0 0.0
        %3761 = vmatprep.subr.mxu0 0.0
        %3762 = vmatpush1.msra.mxu0 0.0
        %3763 = vmatprep.subr.mxu0 0.0
        %3764 = vmatpush1.msra.mxu0 0.0
        %3765 = vmatprep.subr.mxu0 0.0
        %3766 = vmatpush1.msra.mxu0 0.0
        %3767 = vmatprep.subr.mxu0 0.0
        %3768 = vmatpush1.msra.mxu0 0.0
        %3769 = vmatprep.subr.mxu0 0.0
        %3770 = vmatpush1.msra.mxu0 0.0
        %3771 = vmatprep.subr.mxu0 0.0
        %3772 = vmatpush1.msra.mxu0 %v3734
        %3773 = vmatprep.subr.mxu0 0.0
        %3774 = vmatpush1.msra.mxu0 %v3732
        %3775 = vmatprep.subr.mxu0 0.0
        %3776 = vmatpush2.msra.mxu0 0.0
        %3777 = vmatprep.subr.mxu0 0.0
        %3778 = vmatpush2.msra.mxu0 0.0
        %3779 = vmatprep.subr.mxu0 0.0
        %3780 = vmatpush2.msra.mxu0 0.0
        %3781 = vmatprep.subr.mxu0 0.0
        %3782 = vmatpush2.msra.mxu0 0.0
        %3783 = vmatprep.subr.mxu0 0.0
        %3784 = vmatpush2.msra.mxu0 0.0
        %3785 = vmatprep.subr.mxu0 0.0
        %3786 = vmatpush2.msra.mxu0 0.0
        %3787 = vmatprep.subr.mxu0 0.0
        %3788 = vmatpush2.msra.mxu0 0.0
        %3789 = vmatprep.subr.mxu0 0.0
        %3790 = vmatpush2.msra.mxu0 0.0
        %3791 = vmatprep.subr.mxu0 0.0
        %3792 = vmatpush2.msra.mxu0 0.0
        %3793 = vmatprep.subr.mxu0 0.0
        %3794 = vmatpush2.msra.mxu0 0.0
        %3795 = vmatprep.subr.mxu0 0.0
        %3796 = vmatpush2.msra.mxu0 0.0
        %3797 = vmatprep.subr.mxu0 0.0
        %3798 = vmatpush2.msra.mxu0 0.0
        %3799 = vmatprep.subr.mxu0 0.0
        %3800 = vmatpush2.msra.mxu0 0.0
        %3801 = vmatprep.subr.mxu0 0.0
        %3802 = vmatpush2.msra.mxu0 0.0
        %3803 = vmatprep.subr.mxu0 0.0
        %3804 = vmatpush2.msra.mxu0 0.0
        %3805 = vmatprep.subr.mxu0 0.0
        %3806 = vmatpush2.msra.mxu0 0.0
        %3807 = vmatprep.mubr.f32.mxu0 0.0
        %3808 = vmatmul.mubr.f32.gmra.mxu0 %v3738
        %v3809 = vpop.f32.mrf.mxu0
        %v3810 = vadd.f32 %v3723, %v3809
        %v3811 = vpop.f32.mrf.mxu0
        %3812 = vmatprep.mubr.f32.mxu0 0.0
        %3813 = vmatmul.mubr.f32.gmra.mxu0 %v3741
        %v3814 = vpop.f32.mrf.mxu0
        %v3815 = vadd.f32 %v3728, %v3814
        %v3816 = vpop.f32.mrf.mxu0
        %3817 = vdwg.mxu0
        %v3818 = vmul.f32 %v3810, %v3640
        %v3819 = vmul.f32 %v3815, %v3641
        %3822 = vrot.lane.b32.xlu0 %v3818, 12
        %v3823 = vpop.permute.xlu0 %3822
        %3824 = vrot.lane.b32.xlu0 %v3819, 12
        %v3825 = vpop.permute.xlu0 %3824
        %vm3828 = vcmask 130144
        %3829 = vst.msk [vmem:[#allocation3] sm:$0xff] %vm3828, %v3823
        %3830 = vst.msk [vmem:[#allocation3 + $0x8] sm:$0xff] %vm3828, %v3825
        %3831 = vrot.lane.b32.xlu0 %v3412, 84
        %v3832 = vpop.permute.xlu0 %3831
        %3833 = vrot.lane.b32.xlu0 %v3413, 84
        %v3834 = vpop.permute.xlu0 %3833
        %v3835 = vsel %vm405, %v3832, 0
        %v3837 = vsel %vm405, %v3834, 0
        %3839 = vmatprep.subr.mxu0 0.0
        %3840 = vmatpush1.xpose.msra.mxu0 0.0
        %3841 = vmatprep.subr.mxu0 0.0
        %3842 = vmatpush1.xpose.msra.mxu0 0.0
        %3843 = vmatprep.subr.mxu0 0.0
        %3844 = vmatpush1.xpose.msra.mxu0 0.0
        %3845 = vmatprep.subr.mxu0 0.0
        %3846 = vmatpush1.xpose.msra.mxu0 0.0
        %3847 = vmatprep.subr.mxu0 0.0
        %3848 = vmatpush1.xpose.msra.mxu0 0.0
        %3849 = vmatprep.subr.mxu0 0.0
        %3850 = vmatpush1.xpose.msra.mxu0 0.0
        %3851 = vmatprep.subr.mxu0 0.0
        %3852 = vmatpush1.xpose.msra.mxu0 0.0
        %3853 = vmatprep.subr.mxu0 0.0
        %3854 = vmatpush1.xpose.msra.mxu0 0.0
        %3855 = vmatprep.subr.mxu0 0.0
        %3856 = vmatpush1.xpose.msra.mxu0 0.0
        %3857 = vmatprep.subr.mxu0 0.0
        %3858 = vmatpush1.xpose.msra.mxu0 0.0
        %3859 = vmatprep.subr.mxu0 0.0
        %3860 = vmatpush1.xpose.msra.mxu0 0.0
        %3861 = vmatprep.subr.mxu0 0.0
        %3862 = vmatpush1.xpose.msra.mxu0 0.0
        %3863 = vmatprep.subr.mxu0 0.0
        %3864 = vmatpush1.xpose.msra.mxu0 0.0
        %3865 = vmatprep.subr.mxu0 0.0
        %3866 = vmatpush1.xpose.msra.mxu0 0.0
        %3867 = vmatprep.subr.mxu0 0.0
        %3868 = vmatpush1.xpose.msra.mxu0 %v3434
        %3869 = vmatprep.subr.mxu0 0.0
        %3870 = vmatpush1.xpose.msra.mxu0 %v3432
        %3871 = vmatprep.subr.mxu0 0.0
        %3872 = vmatpush2.xpose.msra.mxu0 0.0
        %3873 = vmatprep.subr.mxu0 0.0
        %3874 = vmatpush2.xpose.msra.mxu0 0.0
        %3875 = vmatprep.subr.mxu0 0.0
        %3876 = vmatpush2.xpose.msra.mxu0 0.0
        %3877 = vmatprep.subr.mxu0 0.0
        %3878 = vmatpush2.xpose.msra.mxu0 0.0
        %3879 = vmatprep.subr.mxu0 0.0
        %3880 = vmatpush2.xpose.msra.mxu0 0.0
        %3881 = vmatprep.subr.mxu0 0.0
        %3882 = vmatpush2.xpose.msra.mxu0 0.0
        %3883 = vmatprep.subr.mxu0 0.0
        %3884 = vmatpush2.xpose.msra.mxu0 0.0
        %3885 = vmatprep.subr.mxu0 0.0
        %3886 = vmatpush2.xpose.msra.mxu0 0.0
        %3887 = vmatprep.subr.mxu0 0.0
        %3888 = vmatpush2.xpose.msra.mxu0 0.0
        %3889 = vmatprep.subr.mxu0 0.0
        %3890 = vmatpush2.xpose.msra.mxu0 0.0
        %3891 = vmatprep.subr.mxu0 0.0
        %3892 = vmatpush2.xpose.msra.mxu0 0.0
        %3893 = vmatprep.subr.mxu0 0.0
        %3894 = vmatpush2.xpose.msra.mxu0 0.0
        %3895 = vmatprep.subr.mxu0 0.0
        %3896 = vmatpush2.xpose.msra.mxu0 0.0
        %3897 = vmatprep.subr.mxu0 0.0
        %3898 = vmatpush2.xpose.msra.mxu0 0.0
        %3899 = vmatprep.subr.mxu0 0.0
        %3900 = vmatpush2.xpose.msra.mxu0 0.0
        %3901 = vmatprep.subr.mxu0 0.0
        %3902 = vmatpush2.xpose.msra.mxu0 0.0
        %3903 = vmatprep.mubr.f32.mxu0 0.0
        %3904 = vmatmul.mubr.f32.gmra.mxu0 %v3835
        %v3905 = vpop.f32.mrf.mxu0
        %v3906 = vadd.f32 0.0, %v3905
        %v3907 = vpop.f32.mrf.mxu0
        %3908 = vmatprep.mubr.f32.mxu0 0.0
        %3909 = vmatmul.mubr.f32.gmra.mxu0 %v3837
        %v3910 = vpop.f32.mrf.mxu0
        %v3911 = vadd.f32 0.0, %v3910
        %v3912 = vpop.f32.mrf.mxu0
        %3913 = vdwg.mxu0
        %3914 = vmatprep.subr.mxu0 0.0
        %3915 = vmatpush1.xpose.msra.mxu0 0.0
        %3916 = vmatprep.subr.mxu0 0.0
        %3917 = vmatpush1.xpose.msra.mxu0 0.0
        %3918 = vmatprep.subr.mxu0 0.0
        %3919 = vmatpush1.xpose.msra.mxu0 0.0
        %3920 = vmatprep.subr.mxu0 0.0
        %3921 = vmatpush1.xpose.msra.mxu0 0.0
        %3922 = vmatprep.subr.mxu0 0.0
        %3923 = vmatpush1.xpose.msra.mxu0 0.0
        %3924 = vmatprep.subr.mxu0 0.0
        %3925 = vmatpush1.xpose.msra.mxu0 0.0
        %3926 = vmatprep.subr.mxu0 0.0
        %3927 = vmatpush1.xpose.msra.mxu0 0.0
        %3928 = vmatprep.subr.mxu0 0.0
        %3929 = vmatpush1.xpose.msra.mxu0 0.0
        %3930 = vmatprep.subr.mxu0 0.0
        %3931 = vmatpush1.xpose.msra.mxu0 0.0
        %3932 = vmatprep.subr.mxu0 0.0
        %3933 = vmatpush1.xpose.msra.mxu0 0.0
        %3934 = vmatprep.subr.mxu0 0.0
        %3935 = vmatpush1.xpose.msra.mxu0 0.0
        %3936 = vmatprep.subr.mxu0 0.0
        %3937 = vmatpush1.xpose.msra.mxu0 0.0
        %3938 = vmatprep.subr.mxu0 0.0
        %3939 = vmatpush1.xpose.msra.mxu0 0.0
        %3940 = vmatprep.subr.mxu0 0.0
        %3941 = vmatpush1.xpose.msra.mxu0 0.0
        %3942 = vmatprep.subr.mxu0 0.0
        %3943 = vmatpush1.xpose.msra.mxu0 %v3517
        %3944 = vmatprep.subr.mxu0 0.0
        %3945 = vmatpush1.xpose.msra.mxu0 %v3515
        %3946 = vmatprep.subr.mxu0 0.0
        %3947 = vmatpush2.xpose.msra.mxu0 0.0
        %3948 = vmatprep.subr.mxu0 0.0
        %3949 = vmatpush2.xpose.msra.mxu0 0.0
        %3950 = vmatprep.subr.mxu0 0.0
        %3951 = vmatpush2.xpose.msra.mxu0 0.0
        %3952 = vmatprep.subr.mxu0 0.0
        %3953 = vmatpush2.xpose.msra.mxu0 0.0
        %3954 = vmatprep.subr.mxu0 0.0
        %3955 = vmatpush2.xpose.msra.mxu0 0.0
        %3956 = vmatprep.subr.mxu0 0.0
        %3957 = vmatpush2.xpose.msra.mxu0 0.0
        %3958 = vmatprep.subr.mxu0 0.0
        %3959 = vmatpush2.xpose.msra.mxu0 0.0
        %3960 = vmatprep.subr.mxu0 0.0
        %3961 = vmatpush2.xpose.msra.mxu0 0.0
        %3962 = vmatprep.subr.mxu0 0.0
        %3963 = vmatpush2.xpose.msra.mxu0 0.0
        %3964 = vmatprep.subr.mxu0 0.0
        %3965 = vmatpush2.xpose.msra.mxu0 0.0
        %3966 = vmatprep.subr.mxu0 0.0
        %3967 = vmatpush2.xpose.msra.mxu0 0.0
        %3968 = vmatprep.subr.mxu0 0.0
        %3969 = vmatpush2.xpose.msra.mxu0 0.0
        %3970 = vmatprep.subr.mxu0 0.0
        %3971 = vmatpush2.xpose.msra.mxu0 0.0
        %3972 = vmatprep.subr.mxu0 0.0
        %3973 = vmatpush2.xpose.msra.mxu0 0.0
        %3974 = vmatprep.subr.mxu0 0.0
        %3975 = vmatpush2.xpose.msra.mxu0 0.0
        %3976 = vmatprep.subr.mxu0 0.0
        %3977 = vmatpush2.xpose.msra.mxu0 0.0
        %3978 = vmatprep.mubr.f32.mxu0 0.0
        %3979 = vmatmul.mubr.f32.gmra.mxu0 %v3835
        %v3980 = vpop.f32.mrf.mxu0
        %v3981 = vadd.f32 0.0, %v3980
        %v3982 = vpop.f32.mrf.mxu0
        %3983 = vmatprep.mubr.f32.mxu0 0.0
        %3984 = vmatmul.mubr.f32.gmra.mxu0 %v3837
        %v3985 = vpop.f32.mrf.mxu0
        %v3986 = vadd.f32 0.0, %v3985
        %v3987 = vpop.f32.mrf.mxu0
        %3988 = vdwg.mxu0
        %3989 = vrot.lane.b32.xlu0 %v3410, 36
        %v3990 = vpop.permute.xlu0 %3989
        %3991 = vrot.lane.b32.xlu0 %v3411, 36
        %v3992 = vpop.permute.xlu0 %3991
        %v3993 = vsel %vm405, %v3990, 0
        %v3995 = vsel %vm405, %v3992, 0
        %3997 = vmatprep.subr.mxu0 0.0
        %3998 = vmatpush1.xpose.msra.mxu0 0.0
        %3999 = vmatprep.subr.mxu0 0.0
        %4000 = vmatpush1.xpose.msra.mxu0 0.0
        %4001 = vmatprep.subr.mxu0 0.0
        %4002 = vmatpush1.xpose.msra.mxu0 0.0
        %4003 = vmatprep.subr.mxu0 0.0
        %4004 = vmatpush1.xpose.msra.mxu0 0.0
        %4005 = vmatprep.subr.mxu0 0.0
        %4006 = vmatpush1.xpose.msra.mxu0 0.0
        %4007 = vmatprep.subr.mxu0 0.0
        %4008 = vmatpush1.xpose.msra.mxu0 0.0
        %4009 = vmatprep.subr.mxu0 0.0
        %4010 = vmatpush1.xpose.msra.mxu0 0.0
        %4011 = vmatprep.subr.mxu0 0.0
        %4012 = vmatpush1.xpose.msra.mxu0 0.0
        %4013 = vmatprep.subr.mxu0 0.0
        %4014 = vmatpush1.xpose.msra.mxu0 0.0
        %4015 = vmatprep.subr.mxu0 0.0
        %4016 = vmatpush1.xpose.msra.mxu0 0.0
        %4017 = vmatprep.subr.mxu0 0.0
        %4018 = vmatpush1.xpose.msra.mxu0 0.0
        %4019 = vmatprep.subr.mxu0 0.0
        %4020 = vmatpush1.xpose.msra.mxu0 0.0
        %4021 = vmatprep.subr.mxu0 0.0
        %4022 = vmatpush1.xpose.msra.mxu0 0.0
        %4023 = vmatprep.subr.mxu0 0.0
        %4024 = vmatpush1.xpose.msra.mxu0 0.0
        %4025 = vmatprep.subr.mxu0 0.0
        %4026 = vmatpush1.xpose.msra.mxu0 %v3995
        %4027 = vmatprep.subr.mxu0 0.0
        %4028 = vmatpush1.xpose.msra.mxu0 %v3993
        %4029 = vmatprep.subr.mxu0 0.0
        %4030 = vmatpush2.xpose.msra.mxu0 0.0
        %4031 = vmatprep.subr.mxu0 0.0
        %4032 = vmatpush2.xpose.msra.mxu0 0.0
        %4033 = vmatprep.subr.mxu0 0.0
        %4034 = vmatpush2.xpose.msra.mxu0 0.0
        %4035 = vmatprep.subr.mxu0 0.0
        %4036 = vmatpush2.xpose.msra.mxu0 0.0
        %4037 = vmatprep.subr.mxu0 0.0
        %4038 = vmatpush2.xpose.msra.mxu0 0.0
        %4039 = vmatprep.subr.mxu0 0.0
        %4040 = vmatpush2.xpose.msra.mxu0 0.0
        %4041 = vmatprep.subr.mxu0 0.0
        %4042 = vmatpush2.xpose.msra.mxu0 0.0
        %4043 = vmatprep.subr.mxu0 0.0
        %4044 = vmatpush2.xpose.msra.mxu0 0.0
        %4045 = vmatprep.subr.mxu0 0.0
        %4046 = vmatpush2.xpose.msra.mxu0 0.0
        %4047 = vmatprep.subr.mxu0 0.0
        %4048 = vmatpush2.xpose.msra.mxu0 0.0
        %4049 = vmatprep.subr.mxu0 0.0
        %4050 = vmatpush2.xpose.msra.mxu0 0.0
        %4051 = vmatprep.subr.mxu0 0.0
        %4052 = vmatpush2.xpose.msra.mxu0 0.0
        %4053 = vmatprep.subr.mxu0 0.0
        %4054 = vmatpush2.xpose.msra.mxu0 0.0
        %4055 = vmatprep.subr.mxu0 0.0
        %4056 = vmatpush2.xpose.msra.mxu0 0.0
        %4057 = vmatprep.subr.mxu0 0.0
        %4058 = vmatpush2.xpose.msra.mxu0 0.0
        %4059 = vmatprep.subr.mxu0 0.0
        %4060 = vmatpush2.xpose.msra.mxu0 0.0
        %4061 = vmatprep.mubr.f32.mxu0 0.0
        %4062 = vmatmul.mubr.f32.gmra.mxu0 %v3835
        %v4063 = vpop.f32.mrf.mxu0
        %v4064 = vadd.f32 0.0, %v4063
        %v4065 = vpop.f32.mrf.mxu0
        %4066 = vmatprep.mubr.f32.mxu0 0.0
        %4067 = vmatmul.mubr.f32.gmra.mxu0 %v3837
        %v4068 = vpop.f32.mrf.mxu0
        %v4069 = vadd.f32 0.0, %v4068
        %v4070 = vpop.f32.mrf.mxu0
        %4071 = vdwg.mxu0
        %v4072 = vsel %vm385, %v3906, -inf
        %4073 = vmax.xlane.f32.xlu0 %v4072
        %v4074 = vpop.xlane.xlu0 %4073
        %v4075 = vsel %vm385, %v3911, -inf
        %4076 = vmax.xlane.f32.xlu0 %v4075
        %v4077 = vpop.xlane.xlu0 %4076
        %v4078 = vsel %vm385, %v3981, -inf
        %4079 = vmax.xlane.f32.xlu0 %v4078
        %v4080 = vpop.xlane.xlu0 %4079
        %v4081 = vsel %vm385, %v3986, -inf
        %4082 = vmax.xlane.f32.xlu0 %v4081
        %v4083 = vpop.xlane.xlu0 %4082
        %v4084 = vmax.f32 %v4074, %v4080
        %v4085 = vmax.f32 %v4077, %v4083
        %v4086 = vsel %vm385, %v4064, -inf
        %4087 = vmax.xlane.f32.xlu0 %v4086
        %v4088 = vpop.xlane.xlu0 %4087
        %v4089 = vsel %vm385, %v4069, -inf
        %4090 = vmax.xlane.f32.xlu0 %v4089
        %v4091 = vpop.xlane.xlu0 %4090
        %v4092 = vmax.f32 %v4084, %v4088
        %v4093 = vmax.f32 %v4085, %v4091
        %v4094 = vsub.f32 %v3906, %v4092
        %v4095 = vsub.f32 %v3911, %v4093
        %v4096 = vmul.f32 %v4094, 1.442695
        %v4097 = vpow.pop %v4096
        %v4098 = vmul.f32 %v4095, 1.442695
        %v4099 = vpow.pop %v4098
        %v4100 = vsub.f32 %v3981, %v4092
        %v4101 = vsub.f32 %v3986, %v4093
        %v4102 = vmul.f32 %v4100, 1.442695
        %v4103 = vpow.pop %v4102
        %v4104 = vmul.f32 %v4101, 1.442695
        %v4105 = vpow.pop %v4104
        %v4106 = vsub.f32 %v4064, %v4092
        %v4107 = vsub.f32 %v4069, %v4093
        %v4108 = vmul.f32 %v4106, 1.442695
        %v4109 = vpow.pop %v4108
        %v4110 = vmul.f32 %v4107, 1.442695
        %v4111 = vpow.pop %v4110
        %v4112 = vsel %vm385, %v4109, 0.0
        %4113 = vadd.xlane.f32.xlu0 %v4112
        %v4114 = vpop.xlane.xlu0 %4113
        %v4115 = vsel %vm385, %v4111, 0.0
        %4116 = vadd.xlane.f32.xlu0 %v4115
        %v4117 = vpop.xlane.xlu0 %4116
        %4118 = vrot.lane.b32.xlu0 %v3414, 116
        %v4119 = vpop.permute.xlu0 %4118
        %4120 = vrot.lane.b32.xlu0 %v3415, 116
        %v4121 = vpop.permute.xlu0 %4120
        %v4125 = vsel %vm385, %v4109, 0
        %v4128 = vsel %vm385, %v4111, 0
        %4130 = vmatprep.subr.mxu0 0.0
        %4131 = vmatpush1.msra.mxu0 0.0
        %4132 = vmatprep.subr.mxu0 0.0
        %4133 = vmatpush1.msra.mxu0 0.0
        %4134 = vmatprep.subr.mxu0 0.0
        %4135 = vmatpush1.msra.mxu0 0.0
        %4136 = vmatprep.subr.mxu0 0.0
        %4137 = vmatpush1.msra.mxu0 0.0
        %4138 = vmatprep.subr.mxu0 0.0
        %4139 = vmatpush1.msra.mxu0 0.0
        %4140 = vmatprep.subr.mxu0 0.0
        %4141 = vmatpush1.msra.mxu0 0.0
        %4142 = vmatprep.subr.mxu0 0.0
        %4143 = vmatpush1.msra.mxu0 0.0
        %4144 = vmatprep.subr.mxu0 0.0
        %4145 = vmatpush1.msra.mxu0 0.0
        %4146 = vmatprep.subr.mxu0 0.0
        %4147 = vmatpush1.msra.mxu0 0.0
        %4148 = vmatprep.subr.mxu0 0.0
        %4149 = vmatpush1.msra.mxu0 0.0
        %4150 = vmatprep.subr.mxu0 0.0
        %4151 = vmatpush1.msra.mxu0 0.0
        %4152 = vmatprep.subr.mxu0 0.0
        %4153 = vmatpush1.msra.mxu0 0.0
        %4154 = vmatprep.subr.mxu0 0.0
        %4155 = vmatpush1.msra.mxu0 0.0
        %4156 = vmatprep.subr.mxu0 0.0
        %4157 = vmatpush1.msra.mxu0 0.0
        %4158 = vmatprep.subr.mxu0 0.0
        %4159 = vmatpush1.msra.mxu0 %v4121
        %4160 = vmatprep.subr.mxu0 0.0
        %4161 = vmatpush1.msra.mxu0 %v4119
        %4162 = vmatprep.subr.mxu0 0.0
        %4163 = vmatpush2.msra.mxu0 0.0
        %4164 = vmatprep.subr.mxu0 0.0
        %4165 = vmatpush2.msra.mxu0 0.0
        %4166 = vmatprep.subr.mxu0 0.0
        %4167 = vmatpush2.msra.mxu0 0.0
        %4168 = vmatprep.subr.mxu0 0.0
        %4169 = vmatpush2.msra.mxu0 0.0
        %4170 = vmatprep.subr.mxu0 0.0
        %4171 = vmatpush2.msra.mxu0 0.0
        %4172 = vmatprep.subr.mxu0 0.0
        %4173 = vmatpush2.msra.mxu0 0.0
        %4174 = vmatprep.subr.mxu0 0.0
        %4175 = vmatpush2.msra.mxu0 0.0
        %4176 = vmatprep.subr.mxu0 0.0
        %4177 = vmatpush2.msra.mxu0 0.0
        %4178 = vmatprep.subr.mxu0 0.0
        %4179 = vmatpush2.msra.mxu0 0.0
        %4180 = vmatprep.subr.mxu0 0.0
        %4181 = vmatpush2.msra.mxu0 0.0
        %4182 = vmatprep.subr.mxu0 0.0
        %4183 = vmatpush2.msra.mxu0 0.0
        %4184 = vmatprep.subr.mxu0 0.0
        %4185 = vmatpush2.msra.mxu0 0.0
        %4186 = vmatprep.subr.mxu0 0.0
        %4187 = vmatpush2.msra.mxu0 0.0
        %4188 = vmatprep.subr.mxu0 0.0
        %4189 = vmatpush2.msra.mxu0 0.0
        %4190 = vmatprep.subr.mxu0 0.0
        %4191 = vmatpush2.msra.mxu0 0.0
        %4192 = vmatprep.subr.mxu0 0.0
        %4193 = vmatpush2.msra.mxu0 0.0
        %4194 = vmatprep.mubr.f32.mxu0 0.0
        %4195 = vmatmul.mubr.f32.gmra.mxu0 %v4125
        %v4196 = vpop.f32.mrf.mxu0
        %v4197 = vadd.f32 0.0, %v4196
        %v4198 = vpop.f32.mrf.mxu0
        %4199 = vmatprep.mubr.f32.mxu0 0.0
        %4200 = vmatmul.mubr.f32.gmra.mxu0 %v4128
        %v4201 = vpop.f32.mrf.mxu0
        %v4202 = vadd.f32 0.0, %v4201
        %v4203 = vpop.f32.mrf.mxu0
        %4204 = vdwg.mxu0
        %v4205 = vsel %vm385, %v4097, 0.0
        %4206 = vadd.xlane.f32.xlu0 %v4205
        %v4207 = vpop.xlane.xlu0 %4206
        %v4208 = vsel %vm385, %v4099, 0.0
        %4209 = vadd.xlane.f32.xlu0 %v4208
        %v4210 = vpop.xlane.xlu0 %4209
        %v4211 = vadd.f32 %v4207, %v4114
        %v4212 = vadd.f32 %v4210, %v4117
        %v4213 = vrcp.pop %v4211
        %v4214 = vrcp.pop %v4212
        %v4215 = vmul.f32 %v4211, %v4213
        %v4216 = vmul.f32 %v4212, %v4214
        %v4217 = vsub.f32 2.0, %v4215
        %v4218 = vsub.f32 2.0, %v4216
        %v4219 = vmul.f32 %v4213, %v4217
        %v4220 = vmul.f32 %v4214, %v4218
        %v4221 = vsel %vm385, %v4103, 0.0
        %4222 = vadd.xlane.f32.xlu0 %v4221
        %v4223 = vpop.xlane.xlu0 %4222
        %v4224 = vsel %vm385, %v4105, 0.0
        %4225 = vadd.xlane.f32.xlu0 %v4224
        %v4226 = vpop.xlane.xlu0 %4225
        %v4227 = vadd.f32 %v4223, %v4114
        %v4228 = vadd.f32 %v4226, %v4117
        %v4229 = vrcp.pop %v4227
        %v4230 = vrcp.pop %v4228
        %v4231 = vmul.f32 %v4227, %v4229
        %v4232 = vmul.f32 %v4228, %v4230
        %v4233 = vsub.f32 2.0, %v4231
        %v4234 = vsub.f32 2.0, %v4232
        %v4235 = vmul.f32 %v4229, %v4233
        %v4236 = vmul.f32 %v4230, %v4234
        %v4238 = vsel %vm385, %v4097, 0
        %v4241 = vsel %vm385, %v4099, 0
        %4243 = vmatprep.subr.mxu0 0.0
        %4244 = vmatpush1.msra.mxu0 0.0
        %4245 = vmatprep.subr.mxu0 0.0
        %4246 = vmatpush1.msra.mxu0 0.0
        %4247 = vmatprep.subr.mxu0 0.0
        %4248 = vmatpush1.msra.mxu0 0.0
        %4249 = vmatprep.subr.mxu0 0.0
        %4250 = vmatpush1.msra.mxu0 0.0
        %4251 = vmatprep.subr.mxu0 0.0
        %4252 = vmatpush1.msra.mxu0 0.0
        %4253 = vmatprep.subr.mxu0 0.0
        %4254 = vmatpush1.msra.mxu0 0.0
        %4255 = vmatprep.subr.mxu0 0.0
        %4256 = vmatpush1.msra.mxu0 0.0
        %4257 = vmatprep.subr.mxu0 0.0
        %4258 = vmatpush1.msra.mxu0 0.0
        %4259 = vmatprep.subr.mxu0 0.0
        %4260 = vmatpush1.msra.mxu0 0.0
        %4261 = vmatprep.subr.mxu0 0.0
        %4262 = vmatpush1.msra.mxu0 0.0
        %4263 = vmatprep.subr.mxu0 0.0
        %4264 = vmatpush1.msra.mxu0 0.0
        %4265 = vmatprep.subr.mxu0 0.0
        %4266 = vmatpush1.msra.mxu0 0.0
        %4267 = vmatprep.subr.mxu0 0.0
        %4268 = vmatpush1.msra.mxu0 0.0
        %4269 = vmatprep.subr.mxu0 0.0
        %4270 = vmatpush1.msra.mxu0 0.0
        %4271 = vmatprep.subr.mxu0 0.0
        %4272 = vmatpush1.msra.mxu0 %v3734
        %4273 = vmatprep.subr.mxu0 0.0
        %4274 = vmatpush1.msra.mxu0 %v3732
        %4275 = vmatprep.subr.mxu0 0.0
        %4276 = vmatpush2.msra.mxu0 0.0
        %4277 = vmatprep.subr.mxu0 0.0
        %4278 = vmatpush2.msra.mxu0 0.0
        %4279 = vmatprep.subr.mxu0 0.0
        %4280 = vmatpush2.msra.mxu0 0.0
        %4281 = vmatprep.subr.mxu0 0.0
        %4282 = vmatpush2.msra.mxu0 0.0
        %4283 = vmatprep.subr.mxu0 0.0
        %4284 = vmatpush2.msra.mxu0 0.0
        %4285 = vmatprep.subr.mxu0 0.0
        %4286 = vmatpush2.msra.mxu0 0.0
        %4287 = vmatprep.subr.mxu0 0.0
        %4288 = vmatpush2.msra.mxu0 0.0
        %4289 = vmatprep.subr.mxu0 0.0
        %4290 = vmatpush2.msra.mxu0 0.0
        %4291 = vmatprep.subr.mxu0 0.0
        %4292 = vmatpush2.msra.mxu0 0.0
        %4293 = vmatprep.subr.mxu0 0.0
        %4294 = vmatpush2.msra.mxu0 0.0
        %4295 = vmatprep.subr.mxu0 0.0
        %4296 = vmatpush2.msra.mxu0 0.0
        %4297 = vmatprep.subr.mxu0 0.0
        %4298 = vmatpush2.msra.mxu0 0.0
        %4299 = vmatprep.subr.mxu0 0.0
        %4300 = vmatpush2.msra.mxu0 0.0
        %4301 = vmatprep.subr.mxu0 0.0
        %4302 = vmatpush2.msra.mxu0 0.0
        %4303 = vmatprep.subr.mxu0 0.0
        %4304 = vmatpush2.msra.mxu0 0.0
        %4305 = vmatprep.subr.mxu0 0.0
        %4306 = vmatpush2.msra.mxu0 0.0
        %4307 = vmatprep.mubr.f32.mxu0 0.0
        %4308 = vmatmul.mubr.f32.gmra.mxu0 %v4238
        %v4309 = vpop.f32.mrf.mxu0
        %v4310 = vadd.f32 %v4197, %v4309
        %v4311 = vpop.f32.mrf.mxu0
        %4312 = vmatprep.mubr.f32.mxu0 0.0
        %4313 = vmatmul.mubr.f32.gmra.mxu0 %v4241
        %v4314 = vpop.f32.mrf.mxu0
        %v4315 = vadd.f32 %v4202, %v4314
        %v4316 = vpop.f32.mrf.mxu0
        %4317 = vdwg.mxu0
        %v4318 = vmul.f32 %v4310, %v4219
        %v4319 = vmul.f32 %v4315, %v4220
        %v4321 = vsel %vm385, %v4103, 0
        %v4324 = vsel %vm385, %v4105, 0
        %4326 = vmatprep.subr.mxu0 0.0
        %4327 = vmatpush1.msra.mxu0 0.0
        %4328 = vmatprep.subr.mxu0 0.0
        %4329 = vmatpush1.msra.mxu0 0.0
        %4330 = vmatprep.subr.mxu0 0.0
        %4331 = vmatpush1.msra.mxu0 0.0
        %4332 = vmatprep.subr.mxu0 0.0
        %4333 = vmatpush1.msra.mxu0 0.0
        %4334 = vmatprep.subr.mxu0 0.0
        %4335 = vmatpush1.msra.mxu0 0.0
        %4336 = vmatprep.subr.mxu0 0.0
        %4337 = vmatpush1.msra.mxu0 0.0
        %4338 = vmatprep.subr.mxu0 0.0
        %4339 = vmatpush1.msra.mxu0 0.0
        %4340 = vmatprep.subr.mxu0 0.0
        %4341 = vmatpush1.msra.mxu0 0.0
        %4342 = vmatprep.subr.mxu0 0.0
        %4343 = vmatpush1.msra.mxu0 0.0
        %4344 = vmatprep.subr.mxu0 0.0
        %4345 = vmatpush1.msra.mxu0 0.0
        %4346 = vmatprep.subr.mxu0 0.0
        %4347 = vmatpush1.msra.mxu0 0.0
        %4348 = vmatprep.subr.mxu0 0.0
        %4349 = vmatpush1.msra.mxu0 0.0
        %4350 = vmatprep.subr.mxu0 0.0
        %4351 = vmatpush1.msra.mxu0 0.0
        %4352 = vmatprep.subr.mxu0 0.0
        %4353 = vmatpush1.msra.mxu0 0.0
        %4354 = vmatprep.subr.mxu0 0.0
        %4355 = vmatpush1.msra.mxu0 %v3647
        %4356 = vmatprep.subr.mxu0 0.0
        %4357 = vmatpush1.msra.mxu0 %v3645
        %4358 = vmatprep.subr.mxu0 0.0
        %4359 = vmatpush2.msra.mxu0 0.0
        %4360 = vmatprep.subr.mxu0 0.0
        %4361 = vmatpush2.msra.mxu0 0.0
        %4362 = vmatprep.subr.mxu0 0.0
        %4363 = vmatpush2.msra.mxu0 0.0
        %4364 = vmatprep.subr.mxu0 0.0
        %4365 = vmatpush2.msra.mxu0 0.0
        %4366 = vmatprep.subr.mxu0 0.0
        %4367 = vmatpush2.msra.mxu0 0.0
        %4368 = vmatprep.subr.mxu0 0.0
        %4369 = vmatpush2.msra.mxu0 0.0
        %4370 = vmatprep.subr.mxu0 0.0
        %4371 = vmatpush2.msra.mxu0 0.0
        %4372 = vmatprep.subr.mxu0 0.0
        %4373 = vmatpush2.msra.mxu0 0.0
        %4374 = vmatprep.subr.mxu0 0.0
        %4375 = vmatpush2.msra.mxu0 0.0
        %4376 = vmatprep.subr.mxu0 0.0
        %4377 = vmatpush2.msra.mxu0 0.0
        %4378 = vmatprep.subr.mxu0 0.0
        %4379 = vmatpush2.msra.mxu0 0.0
        %4380 = vmatprep.subr.mxu0 0.0
        %4381 = vmatpush2.msra.mxu0 0.0
        %4382 = vmatprep.subr.mxu0 0.0
        %4383 = vmatpush2.msra.mxu0 0.0
        %4384 = vmatprep.subr.mxu0 0.0
        %4385 = vmatpush2.msra.mxu0 0.0
        %4386 = vmatprep.subr.mxu0 0.0
        %4387 = vmatpush2.msra.mxu0 0.0
        %4388 = vmatprep.subr.mxu0 0.0
        %4389 = vmatpush2.msra.mxu0 0.0
        %4390 = vmatprep.mubr.f32.mxu0 0.0
        %4391 = vmatmul.mubr.f32.gmra.mxu0 %v4321
        %v4392 = vpop.f32.mrf.mxu0
        %v4393 = vadd.f32 %v4197, %v4392
        %v4394 = vpop.f32.mrf.mxu0
        %4395 = vmatprep.mubr.f32.mxu0 0.0
        %4396 = vmatmul.mubr.f32.gmra.mxu0 %v4324
        %v4397 = vpop.f32.mrf.mxu0
        %v4398 = vadd.f32 %v4202, %v4397
        %v4399 = vpop.f32.mrf.mxu0
        %4400 = vdwg.mxu0
        %v4401 = vmul.f32 %v4393, %v4235
        %v4402 = vmul.f32 %v4398, %v4236
        %4405 = vrot.lane.b32.xlu0 %v4318, 28
        %v4406 = vpop.permute.xlu0 %4405
        %4407 = vrot.lane.b32.xlu0 %v4319, 28
        %v4408 = vpop.permute.xlu0 %4407
        %vm4411 = vcmask 261344
        %4412 = vst.msk [vmem:[#allocation3] sm:$0xff] %vm4411, %v4406
        %4413 = vst.msk [vmem:[#allocation3 + $0x8] sm:$0xff] %vm4411, %v4408
        %4416 = vrot.lane.b32.xlu0 %v4401, 44
        %v4417 = vpop.permute.xlu0 %4416
        %4418 = vrot.lane.b32.xlu0 %v4402, 44
        %v4419 = vpop.permute.xlu0 %4418
        %vm4422 = vcmask 392544
        %4423 = vst.msk [vmem:[#allocation3] sm:$0xff] %vm4422, %v4417
        %4424 = vst.msk [vmem:[#allocation3 + $0x8] sm:$0xff] %vm4422, %v4419
        %v4425 = vld [vmem:[#allocation3] sm:$0xff]
        %v4426 = vld [vmem:[#allocation3 + $0x8] sm:$0xff]
        %v4427 = vld [vmem:[#allocation9] sm:$0xff]
        %v4428 = vld [vmem:[#allocation9 + $0x8] sm:$0xff]
        %v4429 = vld [vmem:[#allocation9 + $0x10] sm:$0xff]
        %v4430 = vld [vmem:[#allocation9 + $0x18] sm:$0xff]
        %v4431 = vld [vmem:[#allocation9 + $0x20] sm:$0xff]
        %v4432 = vld [vmem:[#allocation9 + $0x28] sm:$0xff]
        %v4433 = vld [vmem:[%s4] sm:$0x1]
        %v4435 = vlaneseq
        %v4436 = vshrl.u32 %v4435, 7
        %v4437 = vsub.s32 0, %v4436
        %v4438 = vrot.slane %v4433, %v4437
        %v4441 = vsel %vm300, %v4425, 0
        %v4444 = vsel %vm300, %v4426, 0
        %4446 = vmatprep.subr.mxu0 0.0
        %4447 = vmatpush1.msra.mxu0 0.0
        %4448 = vmatprep.subr.mxu0 0.0
        %4449 = vmatpush1.msra.mxu0 0.0
        %4450 = vmatprep.subr.mxu0 0.0
        %4451 = vmatpush1.msra.mxu0 0.0
        %4452 = vmatprep.subr.mxu0 0.0
        %4453 = vmatpush1.msra.mxu0 0.0
        %4454 = vmatprep.subr.mxu0 0.0
        %4455 = vmatpush1.msra.mxu0 0.0
        %4456 = vmatprep.subr.mxu0 0.0
        %4457 = vmatpush1.msra.mxu0 0.0
        %4458 = vmatprep.subr.mxu0 0.0
        %4459 = vmatpush1.msra.mxu0 0.0
        %4460 = vmatprep.subr.mxu0 0.0
        %4461 = vmatpush1.msra.mxu0 0.0
        %4462 = vmatprep.subr.mxu0 0.0
        %4463 = vmatpush1.msra.mxu0 0.0
        %4464 = vmatprep.subr.mxu0 0.0
        %4465 = vmatpush1.msra.mxu0 0.0
        %4466 = vmatprep.subr.mxu0 0.0
        %4467 = vmatpush1.msra.mxu0 %v4432
        %4468 = vmatprep.subr.mxu0 0.0
        %4469 = vmatpush1.msra.mxu0 %v4431
        %4470 = vmatprep.subr.mxu0 0.0
        %4471 = vmatpush1.msra.mxu0 %v4430
        %4472 = vmatprep.subr.mxu0 0.0
        %4473 = vmatpush1.msra.mxu0 %v4429
        %4474 = vmatprep.subr.mxu0 0.0
        %4475 = vmatpush1.msra.mxu0 %v4428
        %4476 = vmatprep.subr.mxu0 0.0
        %4477 = vmatpush1.msra.mxu0 %v4427
        %4478 = vmatprep.subr.mxu0 0.0
        %4479 = vmatpush2.msra.mxu0 0.0
        %4480 = vmatprep.subr.mxu0 0.0
        %4481 = vmatpush2.msra.mxu0 0.0
        %4482 = vmatprep.subr.mxu0 0.0
        %4483 = vmatpush2.msra.mxu0 0.0
        %4484 = vmatprep.subr.mxu0 0.0
        %4485 = vmatpush2.msra.mxu0 0.0
        %4486 = vmatprep.subr.mxu0 0.0
        %4487 = vmatpush2.msra.mxu0 0.0
        %4488 = vmatprep.subr.mxu0 0.0
        %4489 = vmatpush2.msra.mxu0 0.0
        %4490 = vmatprep.subr.mxu0 0.0
        %4491 = vmatpush2.msra.mxu0 0.0
        %4492 = vmatprep.subr.mxu0 0.0
        %4493 = vmatpush2.msra.mxu0 0.0
        %4494 = vmatprep.subr.mxu0 0.0
        %4495 = vmatpush2.msra.mxu0 0.0
        %4496 = vmatprep.subr.mxu0 0.0
        %4497 = vmatpush2.msra.mxu0 0.0
        %4498 = vmatprep.subr.mxu0 0.0
        %4499 = vmatpush2.msra.mxu0 0.0
        %4500 = vmatprep.subr.mxu0 0.0
        %4501 = vmatpush2.msra.mxu0 0.0
        %4502 = vmatprep.subr.mxu0 0.0
        %4503 = vmatpush2.msra.mxu0 0.0
        %4504 = vmatprep.subr.mxu0 0.0
        %4505 = vmatpush2.msra.mxu0 0.0
        %4506 = vmatprep.subr.mxu0 0.0
        %4507 = vmatpush2.msra.mxu0 0.0
        %4508 = vmatprep.subr.mxu0 0.0
        %4509 = vmatpush2.msra.mxu0 0.0
        %4510 = vmatprep.mubr.f32.mxu0 0.0
        %4511 = vmatmul.mubr.f32.gmra.mxu0 %v4441
        %v4512 = vpop.f32.mrf.mxu0
        %v4513 = vadd.f32 %v4438, %v4512
        %v4514 = vpop.f32.mrf.mxu0
        %4515 = vmatprep.mubr.f32.mxu0 0.0
        %4516 = vmatmul.mubr.f32.gmra.mxu0 %v4444
        %v4517 = vpop.f32.mrf.mxu0
        %v4518 = vadd.f32 %v4438, %v4517
        %v4519 = vpop.f32.mrf.mxu0
        %4520 = vdwg.mxu0
        %4521 = vst.msk [vmem:[%s271] sm:$0xff] %vm300, %v4513
        %4522 = vst.msk [vmem:[%s271 + $0x8] sm:$0xff] %vm300, %v4518
        %s4523 = sand.u32 %s141, 1
        %s4524 = scalar_lea.sflag [#allocation6], %s4523
        %s4525 = sand.u32 %s141, 1
        %s4526 = smul.addr %s4525, 16
        %s4527 = scalar_lea.vmem [#allocation10], %s4526
        // Predicated region
        $region53: #{tpu_custom_call.1} parent=39 // pred_check
          %p4528 = pneg %p151
        $region54: #{tpu_custom_call.1} parent=39 // pred_check_branch
          %4530 = sbr.rel (%p4528) target = $region56
        $region55: #{tpu_custom_call.1} parent=39 // pred_region
          %s4531 = smul.u32 2, %s23
          %s4533 = ssub.s32 256, 256
          %4534 = vsyncadd %s4524, %s4533
          %s4535 = smul.addr %s4531, 128
          %s4536 = scalar_lea.hbm %s5, %s4535
          %s4537 = sshll.u32 %s4527, 4
          %s4538 = int_to_ptr.vmem [resolvable:$true] %s4537
          %4543 = dma.vmem_to_hbm [thread:$0]  %s4538, 256, %s4536, %s4524, 128, 128, 8
        $region56: #{tpu_custom_call.1} parent=39 // pred_fallthru
          _
      $region40: #{tpu_custom_call.1} parent=5 // pred_fallthru
        _
      %p4544 = scmp.le.s32.totalorder 2, %s18
      // Predicated region
      $region57: #{tpu_custom_call.1} parent=5 // pred_check
        %p4545 = pneg %p4544
      $region58: #{tpu_custom_call.1} parent=5 // pred_check_branch
        %4547 = sbr.rel (%p4545) target = $region60
      $region59: #{tpu_custom_call.1} parent=5 // pred_region
        %s4548 = ssub.s32 %s18, 2
        // Predicated region
        $region61: #{tpu_custom_call.1} parent=59 // pred_check
          %p4549 = pneg %p157
        $region62: #{tpu_custom_call.1} parent=59 // pred_check_branch
          %4551 = sbr.rel (%p4549) target = $region64
        $region63: #{tpu_custom_call.1} parent=59 // pred_region
          %s4552 = sand.u32 %s142, 1
          %s4553 = scalar_lea.sflag [#allocation6], %s4552
          %s4554 = sand.u32 %s142, 1
          %s4555 = smul.addr %s4554, 16
          %s4556 = scalar_lea.vmem [#allocation10], %s4555
          %4557 = dma.done %s4553, 256
        $region64: #{tpu_custom_call.1} parent=59 // pred_fallthru
          _
      $region60: #{tpu_custom_call.1} parent=5 // pred_fallthru
        _
    $region6: #{tpu_custom_call.1} parent=1 // loop_footer
      %s22 = sadd.s32 1, %s18
    $region7: #{tpu_custom_call.1} parent=1 // loop_footer_branch
      %17 = sbr.rel target = $region3
    $region8: #{tpu_custom_call.1} parent=1 // loop_exit
      _
    %4558 = vsyncpa [#allocation5], 1
    %s4559 = scalar_lea.sflag [#allocation5], 1
    %4560 = vsyncpa %s4559, 1
    %4561 = vsyncpa [#allocation8], 1
    %4562 = vsyncpa [#allocation6], 1
    %s4563 = scalar_lea.sflag [#allocation6], 1
    %4564 = vsyncpa %s4563, 1

</llo_original>
